<compile_context>
chip_gen: v6e
topology: v6e:2x2x1
jax: 0.10.0
libtpu: 0.0.40
codegen_flags: <defaults>
</compile_context>

<pallas_src>
import math
import jax
import jax.numpy as jnp
from jax import lax
from jax.experimental import pallas as pl
from jax.experimental.pallas import tpu as pltpu  # noqa: F401  (kept for completeness)

# ---- synthetic model hyper-parameters (small) ----
B = 2            # batch
G = 16           # num_gene
A = 8            # max atoms per drug
GENE_IN = 8      # gene_input_dim
E = 32           # gene_emb_dim == drug_emb_dim
CELL_IN = 64     # cell_id_input_dim
CELL_EMB = 50    # cell_id_emb_dim (LinearEncoder output)
P_IN = 4         # pert_idose_input_dim
P_EMB = 4        # pert_idose_emb_dim
HID = 32         # hid_dim
N_HEADS = 4
DH = E // N_HEADS
LINEAR_DIM = E + E + CELL_EMB + P_EMB   # 118
NEG_INF = -1e9


# ------------------------- fused Pallas kernel -------------------------

def multidcp_fused_kernel(
        drug_atom_ref, input_gene_ref, mask_ref, cell_gex_ref, dose_in_ref, headmask_ref,
        enc_w1, enc_b1, enc_w2, enc_b2, enc_w3, enc_b3,
        qw, qb, wkv, bkv, wo, bo,
        dose_w, dose_b,
        w1_dga, w1_drug, w1_cell, w1_dose, b1,
        wfT, bf,
        out_ref):
    f32 = jnp.float32

    # --- LinearEncoder (all batch rows at once): cell_gex -> (B, 50)
    h = jnp.maximum(jnp.dot(cell_gex_ref[...], enc_w1[...], preferred_element_type=f32) + enc_b1[...], 0.0)
    h = jnp.maximum(jnp.dot(h, enc_w2[...], preferred_element_type=f32) + enc_b2[...], 0.0)
    cell_hidden = jnp.maximum(jnp.dot(h, enc_w3[...], preferred_element_type=f32) + enc_b3[...], 0.0)

    # --- hoisted batch-invariant query projection
    #     (gene linear, Wq and 1/sqrt(dh) all pre-folded into qw/qb)
    q = jnp.dot(input_gene_ref[...], qw[...], preferred_element_type=f32) + qb[...]          # (G, E)

    # --- packed K|V projection for all B*A atom rows in a single MXU push
    atoms3 = drug_atom_ref[...]                                                              # (B, A, E)
    kv = jnp.dot(atoms3.reshape(B * A, E), wkv[...], preferred_element_type=f32) + bkv[...]  # (B*A, 2E)
    k2 = kv[:, :E]                                                                           # (B*A, E)
    v2 = kv[:, E:]                                                                           # (B*A, E)

    # --- head-batched masked cross-attention (z = batch*head); head separation is
    #     done with a precomputed head-selector mask instead of per-head lane slices.
    hm = headmask_ref[...]                                                                   # (1, H, 1, E)
    k_z = (k2.reshape(B, 1, A, E) * hm).reshape(B * N_HEADS, A, E)
    v_z = (v2.reshape(B, 1, A, E) * hm).reshape(B * N_HEADS, A, E)
    q_z = jnp.broadcast_to(q[None], (B * N_HEADS, G, E))

    s = jnp.einsum('zge,zae->zga', q_z, k_z, preferred_element_type=f32)                     # (B*H, G, A)
    s = jnp.where(mask_ref[...] > 0.5, s, NEG_INF)                                           # mask: (B*H, 1, A)
    s = s - jnp.max(s, axis=-1, keepdims=True)
    p = jnp.exp(s)
    p = p / jnp.sum(p, axis=-1, keepdims=True)                                               # (B*H, G, A)

    ctx_z = jnp.einsum('zga,zae->zge', p, v_z, preferred_element_type=f32)                   # (B*H, G, E)
    ctx = jnp.sum(ctx_z.reshape(B, N_HEADS, G, E), axis=1)                                   # (B, G, E)
    dga = (jnp.dot(ctx.reshape(B * G, E), wo[...], preferred_element_type=f32) + bo[...])    # (B*G, E)

    # --- fused tail: relu(cat(dga, drug, cell, dose)) @ W1 + b1 -> relu -> @ w_final + b_final
    #     (concat avoided by splitting W1 row-wise; relu is elementwise so split is exact)
    drug_embed = jnp.sum(atoms3, axis=1)                                                     # (B, E)
    dose_embed = jnp.dot(dose_in_ref[...], dose_w[...], preferred_element_type=f32) + dose_b[...]  # (B, P_EMB)
    rows = (jnp.dot(jnp.maximum(drug_embed, 0.0), w1_drug[...], preferred_element_type=f32)
            + jnp.dot(jnp.maximum(cell_hidden, 0.0), w1_cell[...], preferred_element_type=f32)
            + jnp.dot(jnp.maximum(dose_embed, 0.0), w1_dose[...], preferred_element_type=f32)
            + b1[...])                                                                       # (B, HID)
    rows_full = jnp.concatenate(
        [jnp.broadcast_to(rows[b:b + 1, :], (G, HID)) for b in range(B)], axis=0)            # (B*G, HID)

    hid = jnp.maximum(
        jnp.dot(jnp.maximum(dga, 0.0), w1_dga[...], preferred_element_type=f32) + rows_full,
        0.0)                                                                                 # (B*G, HID)

    # lane-dense (1, B*G) output slab:  out[0, b*G+g] = hid[b*G+g, :] @ w_final + b_final
    out_ref[...] = lax.dot_general(wfT[...], hid, (((1,), (1,)), ((), ())),
                                   preferred_element_type=f32) + bf[...]


# ------------------------- parameter preparation (one-time) -------------------------

def prepare_params(p):
    scale = 1.0 / math.sqrt(DH)
    # fold gene linear + Wq + attention scale into one (GENE_IN, E) projection
    qw = (p['gene_w'] @ p['wq']) * scale
    qb = (p['gene_b'] @ p['wq'] + p['bq']) * scale
    # pack K|V projection weights
    wkv = jnp.concatenate([p['wk'], p['wv']], axis=1)
    bkv = jnp.concatenate([p['bk'], p['bv']], axis=1)
    # split W1 rows to match concat order: [dga | drug | cell | dose]
    w1 = p['w1']
    headmask = (jnp.arange(E)[None, :] // DH == jnp.arange(N_HEADS)[:, None]).astype(jnp.float32)
    return {
        'enc_w1': p['enc_w1'], 'enc_b1': p['enc_b1'],
        'enc_w2': p['enc_w2'], 'enc_b2': p['enc_b2'],
        'enc_w3': p['enc_w3'], 'enc_b3': p['enc_b3'],
        'qw': qw, 'qb': qb, 'wkv': wkv, 'bkv': bkv,
        'wo': p['wo'], 'bo': p['bo'],
        'dose_w': p['dose_w'], 'dose_b': p['dose_b'],
        'w1_dga': w1[:E], 'w1_drug': w1[E:2 * E],
        'w1_cell': w1[2 * E:2 * E + CELL_EMB], 'w1_dose': w1[2 * E + CELL_EMB:],
        'b1': p['b1'],
        'wfT': p['w_final'].T, 'bf': p['b_final'],
        'headmask': headmask.reshape(1, N_HEADS, 1, E),
    }


# ------------------------- wrapper -------------------------

def multidcp_original_forward(kp, drug_atom, input_gene, mask, cell_gex, pert_idose):
    # expand mask to the (batch*head, 1, atoms) layout used by the kernel (free, outside kernel)
    mask_z = jnp.broadcast_to(mask.reshape(B, 1, 1, A),
                              (B, N_HEADS, 1, A)).reshape(B * N_HEADS, 1, A)
    out_slab = pl.pallas_call(
        multidcp_fused_kernel,
        out_shape=jax.ShapeDtypeStruct((1, B * G), jnp.float32),
    )(drug_atom, input_gene, mask_z, cell_gex, pert_idose,
      kp['headmask'],
      kp['enc_w1'], kp['enc_b1'], kp['enc_w2'], kp['enc_b2'], kp['enc_w3'], kp['enc_b3'],
      kp['qw'], kp['qb'], kp['wkv'], kp['bkv'], kp['wo'], kp['bo'],
      kp['dose_w'], kp['dose_b'],
      kp['w1_dga'], kp['w1_drug'], kp['w1_cell'], kp['w1_dose'], kp['b1'],
      kp['wfT'], kp['bf'])
    return out_slab.reshape(B, G)


# ------------------------- pure-JAX reference (for correctness) -------------------------

def reference_forward(p, drug_atom, input_gene, mask, cell_gex, pert_idose):
    h = jax.nn.relu(cell_gex @ p['enc_w1'] + p['enc_b1'][0])
    h = jax.nn.relu(h @ p['enc_w2'] + p['enc_b2'][0])
    cell_hidden = jax.nn.relu(h @ p['enc_w3'] + p['enc_b3'][0])

    gene_embed = input_gene @ p['gene_w'] + p['gene_b'][0]            # (G, E)
    q = gene_embed @ p['wq'] + p['bq'][0]                             # (G, E)
    k = drug_atom @ p['wk'] + p['bk'][0]                              # (B, A, E)
    v = drug_atom @ p['wv'] + p['bv'][0]
    qh = q.reshape(G, N_HEADS, DH).transpose(1, 0, 2)                 # (H, G, DH)
    kh = k.reshape(B, A, N_HEADS, DH).transpose(0, 2, 1, 3)           # (B, H, A, DH)
    vh = v.reshape(B, A, N_HEADS, DH).transpose(0, 2, 1, 3)
    s = jnp.einsum('hgd,bhad->bhga', qh, kh) / math.sqrt(DH)
    s = jnp.where(mask[:, None, None, :] > 0.5, s, NEG_INF)
    attn = jax.nn.softmax(s, axis=-1)
    ctx = jnp.einsum('bhga,bhad->bhgd', attn, vh).transpose(0, 2, 1, 3).reshape(B, G, E)
    dga = ctx @ p['wo'] + p['bo'][0]

    drug_embed = jnp.sum(drug_atom, axis=1)                           # (B, E)
    dose_embed = pert_idose @ p['dose_w'] + p['dose_b'][0]            # (B, P_EMB)
    cat = jnp.concatenate([dga,
                           jnp.broadcast_to(drug_embed[:, None, :], (B, G, E)),
                           jnp.broadcast_to(cell_hidden[:, None, :], (B, G, CELL_EMB)),
                           jnp.broadcast_to(dose_embed[:, None, :], (B, G, P_EMB))], axis=-1)
    cat = jax.nn.relu(cat)
    hid = jax.nn.relu(cat @ p['w1'] + p['b1'][0])
    out = hid @ p['w_final'] + p['b_final'][0]
    return out[..., 0]


# ------------------------- main -------------------------

if __name__ == "__main__":
    key = jax.random.PRNGKey(0)
    keys = jax.random.split(key, 32)

    def w(k, shape, scale=0.1):
        return (scale * jax.random.normal(k, shape)).astype(jnp.float32)

    params = {
        # LinearEncoder
        'enc_w1': w(keys[0], (CELL_IN, 200)), 'enc_b1': w(keys[1], (1, 200)),
        'enc_w2': w(keys[2], (200, 100)),     'enc_b2': w(keys[3], (1, 100)),
        'enc_w3': w(keys[4], (100, CELL_EMB)),'enc_b3': w(keys[5], (1, CELL_EMB)),
        # gene_embed linear
        'gene_w': w(keys[6], (GENE_IN, E)),   'gene_b': w(keys[7], (1, E)),
        # drug-gene cross attention (stand-in for DrugGeneAttention)
        'wq': w(keys[8], (E, E)),  'bq': w(keys[9], (1, E)),
        'wk': w(keys[10], (E, E)), 'bk': w(keys[11], (1, E)),
        'wv': w(keys[12], (E, E)), 'bv': w(keys[13], (1, E)),
        'wo': w(keys[14], (E, E)), 'bo': w(keys[15], (1, E)),
        # pert_idose embed
        'dose_w': w(keys[16], (P_IN, P_EMB)), 'dose_b': w(keys[17], (1, P_EMB)),
        # linear_1 and linear_final
        'w1': w(keys[18], (LINEAR_DIM, HID)), 'b1': w(keys[19], (1, HID)),
        'w_final': w(keys[20], (HID, 1)),     'b_final': w(keys[21], (1, 1)),
    }

    # inputs
    drug_atom = jax.random.normal(keys[22], (B, A, E), jnp.float32)     # NeuralFingerprint output (see TODO)
    input_gene = jax.random.normal(keys[23], (G, GENE_IN), jnp.float32)
    mask = jnp.concatenate([jnp.ones((1, A), jnp.float32),
                            jnp.concatenate([jnp.ones((1, A - 2)), jnp.zeros((1, 2))], axis=1)],
                           axis=0).astype(jnp.float32)                  # (B, A)
    cell_gex = jax.random.normal(keys[24], (B, CELL_IN), jnp.float32)
    pert_idose = jax.random.normal(keys[25], (B, P_IN), jnp.float32)

    kernel_params = jax.tree_util.tree_map(jax.block_until_ready, prepare_params(params))

    out = jax.block_until_ready(
        multidcp_original_forward(kernel_params, drug_atom, input_gene, mask, cell_gex, pert_idose))
    ref = jax.block_until_ready(
        reference_forward(params, drug_atom, input_gene, mask, cell_gex, pert_idose))

    assert out.shape == (B, G), out.shape
    assert jnp.allclose(out, ref, rtol=1e-2, atol=1e-2), (out, ref)
    print("KERNEL_OK")
</pallas_src>

<mosaic_0001>
module attributes {stable_mosaic.version = 11 : i64} {
  func.func @multidcp_fused_kernel(%arg0: memref<2x8x32xf32, #tpu.memory_space<vmem>>, %arg1: memref<16x8xf32, #tpu.memory_space<vmem>>, %arg2: memref<8x1x8xf32, #tpu.memory_space<vmem>>, %arg3: memref<2x64xf32, #tpu.memory_space<vmem>>, %arg4: memref<2x4xf32, #tpu.memory_space<vmem>>, %arg5: memref<1x4x1x32xf32, #tpu.memory_space<vmem>>, %arg6: memref<64x200xf32, #tpu.memory_space<vmem>>, %arg7: memref<1x200xf32, #tpu.memory_space<vmem>>, %arg8: memref<200x100xf32, #tpu.memory_space<vmem>>, %arg9: memref<1x100xf32, #tpu.memory_space<vmem>>, %arg10: memref<100x50xf32, #tpu.memory_space<vmem>>, %arg11: memref<1x50xf32, #tpu.memory_space<vmem>>, %arg12: memref<8x32xf32, #tpu.memory_space<vmem>>, %arg13: memref<1x32xf32, #tpu.memory_space<vmem>>, %arg14: memref<32x64xf32, #tpu.memory_space<vmem>>, %arg15: memref<1x64xf32, #tpu.memory_space<vmem>>, %arg16: memref<32x32xf32, #tpu.memory_space<vmem>>, %arg17: memref<1x32xf32, #tpu.memory_space<vmem>>, %arg18: memref<4x4xf32, #tpu.memory_space<vmem>>, %arg19: memref<1x4xf32, #tpu.memory_space<vmem>>, %arg20: memref<32x32xf32, #tpu.memory_space<vmem>>, %arg21: memref<32x32xf32, #tpu.memory_space<vmem>>, %arg22: memref<50x32xf32, #tpu.memory_space<vmem>>, %arg23: memref<4x32xf32, #tpu.memory_space<vmem>>, %arg24: memref<1x32xf32, #tpu.memory_space<vmem>>, %arg25: memref<1x32xf32, #tpu.memory_space<vmem>>, %arg26: memref<1x1xf32, #tpu.memory_space<vmem>>, %arg27: memref<1x32xf32, #tpu.memory_space<vmem>>) attributes {dimension_semantics = [], scalar_prefetch = 0 : i64, scratch_operands = 0 : i64, tpu.core_type = #tpu.core_type<tc>} {
    %c0 = arith.constant 0 : index
    %c0_0 = arith.constant 0 : index
    %0 = vector.load %arg3[%c0, %c0_0] : memref<2x64xf32, #tpu.memory_space<vmem>>, vector<2x64xf32>
    %c0_1 = arith.constant 0 : index
    %c0_2 = arith.constant 0 : index
    %1 = vector.load %arg6[%c0_1, %c0_2] : memref<64x200xf32, #tpu.memory_space<vmem>>, vector<64x200xf32>
    %cst = arith.constant dense<0.000000e+00> : vector<2x200xf32>
    %2 = tpu.matmul %0, %1, %cst {dimension_numbers = #tpu.dot_dimension_numbers<[1], [0], [0], [1], [0, 0, 1, 1], [], []>} : vector<2x64xf32>, vector<64x200xf32>, vector<2x200xf32> -> vector<2x200xf32>
    %c0_3 = arith.constant 0 : index
    %c0_4 = arith.constant 0 : index
    %3 = vector.load %arg7[%c0_3, %c0_4] : memref<1x200xf32, #tpu.memory_space<vmem>>, vector<1x200xf32>
    %4 = vector.broadcast %3 : vector<1x200xf32> to vector<2x200xf32>
    %5 = arith.addf %2, %4 : vector<2x200xf32>
    %cst_5 = arith.constant 0.000000e+00 : f32
    %6 = vector.broadcast %cst_5 : f32 to vector<2x200xf32>
    %7 = arith.maximumf %5, %6 : vector<2x200xf32>
    %c0_6 = arith.constant 0 : index
    %c0_7 = arith.constant 0 : index
    %8 = vector.load %arg8[%c0_6, %c0_7] : memref<200x100xf32, #tpu.memory_space<vmem>>, vector<200x100xf32>
    %cst_8 = arith.constant dense<0.000000e+00> : vector<2x100xf32>
    %9 = tpu.matmul %7, %8, %cst_8 {dimension_numbers = #tpu.dot_dimension_numbers<[1], [0], [0], [1], [0, 0, 1, 1], [], []>} : vector<2x200xf32>, vector<200x100xf32>, vector<2x100xf32> -> vector<2x100xf32>
    %c0_9 = arith.constant 0 : index
    %c0_10 = arith.constant 0 : index
    %10 = vector.load %arg9[%c0_9, %c0_10] : memref<1x100xf32, #tpu.memory_space<vmem>>, vector<1x100xf32>
    %11 = vector.broadcast %10 : vector<1x100xf32> to vector<2x100xf32>
    %12 = arith.addf %9, %11 : vector<2x100xf32>
    %cst_11 = arith.constant 0.000000e+00 : f32
    %13 = vector.broadcast %cst_11 : f32 to vector<2x100xf32>
    %14 = arith.maximumf %12, %13 : vector<2x100xf32>
    %c0_12 = arith.constant 0 : index
    %c0_13 = arith.constant 0 : index
    %15 = vector.load %arg10[%c0_12, %c0_13] : memref<100x50xf32, #tpu.memory_space<vmem>>, vector<100x50xf32>
    %cst_14 = arith.constant dense<0.000000e+00> : vector<2x50xf32>
    %16 = tpu.matmul %14, %15, %cst_14 {dimension_numbers = #tpu.dot_dimension_numbers<[1], [0], [0], [1], [0, 0, 1, 1], [], []>} : vector<2x100xf32>, vector<100x50xf32>, vector<2x50xf32> -> vector<2x50xf32>
    %c0_15 = arith.constant 0 : index
    %c0_16 = arith.constant 0 : index
    %17 = vector.load %arg11[%c0_15, %c0_16] : memref<1x50xf32, #tpu.memory_space<vmem>>, vector<1x50xf32>
    %18 = vector.broadcast %17 : vector<1x50xf32> to vector<2x50xf32>
    %19 = arith.addf %16, %18 : vector<2x50xf32>
    %cst_17 = arith.constant 0.000000e+00 : f32
    %20 = vector.broadcast %cst_17 : f32 to vector<2x50xf32>
    %21 = arith.maximumf %19, %20 : vector<2x50xf32>
    %c0_18 = arith.constant 0 : index
    %c0_19 = arith.constant 0 : index
    %22 = vector.load %arg1[%c0_18, %c0_19] : memref<16x8xf32, #tpu.memory_space<vmem>>, vector<16x8xf32>
    %c0_20 = arith.constant 0 : index
    %c0_21 = arith.constant 0 : index
    %23 = vector.load %arg12[%c0_20, %c0_21] : memref<8x32xf32, #tpu.memory_space<vmem>>, vector<8x32xf32>
    %cst_22 = arith.constant dense<0.000000e+00> : vector<16x32xf32>
    %24 = tpu.matmul %22, %23, %cst_22 {dimension_numbers = #tpu.dot_dimension_numbers<[1], [0], [0], [1], [0, 0, 1, 1], [], []>} : vector<16x8xf32>, vector<8x32xf32>, vector<16x32xf32> -> vector<16x32xf32>
    %c0_23 = arith.constant 0 : index
    %c0_24 = arith.constant 0 : index
    %25 = vector.load %arg13[%c0_23, %c0_24] : memref<1x32xf32, #tpu.memory_space<vmem>>, vector<1x32xf32>
    %26 = vector.broadcast %25 : vector<1x32xf32> to vector<16x32xf32>
    %27 = arith.addf %24, %26 : vector<16x32xf32>
    %c0_25 = arith.constant 0 : index
    %c0_26 = arith.constant 0 : index
    %c0_27 = arith.constant 0 : index
    %28 = vector.load %arg0[%c0_25, %c0_26, %c0_27] : memref<2x8x32xf32, #tpu.memory_space<vmem>>, vector<2x8x32xf32>
    %29 = vector.shape_cast %28 : vector<2x8x32xf32> to vector<16x32xf32>
    %c0_28 = arith.constant 0 : index
    %c0_29 = arith.constant 0 : index
    %30 = vector.load %arg14[%c0_28, %c0_29] : memref<32x64xf32, #tpu.memory_space<vmem>>, vector<32x64xf32>
    %cst_30 = arith.constant dense<0.000000e+00> : vector<16x64xf32>
    %31 = tpu.matmul %29, %30, %cst_30 {dimension_numbers = #tpu.dot_dimension_numbers<[1], [0], [0], [1], [0, 0, 1, 1], [], []>} : vector<16x32xf32>, vector<32x64xf32>, vector<16x64xf32> -> vector<16x64xf32>
    %c0_31 = arith.constant 0 : index
    %c0_32 = arith.constant 0 : index
    %32 = vector.load %arg15[%c0_31, %c0_32] : memref<1x64xf32, #tpu.memory_space<vmem>>, vector<1x64xf32>
    %33 = vector.broadcast %32 : vector<1x64xf32> to vector<16x64xf32>
    %34 = arith.addf %31, %33 : vector<16x64xf32>
    %35 = vector.extract_strided_slice %34 {offsets = [0, 0], sizes = [16, 32], strides = [1, 1]} : vector<16x64xf32> to vector<16x32xf32>
    %36 = vector.extract_strided_slice %34 {offsets = [0, 32], sizes = [16, 32], strides = [1, 1]} : vector<16x64xf32> to vector<16x32xf32>
    %c0_33 = arith.constant 0 : index
    %c0_34 = arith.constant 0 : index
    %c0_35 = arith.constant 0 : index
    %c0_36 = arith.constant 0 : index
    %37 = vector.load %arg5[%c0_33, %c0_34, %c0_35, %c0_36] : memref<1x4x1x32xf32, #tpu.memory_space<vmem>>, vector<1x4x1x32xf32>
    %38 = vector.shape_cast %35 : vector<16x32xf32> to vector<2x1x8x32xf32>
    %39 = vector.broadcast %38 : vector<2x1x8x32xf32> to vector<2x4x8x32xf32>
    %40 = vector.broadcast %37 : vector<1x4x1x32xf32> to vector<2x4x8x32xf32>
    %41 = arith.mulf %39, %40 : vector<2x4x8x32xf32>
    %42 = vector.shape_cast %41 : vector<2x4x8x32xf32> to vector<8x8x32xf32>
    %43 = vector.shape_cast %36 : vector<16x32xf32> to vector<2x1x8x32xf32>
    %44 = vector.broadcast %43 : vector<2x1x8x32xf32> to vector<2x4x8x32xf32>
    %45 = vector.broadcast %37 : vector<1x4x1x32xf32> to vector<2x4x8x32xf32>
    %46 = arith.mulf %44, %45 : vector<2x4x8x32xf32>
    %47 = vector.shape_cast %46 : vector<2x4x8x32xf32> to vector<8x8x32xf32>
    %48 = vector.shape_cast %27 : vector<16x32xf32> to vector<1x16x32xf32>
    %49 = vector.shape_cast %48 : vector<1x16x32xf32> to vector<1x16x32xf32>
    %50 = vector.broadcast %49 : vector<1x16x32xf32> to vector<8x16x32xf32>
    "tpu.trace_start"() <{level = 10 : i32, message = "zge,zae->zga"}> : () -> ()
    %cst_37 = arith.constant dense<0.000000e+00> : vector<8x16x8xf32>
    %51 = tpu.matmul %50, %42, %cst_37 {dimension_numbers = #tpu.dot_dimension_numbers<[2], [2], [1], [1], [0, 0, 0, 1, 1, 1], [0], [0]>} : vector<8x16x32xf32>, vector<8x8x32xf32>, vector<8x16x8xf32> -> vector<8x16x8xf32>
    "tpu.trace_stop"() : () -> ()
    %c0_38 = arith.constant 0 : index
    %c0_39 = arith.constant 0 : index
    %c0_40 = arith.constant 0 : index
    %52 = vector.load %arg2[%c0_38, %c0_39, %c0_40] : memref<8x1x8xf32, #tpu.memory_space<vmem>>, vector<8x1x8xf32>
    %cst_41 = arith.constant 5.000000e-01 : f32
    %53 = vector.broadcast %cst_41 : f32 to vector<8x1x8xf32>
    %54 = arith.cmpf ogt, %52, %53 : vector<8x1x8xf32>
    %cst_42 = arith.constant -1.000000e+09 : f32
    %55 = vector.shape_cast %54 : vector<8x1x8xi1> to vector<8x1x8xi1>
    %56 = vector.broadcast %55 : vector<8x1x8xi1> to vector<8x16x8xi1>
    %57 = vector.broadcast %cst_42 : f32 to vector<8x16x8xf32>
    %58 = arith.select %56, %51, %57 : vector<8x16x8xi1>, vector<8x16x8xf32>
    %cst_43 = arith.constant dense<0xFF800000> : vector<8x16xf32>
    %59 = vector.multi_reduction <maximumf>, %58, %cst_43 [2] : vector<8x16x8xf32> to vector<8x16xf32>
    %60 = vector.shape_cast %59 : vector<8x16xf32> to vector<8x16x1xf32>
    %61 = vector.broadcast %60 : vector<8x16x1xf32> to vector<8x16x8xf32>
    %62 = arith.subf %58, %61 : vector<8x16x8xf32>
    %63 = math.exp %62 : vector<8x16x8xf32>
    %cst_44 = arith.constant dense<0.000000e+00> : vector<8x16xf32>
    %64 = vector.multi_reduction <add>, %63, %cst_44 [2] : vector<8x16x8xf32> to vector<8x16xf32>
    %65 = vector.shape_cast %64 : vector<8x16xf32> to vector<8x16x1xf32>
    %66 = vector.broadcast %65 : vector<8x16x1xf32> to vector<8x16x8xf32>
    %67 = arith.divf %63, %66 : vector<8x16x8xf32>
    "tpu.trace_start"() <{level = 10 : i32, message = "zga,zae->zge"}> : () -> ()
    %cst_45 = arith.constant dense<0.000000e+00> : vector<8x16x32xf32>
    %68 = tpu.matmul %67, %47, %cst_45 {dimension_numbers = #tpu.dot_dimension_numbers<[2], [1], [1], [2], [0, 0, 0, 1, 1, 2], [0], [0]>} : vector<8x16x8xf32>, vector<8x8x32xf32>, vector<8x16x32xf32> -> vector<8x16x32xf32>
    "tpu.trace_stop"() : () -> ()
    %69 = vector.shape_cast %68 : vector<8x16x32xf32> to vector<2x4x16x32xf32>
    %cst_46 = arith.constant dense<0.000000e+00> : vector<2x16x32xf32>
    %70 = vector.multi_reduction <add>, %69, %cst_46 [1] : vector<2x4x16x32xf32> to vector<2x16x32xf32>
    %71 = vector.shape_cast %70 : vector<2x16x32xf32> to vector<32x32xf32>
    %c0_47 = arith.constant 0 : index
    %c0_48 = arith.constant 0 : index
    %72 = vector.load %arg16[%c0_47, %c0_48] : memref<32x32xf32, #tpu.memory_space<vmem>>, vector<32x32xf32>
    %cst_49 = arith.constant dense<0.000000e+00> : vector<32x32xf32>
    %73 = tpu.matmul %71, %72, %cst_49 {dimension_numbers = #tpu.dot_dimension_numbers<[1], [0], [0], [1], [0, 0, 1, 1], [], []>} : vector<32x32xf32>, vector<32x32xf32>, vector<32x32xf32> -> vector<32x32xf32>
    %c0_50 = arith.constant 0 : index
    %c0_51 = arith.constant 0 : index
    %74 = vector.load %arg17[%c0_50, %c0_51] : memref<1x32xf32, #tpu.memory_space<vmem>>, vector<1x32xf32>
    %75 = vector.broadcast %74 : vector<1x32xf32> to vector<32x32xf32>
    %76 = arith.addf %73, %75 : vector<32x32xf32>
    %cst_52 = arith.constant dense<0.000000e+00> : vector<2x32xf32>
    %77 = vector.multi_reduction <add>, %28, %cst_52 [1] : vector<2x8x32xf32> to vector<2x32xf32>
    %c0_53 = arith.constant 0 : index
    %c0_54 = arith.constant 0 : index
    %78 = vector.load %arg4[%c0_53, %c0_54] : memref<2x4xf32, #tpu.memory_space<vmem>>, vector<2x4xf32>
    %c0_55 = arith.constant 0 : index
    %c0_56 = arith.constant 0 : index
    %79 = vector.load %arg18[%c0_55, %c0_56] : memref<4x4xf32, #tpu.memory_space<vmem>>, vector<4x4xf32>
    %cst_57 = arith.constant dense<0.000000e+00> : vector<2x4xf32>
    %80 = tpu.matmul %78, %79, %cst_57 {dimension_numbers = #tpu.dot_dimension_numbers<[1], [0], [0], [1], [0, 0, 1, 1], [], []>} : vector<2x4xf32>, vector<4x4xf32>, vector<2x4xf32> -> vector<2x4xf32>
    %c0_58 = arith.constant 0 : index
    %c0_59 = arith.constant 0 : index
    %81 = vector.load %arg19[%c0_58, %c0_59] : memref<1x4xf32, #tpu.memory_space<vmem>>, vector<1x4xf32>
    %82 = vector.broadcast %81 : vector<1x4xf32> to vector<2x4xf32>
    %83 = arith.addf %80, %82 : vector<2x4xf32>
    %cst_60 = arith.constant 0.000000e+00 : f32
    %84 = vector.broadcast %cst_60 : f32 to vector<2x32xf32>
    %85 = arith.maximumf %77, %84 : vector<2x32xf32>
    %c0_61 = arith.constant 0 : index
    %c0_62 = arith.constant 0 : index
    %86 = vector.load %arg21[%c0_61, %c0_62] : memref<32x32xf32, #tpu.memory_space<vmem>>, vector<32x32xf32>
    %cst_63 = arith.constant dense<0.000000e+00> : vector<2x32xf32>
    %87 = tpu.matmul %85, %86, %cst_63 {dimension_numbers = #tpu.dot_dimension_numbers<[1], [0], [0], [1], [0, 0, 1, 1], [], []>} : vector<2x32xf32>, vector<32x32xf32>, vector<2x32xf32> -> vector<2x32xf32>
    %cst_64 = arith.constant 0.000000e+00 : f32
    %88 = vector.broadcast %cst_64 : f32 to vector<2x50xf32>
    %89 = arith.maximumf %21, %88 : vector<2x50xf32>
    %c0_65 = arith.constant 0 : index
    %c0_66 = arith.constant 0 : index
    %90 = vector.load %arg22[%c0_65, %c0_66] : memref<50x32xf32, #tpu.memory_space<vmem>>, vector<50x32xf32>
    %cst_67 = arith.constant dense<0.000000e+00> : vector<2x32xf32>
    %91 = tpu.matmul %89, %90, %cst_67 {dimension_numbers = #tpu.dot_dimension_numbers<[1], [0], [0], [1], [0, 0, 1, 1], [], []>} : vector<2x50xf32>, vector<50x32xf32>, vector<2x32xf32> -> vector<2x32xf32>
    %92 = arith.addf %87, %91 : vector<2x32xf32>
    %cst_68 = arith.constant 0.000000e+00 : f32
    %93 = vector.broadcast %cst_68 : f32 to vector<2x4xf32>
    %94 = arith.maximumf %83, %93 : vector<2x4xf32>
    %c0_69 = arith.constant 0 : index
    %c0_70 = arith.constant 0 : index
    %95 = vector.load %arg23[%c0_69, %c0_70] : memref<4x32xf32, #tpu.memory_space<vmem>>, vector<4x32xf32>
    %cst_71 = arith.constant dense<0.000000e+00> : vector<2x32xf32>
    %96 = tpu.matmul %94, %95, %cst_71 {dimension_numbers = #tpu.dot_dimension_numbers<[1], [0], [0], [1], [0, 0, 1, 1], [], []>} : vector<2x4xf32>, vector<4x32xf32>, vector<2x32xf32> -> vector<2x32xf32>
    %97 = arith.addf %92, %96 : vector<2x32xf32>
    %c0_72 = arith.constant 0 : index
    %c0_73 = arith.constant 0 : index
    %98 = vector.load %arg24[%c0_72, %c0_73] : memref<1x32xf32, #tpu.memory_space<vmem>>, vector<1x32xf32>
    %99 = vector.broadcast %98 : vector<1x32xf32> to vector<2x32xf32>
    %100 = arith.addf %97, %99 : vector<2x32xf32>
    %101 = vector.extract_strided_slice %100 {offsets = [0, 0], sizes = [1, 32], strides = [1, 1]} : vector<2x32xf32> to vector<1x32xf32>
    %102 = vector.shape_cast %101 : vector<1x32xf32> to vector<1x32xf32>
    %103 = vector.broadcast %102 : vector<1x32xf32> to vector<16x32xf32>
    %104 = vector.extract_strided_slice %100 {offsets = [1, 0], sizes = [1, 32], strides = [1, 1]} : vector<2x32xf32> to vector<1x32xf32>
    %105 = vector.shape_cast %104 : vector<1x32xf32> to vector<1x32xf32>
    %106 = vector.broadcast %105 : vector<1x32xf32> to vector<16x32xf32>
    %107 = tpu.concatenate %103, %106 in 0 : vector<16x32xf32>, vector<16x32xf32> -> vector<32x32xf32>
    %cst_74 = arith.constant 0.000000e+00 : f32
    %108 = vector.broadcast %cst_74 : f32 to vector<32x32xf32>
    %109 = arith.maximumf %76, %108 : vector<32x32xf32>
    %c0_75 = arith.constant 0 : index
    %c0_76 = arith.constant 0 : index
    %110 = vector.load %arg20[%c0_75, %c0_76] : memref<32x32xf32, #tpu.memory_space<vmem>>, vector<32x32xf32>
    %cst_77 = arith.constant dense<0.000000e+00> : vector<32x32xf32>
    %111 = tpu.matmul %109, %110, %cst_77 {dimension_numbers = #tpu.dot_dimension_numbers<[1], [0], [0], [1], [0, 0, 1, 1], [], []>} : vector<32x32xf32>, vector<32x32xf32>, vector<32x32xf32> -> vector<32x32xf32>
    %112 = arith.addf %111, %107 : vector<32x32xf32>
    %cst_78 = arith.constant 0.000000e+00 : f32
    %113 = vector.broadcast %cst_78 : f32 to vector<32x32xf32>
    %114 = arith.maximumf %112, %113 : vector<32x32xf32>
    %c0_79 = arith.constant 0 : index
    %c0_80 = arith.constant 0 : index
    %115 = vector.load %arg25[%c0_79, %c0_80] : memref<1x32xf32, #tpu.memory_space<vmem>>, vector<1x32xf32>
    %cst_81 = arith.constant dense<0.000000e+00> : vector<1x32xf32>
    %116 = tpu.matmul %115, %114, %cst_81 {dimension_numbers = #tpu.dot_dimension_numbers<[1], [1], [0], [0], [0, 0, 1, 0], [], []>} : vector<1x32xf32>, vector<32x32xf32>, vector<1x32xf32> -> vector<1x32xf32>
    %c0_82 = arith.constant 0 : index
    %c0_83 = arith.constant 0 : index
    %117 = vector.load %arg26[%c0_82, %c0_83] : memref<1x1xf32, #tpu.memory_space<vmem>>, vector<1x1xf32>
    %118 = vector.broadcast %117 : vector<1x1xf32> to vector<1x32xf32>
    %119 = arith.addf %116, %118 : vector<1x32xf32>
    %c0_84 = arith.constant 0 : index
    %c0_85 = arith.constant 0 : index
    %120 = vector.load %arg27[%c0_84, %c0_85] : memref<1x32xf32, #tpu.memory_space<vmem>>, vector<1x32xf32>
    tpu.vector_store %arg27[%c0_84, %c0_85], %119 {strides = array<i32>} : memref<1x32xf32, #tpu.memory_space<vmem>>, vector<1x32xf32>,
    return
  }
}

</mosaic_0001>

<llo_original>
// kernel: tpu_custom_call.1
$region0: #{tpu_custom_call.1}
  #allocation0 [shape = 'u32[]', space=smem, size = 0x4, offset = 0x4, fixed_abs, tag = 'smem constant byte address 0x4 - core index']
  #allocation1 [shape = 'u32[144,128]{1,0:T(1,128)}', space=vmem, size = 0x12000, scoped, tag = 'internal scratch']
  #allocation2 [shape = 'f32[1,1]{1,0:T(1,128)S(1)}', space=vmem, size = 0x200, scoped, tag = 'scoped memory for tpu_custom_call.1']
  %s0 = inlined_call_operand.vmem [shape: f32[2,8,32], index: 0, kind: input, shape index: {}]
  %s1 = inlined_call_operand.vmem [shape: f32[16,8], index: 1, kind: input, shape index: {}]
  %s2 = inlined_call_operand.vmem [shape: f32[8,1,8], index: 2, kind: input, shape index: {}]
  %s3 = inlined_call_operand.hbm [shape: f32[2,64], index: 3, kind: input, shape index: {}]
  %s4 = inlined_call_operand.hbm [shape: f32[2,4], index: 4, kind: input, shape index: {}]
  %s5 = inlined_call_operand.hbm [shape: f32[1,4,1,32], index: 5, kind: input, shape index: {}]
  %s6 = inlined_call_operand.hbm [shape: f32[64,200], index: 6, kind: input, shape index: {}]
  %s7 = inlined_call_operand.hbm [shape: f32[1,200], index: 7, kind: input, shape index: {}]
  %s8 = inlined_call_operand.vmem [shape: f32[200,100], index: 8, kind: input, shape index: {}]
  %s9 = inlined_call_operand.hbm [shape: f32[1,100], index: 9, kind: input, shape index: {}]
  %s10 = inlined_call_operand.vmem [shape: f32[100,50], index: 10, kind: input, shape index: {}]
  %s11 = inlined_call_operand.hbm [shape: f32[1,50], index: 11, kind: input, shape index: {}]
  %s12 = inlined_call_operand.hbm [shape: f32[8,32], index: 12, kind: input, shape index: {}]
  %s13 = inlined_call_operand.hbm [shape: f32[1,32], index: 13, kind: input, shape index: {}]
  %s14 = inlined_call_operand.hbm [shape: f32[32,64], index: 14, kind: input, shape index: {}]
  %s15 = inlined_call_operand.hbm [shape: f32[1,64], index: 15, kind: input, shape index: {}]
  %s16 = inlined_call_operand.hbm [shape: f32[32,32], index: 16, kind: input, shape index: {}]
  %s17 = inlined_call_operand.hbm [shape: f32[1,32], index: 17, kind: input, shape index: {}]
  %s18 = inlined_call_operand.hbm [shape: f32[4,4], index: 18, kind: input, shape index: {}]
  %s19 = inlined_call_operand.hbm [shape: f32[1,4], index: 19, kind: input, shape index: {}]
  %s20 = inlined_call_operand.hbm [shape: f32[32,32], index: 20, kind: input, shape index: {}]
  %s21 = inlined_call_operand.hbm [shape: f32[32,32], index: 21, kind: input, shape index: {}]
  %s22 = inlined_call_operand.vmem [shape: f32[50,32], index: 22, kind: input, shape index: {}]
  %s23 = inlined_call_operand.vmem [shape: f32[4,32], index: 23, kind: input, shape index: {}]
  %s24 = inlined_call_operand.hbm [shape: f32[1,32], index: 24, kind: input, shape index: {}]
  %s25 = inlined_call_operand.vmem [shape: f32[1,32], index: 25, kind: input, shape index: {}]
  %s26 = inlined_call_operand.<no memory space> [shape: f32[1,1], index: 26, kind: input, shape index: {}]
  %s27 = inlined_call_operand.hbm [shape: f32[1,32], index: 27, kind: output, shape index: {}]
  %s28 = sld [smem:[#allocation0]]
  $region190: #{tpu_custom_call.1} parent=0
    _
  %s30 = ssub.s32 1, %s28
  %s31 = scalar_select 0, %s30, %s28
  %v32 = vstv %s26
  %33 = vst [vmem:[#allocation2] sm:$0x1] %v32
  $region1: #{tpu_custom_call.1} parent=0
    #allocation3 [shape = 'u8[1024]{0}', space=vmem, size = 0x400, scoped, tag = 'input window, operand 3, single buffered']
    #allocation4 [shape = 's32[1]{0}', space=sflag, size = 0x4, scoped, tag = 'scoped memory for tpu_custom_call.1']
    #allocation5 [shape = 's32[1]{0}', space=sflag, size = 0x4, scoped, tag = 'scoped memory for tpu_custom_call.1']
    #allocation6 [shape = 'u8[1024]{0}', space=vmem, size = 0x400, scoped, tag = 'input window, operand 4, single buffered']
    #allocation7 [shape = 's32[1]{0}', space=sflag, size = 0x4, scoped, tag = 'scoped memory for tpu_custom_call.1']
    #allocation8 [shape = 'u8[2048]{0}', space=vmem, size = 0x800, scoped, tag = 'input window, operand 5, single buffered']
    #allocation9 [shape = 'u8[65536]{0}', space=vmem, size = 0x10000, scoped, tag = 'input window, operand 6, single buffered']
    #allocation10 [shape = 's32[1]{0}', space=sflag, size = 0x4, scoped, tag = 'scoped memory for tpu_custom_call.1']
    #allocation11 [shape = 'u8[1024]{0}', space=vmem, size = 0x400, scoped, tag = 'input window, operand 7, single buffered']
    #allocation12 [shape = 'u8[512]{0}', space=vmem, size = 0x400, scoped, tag = 'input window, operand 9, single buffered']
    #allocation13 [shape = 's32[1]{0}', space=sflag, size = 0x4, scoped, tag = 'scoped memory for tpu_custom_call.1']
    #allocation14 [shape = 'u8[512]{0}', space=vmem, size = 0x400, scoped, tag = 'input window, operand 11, single buffered']
    #allocation15 [shape = 'u8[4096]{0}', space=vmem, size = 0x1000, scoped, tag = 'input window, operand 12, single buffered']
    #allocation16 [shape = 's32[1]{0}', space=sflag, size = 0x4, scoped, tag = 'scoped memory for tpu_custom_call.1']
    #allocation17 [shape = 'u8[512]{0}', space=vmem, size = 0x400, scoped, tag = 'input window, operand 13, single buffered']
    #allocation18 [shape = 'u8[16384]{0}', space=vmem, size = 0x4000, scoped, tag = 'input window, operand 14, single buffered']
    #allocation19 [shape = 's32[1]{0}', space=sflag, size = 0x4, scoped, tag = 'scoped memory for tpu_custom_call.1']
    #allocation20 [shape = 'u8[512]{0}', space=vmem, size = 0x400, scoped, tag = 'input window, operand 15, single buffered']
    #allocation21 [shape = 'u8[16384]{0}', space=vmem, size = 0x4000, scoped, tag = 'input window, operand 16, single buffered']
    #allocation22 [shape = 's32[1]{0}', space=sflag, size = 0x4, scoped, tag = 'scoped memory for tpu_custom_call.1']
    #allocation23 [shape = 'u8[512]{0}', space=vmem, size = 0x400, scoped, tag = 'input window, operand 17, single buffered']
    #allocation24 [shape = 'u8[2048]{0}', space=vmem, size = 0x800, scoped, tag = 'input window, operand 18, single buffered']
    #allocation25 [shape = 's32[1]{0}', space=sflag, size = 0x4, scoped, tag = 'scoped memory for tpu_custom_call.1']
    #allocation26 [shape = 'u8[512]{0}', space=vmem, size = 0x400, scoped, tag = 'input window, operand 19, single buffered']
    #allocation27 [shape = 'u8[16384]{0}', space=vmem, size = 0x4000, scoped, tag = 'input window, operand 20, single buffered']
    #allocation28 [shape = 's32[1]{0}', space=sflag, size = 0x4, scoped, tag = 'scoped memory for tpu_custom_call.1']
    #allocation29 [shape = 'u8[16384]{0}', space=vmem, size = 0x4000, scoped, tag = 'input window, operand 21, single buffered']
    #allocation30 [shape = 'u8[512]{0}', space=vmem, size = 0x400, scoped, tag = 'input window, operand 24, single buffered']
    #allocation31 [shape = 's32[1]{0}', space=sflag, size = 0x4, scoped, tag = 'scoped memory for tpu_custom_call.1']
    #allocation32 [shape = 'u8[512]{0}', space=vmem, size = 0x400, scoped, tag = 'output window, operand 0, single buffered']
    %34 = vsyncpa [#allocation4], 0
    %35 = vsyncpa [#allocation7], 0
    %36 = vsyncpa [#allocation10], 0
    %37 = vsyncpa [#allocation13], 0
    %38 = vsyncpa [#allocation16], 0
    %39 = vsyncpa [#allocation19], 0
    %40 = vsyncpa [#allocation22], 0
    %41 = vsyncpa [#allocation25], 0
    %42 = vsyncpa [#allocation28], 0
    %43 = vsyncpa [#allocation31], 0
    %44 = vsyncpa [#allocation5], 0
    // Predicated region
    $region2: #{tpu_custom_call.1} parent=1 // pred_check
      _
    $region3: #{tpu_custom_call.1} parent=1 // pred_check_branch
      %46 = sbr.rel (0) target = $region5
    $region4: #{tpu_custom_call.1} parent=1 // pred_region
      _
    $region5: #{tpu_custom_call.1} parent=1 // pred_fallthru
      _
    // Predicated region
    $region6: #{tpu_custom_call.1} parent=1 // pred_check
      _
    $region7: #{tpu_custom_call.1} parent=1 // pred_check_branch
      %48 = sbr.rel (0) target = $region9
    $region8: #{tpu_custom_call.1} parent=1 // pred_region
      _
    $region9: #{tpu_custom_call.1} parent=1 // pred_fallthru
      _
    // Predicated region
    $region10: #{tpu_custom_call.1} parent=1 // pred_check
      _
    $region11: #{tpu_custom_call.1} parent=1 // pred_check_branch
      %50 = sbr.rel (0) target = $region13
    $region12: #{tpu_custom_call.1} parent=1 // pred_region
      _
    $region13: #{tpu_custom_call.1} parent=1 // pred_fallthru
      _
    // Predicated region
    $region14: #{tpu_custom_call.1} parent=1 // pred_check
      _
    $region15: #{tpu_custom_call.1} parent=1 // pred_check_branch
      %52 = sbr.rel (0) target = $region17
    $region16: #{tpu_custom_call.1} parent=1 // pred_region
      %s54 = ssub.s32 32, 32
      %55 = vsyncadd [#allocation4], %s54
      %s57 = sshll.u32 [#allocation3], 4
      %s58 = int_to_ptr.vmem [resolvable:$true] %s57
      %60 = dma.hbm_to_vmem [thread:$0]  %s3, 32, %s58, [#allocation4]
    $region17: #{tpu_custom_call.1} parent=1 // pred_fallthru
      _
    // Predicated region
    $region18: #{tpu_custom_call.1} parent=1 // pred_check
      _
    $region19: #{tpu_custom_call.1} parent=1 // pred_check_branch
      %62 = sbr.rel (0) target = $region21
    $region20: #{tpu_custom_call.1} parent=1 // pred_region
      %s64 = ssub.s32 32, 32
      %65 = vsyncadd [#allocation7], %s64
      %s67 = sshll.u32 [#allocation6], 4
      %s68 = int_to_ptr.vmem [resolvable:$true] %s67
      %70 = dma.hbm_to_vmem [thread:$0]  %s4, 32, %s68, [#allocation7]
    $region21: #{tpu_custom_call.1} parent=1 // pred_fallthru
      _
    // Predicated region
    $region22: #{tpu_custom_call.1} parent=1 // pred_check
      _
    $region23: #{tpu_custom_call.1} parent=1 // pred_check_branch
      %72 = sbr.rel (0) target = $region25
    $region24: #{tpu_custom_call.1} parent=1 // pred_region
      %s74 = ssub.s32 64, 64
      %75 = vsyncadd [#allocation7], %s74
      %s76 = sshll.u32 [#allocation8], 4
      %s77 = int_to_ptr.vmem [resolvable:$true] %s76
      %82 = dma.hbm_to_vmem [thread:$0]  %s5, 64, %s77, [#allocation7], 16, 16, 1
    $region25: #{tpu_custom_call.1} parent=1 // pred_fallthru
      _
    // Predicated region
    $region26: #{tpu_custom_call.1} parent=1 // pred_check
      _
    $region27: #{tpu_custom_call.1} parent=1 // pred_check_branch
      %84 = sbr.rel (0) target = $region29
    $region28: #{tpu_custom_call.1} parent=1 // pred_region
      %s86 = ssub.s32 2048, 2048
      %87 = vsyncadd [#allocation10], %s86
      %s88 = sshll.u32 [#allocation9], 4
      %s89 = int_to_ptr.vmem [resolvable:$true] %s88
      %94 = dma.hbm_to_vmem [thread:$0]  %s6, 2048, %s89, [#allocation10], 256, 256, 16
    $region29: #{tpu_custom_call.1} parent=1 // pred_fallthru
      _
    // Predicated region
    $region30: #{tpu_custom_call.1} parent=1 // pred_check
      _
    $region31: #{tpu_custom_call.1} parent=1 // pred_check_branch
      %96 = sbr.rel (0) target = $region33
    $region32: #{tpu_custom_call.1} parent=1 // pred_region
      %s98 = ssub.s32 32, 32
      %99 = vsyncadd [#allocation10], %s98
      %s101 = sshll.u32 [#allocation11], 4
      %s102 = int_to_ptr.vmem [resolvable:$true] %s101
      %104 = dma.hbm_to_vmem [thread:$0]  %s7, 32, %s102, [#allocation10]
    $region33: #{tpu_custom_call.1} parent=1 // pred_fallthru
      _
    // Predicated region
    $region34: #{tpu_custom_call.1} parent=1 // pred_check
      _
    $region35: #{tpu_custom_call.1} parent=1 // pred_check_branch
      %106 = sbr.rel (0) target = $region37
    $region36: #{tpu_custom_call.1} parent=1 // pred_region
      _
    $region37: #{tpu_custom_call.1} parent=1 // pred_fallthru
      _
    // Predicated region
    $region38: #{tpu_custom_call.1} parent=1 // pred_check
      _
    $region39: #{tpu_custom_call.1} parent=1 // pred_check_branch
      %108 = sbr.rel (0) target = $region41
    $region40: #{tpu_custom_call.1} parent=1 // pred_region
      %s110 = ssub.s32 16, 16
      %111 = vsyncadd [#allocation13], %s110
      %s113 = sshll.u32 [#allocation12], 4
      %s114 = int_to_ptr.vmem [resolvable:$true] %s113
      %116 = dma.hbm_to_vmem [thread:$0]  %s9, 16, %s114, [#allocation13]
    $region41: #{tpu_custom_call.1} parent=1 // pred_fallthru
      _
    // Predicated region
    $region42: #{tpu_custom_call.1} parent=1 // pred_check
      _
    $region43: #{tpu_custom_call.1} parent=1 // pred_check_branch
      %118 = sbr.rel (0) target = $region45
    $region44: #{tpu_custom_call.1} parent=1 // pred_region
      _
    $region45: #{tpu_custom_call.1} parent=1 // pred_fallthru
      _
    // Predicated region
    $region46: #{tpu_custom_call.1} parent=1 // pred_check
      _
    $region47: #{tpu_custom_call.1} parent=1 // pred_check_branch
      %120 = sbr.rel (0) target = $region49
    $region48: #{tpu_custom_call.1} parent=1 // pred_region
      %s122 = ssub.s32 16, 16
      %123 = vsyncadd [#allocation13], %s122
      %s125 = sshll.u32 [#allocation14], 4
      %s126 = int_to_ptr.vmem [resolvable:$true] %s125
      %128 = dma.hbm_to_vmem [thread:$0]  %s11, 16, %s126, [#allocation13]
    $region49: #{tpu_custom_call.1} parent=1 // pred_fallthru
      _
    // Predicated region
    $region50: #{tpu_custom_call.1} parent=1 // pred_check
      _
    $region51: #{tpu_custom_call.1} parent=1 // pred_check_branch
      %130 = sbr.rel (0) target = $region53
    $region52: #{tpu_custom_call.1} parent=1 // pred_region
      %s132 = ssub.s32 128, 128
      %133 = vsyncadd [#allocation16], %s132
      %s135 = sshll.u32 [#allocation15], 4
      %s136 = int_to_ptr.vmem [resolvable:$true] %s135
      %138 = dma.hbm_to_vmem [thread:$0]  %s12, 128, %s136, [#allocation16]
    $region53: #{tpu_custom_call.1} parent=1 // pred_fallthru
      _
    // Predicated region
    $region54: #{tpu_custom_call.1} parent=1 // pred_check
      _
    $region55: #{tpu_custom_call.1} parent=1 // pred_check_branch
      %140 = sbr.rel (0) target = $region57
    $region56: #{tpu_custom_call.1} parent=1 // pred_region
      %s142 = ssub.s32 16, 16
      %143 = vsyncadd [#allocation16], %s142
      %s145 = sshll.u32 [#allocation17], 4
      %s146 = int_to_ptr.vmem [resolvable:$true] %s145
      %148 = dma.hbm_to_vmem [thread:$0]  %s13, 16, %s146, [#allocation16]
    $region57: #{tpu_custom_call.1} parent=1 // pred_fallthru
      _
    // Predicated region
    $region58: #{tpu_custom_call.1} parent=1 // pred_check
      _
    $region59: #{tpu_custom_call.1} parent=1 // pred_check_branch
      %150 = sbr.rel (0) target = $region61
    $region60: #{tpu_custom_call.1} parent=1 // pred_region
      %s152 = ssub.s32 512, 512
      %153 = vsyncadd [#allocation19], %s152
      %s154 = sshll.u32 [#allocation18], 4
      %s155 = int_to_ptr.vmem [resolvable:$true] %s154
      %160 = dma.hbm_to_vmem [thread:$0]  %s14, 512, %s155, [#allocation19], 128, 128, 8
    $region61: #{tpu_custom_call.1} parent=1 // pred_fallthru
      _
    // Predicated region
    $region62: #{tpu_custom_call.1} parent=1 // pred_check
      _
    $region63: #{tpu_custom_call.1} parent=1 // pred_check_branch
      %162 = sbr.rel (0) target = $region65
    $region64: #{tpu_custom_call.1} parent=1 // pred_region
      %s164 = ssub.s32 16, 16
      %165 = vsyncadd [#allocation19], %s164
      %s167 = sshll.u32 [#allocation20], 4
      %s168 = int_to_ptr.vmem [resolvable:$true] %s167
      %170 = dma.hbm_to_vmem [thread:$0]  %s15, 16, %s168, [#allocation19]
    $region65: #{tpu_custom_call.1} parent=1 // pred_fallthru
      _
    // Predicated region
    $region66: #{tpu_custom_call.1} parent=1 // pred_check
      _
    $region67: #{tpu_custom_call.1} parent=1 // pred_check_branch
      %172 = sbr.rel (0) target = $region69
    $region68: #{tpu_custom_call.1} parent=1 // pred_region
      %s174 = ssub.s32 512, 512
      %175 = vsyncadd [#allocation22], %s174
      %s176 = sshll.u32 [#allocation21], 4
      %s177 = int_to_ptr.vmem [resolvable:$true] %s176
      %182 = dma.hbm_to_vmem [thread:$0]  %s16, 512, %s177, [#allocation22], 128, 128, 8
    $region69: #{tpu_custom_call.1} parent=1 // pred_fallthru
      _
    // Predicated region
    $region70: #{tpu_custom_call.1} parent=1 // pred_check
      _
    $region71: #{tpu_custom_call.1} parent=1 // pred_check_branch
      %184 = sbr.rel (0) target = $region73
    $region72: #{tpu_custom_call.1} parent=1 // pred_region
      %s186 = ssub.s32 16, 16
      %187 = vsyncadd [#allocation22], %s186
      %s189 = sshll.u32 [#allocation23], 4
      %s190 = int_to_ptr.vmem [resolvable:$true] %s189
      %192 = dma.hbm_to_vmem [thread:$0]  %s17, 16, %s190, [#allocation22]
    $region73: #{tpu_custom_call.1} parent=1 // pred_fallthru
      _
    // Predicated region
    $region74: #{tpu_custom_call.1} parent=1 // pred_check
      _
    $region75: #{tpu_custom_call.1} parent=1 // pred_check_branch
      %194 = sbr.rel (0) target = $region77
    $region76: #{tpu_custom_call.1} parent=1 // pred_region
      %s196 = ssub.s32 64, 64
      %197 = vsyncadd [#allocation25], %s196
      %s199 = sshll.u32 [#allocation24], 4
      %s200 = int_to_ptr.vmem [resolvable:$true] %s199
      %202 = dma.hbm_to_vmem [thread:$0]  %s18, 64, %s200, [#allocation25]
    $region77: #{tpu_custom_call.1} parent=1 // pred_fallthru
      _
    // Predicated region
    $region78: #{tpu_custom_call.1} parent=1 // pred_check
      _
    $region79: #{tpu_custom_call.1} parent=1 // pred_check_branch
      %204 = sbr.rel (0) target = $region81
    $region80: #{tpu_custom_call.1} parent=1 // pred_region
      %s206 = ssub.s32 16, 16
      %207 = vsyncadd [#allocation25], %s206
      %s209 = sshll.u32 [#allocation26], 4
      %s210 = int_to_ptr.vmem [resolvable:$true] %s209
      %212 = dma.hbm_to_vmem [thread:$0]  %s19, 16, %s210, [#allocation25]
    $region81: #{tpu_custom_call.1} parent=1 // pred_fallthru
      _
    // Predicated region
    $region82: #{tpu_custom_call.1} parent=1 // pred_check
      _
    $region83: #{tpu_custom_call.1} parent=1 // pred_check_branch
      %214 = sbr.rel (0) target = $region85
    $region84: #{tpu_custom_call.1} parent=1 // pred_region
      %s216 = ssub.s32 512, 512
      %217 = vsyncadd [#allocation28], %s216
      %s218 = sshll.u32 [#allocation27], 4
      %s219 = int_to_ptr.vmem [resolvable:$true] %s218
      %224 = dma.hbm_to_vmem [thread:$0]  %s20, 512, %s219, [#allocation28], 128, 128, 8
    $region85: #{tpu_custom_call.1} parent=1 // pred_fallthru
      _
    // Predicated region
    $region86: #{tpu_custom_call.1} parent=1 // pred_check
      _
    $region87: #{tpu_custom_call.1} parent=1 // pred_check_branch
      %226 = sbr.rel (0) target = $region89
    $region88: #{tpu_custom_call.1} parent=1 // pred_region
      %s228 = ssub.s32 512, 512
      %229 = vsyncadd [#allocation28], %s228
      %s230 = sshll.u32 [#allocation29], 4
      %s231 = int_to_ptr.vmem [resolvable:$true] %s230
      %236 = dma.hbm_to_vmem [thread:$0]  %s21, 512, %s231, [#allocation28], 128, 128, 8
    $region89: #{tpu_custom_call.1} parent=1 // pred_fallthru
      _
    // Predicated region
    $region90: #{tpu_custom_call.1} parent=1 // pred_check
      _
    $region91: #{tpu_custom_call.1} parent=1 // pred_check_branch
      %238 = sbr.rel (0) target = $region93
    $region92: #{tpu_custom_call.1} parent=1 // pred_region
      _
    $region93: #{tpu_custom_call.1} parent=1 // pred_fallthru
      _
    // Predicated region
    $region94: #{tpu_custom_call.1} parent=1 // pred_check
      _
    $region95: #{tpu_custom_call.1} parent=1 // pred_check_branch
      %240 = sbr.rel (0) target = $region97
    $region96: #{tpu_custom_call.1} parent=1 // pred_region
      _
    $region97: #{tpu_custom_call.1} parent=1 // pred_fallthru
      _
    // Predicated region
    $region98: #{tpu_custom_call.1} parent=1 // pred_check
      _
    $region99: #{tpu_custom_call.1} parent=1 // pred_check_branch
      %242 = sbr.rel (0) target = $region101
    $region100: #{tpu_custom_call.1} parent=1 // pred_region
      %s244 = ssub.s32 16, 16
      %245 = vsyncadd [#allocation31], %s244
      %s247 = sshll.u32 [#allocation30], 4
      %s248 = int_to_ptr.vmem [resolvable:$true] %s247
      %250 = dma.hbm_to_vmem [thread:$0]  %s24, 16, %s248, [#allocation31]
    $region101: #{tpu_custom_call.1} parent=1 // pred_fallthru
      _
    // Predicated region
    $region102: #{tpu_custom_call.1} parent=1 // pred_check
      _
    $region103: #{tpu_custom_call.1} parent=1 // pred_check_branch
      %252 = sbr.rel (0) target = $region105
    $region104: #{tpu_custom_call.1} parent=1 // pred_region
      _
    $region105: #{tpu_custom_call.1} parent=1 // pred_fallthru
      _
    // Predicated region
    $region106: #{tpu_custom_call.1} parent=1 // pred_check
      _
    $region107: #{tpu_custom_call.1} parent=1 // pred_check_branch
      %254 = sbr.rel (0) target = $region109
    $region108: #{tpu_custom_call.1} parent=1 // pred_region
      _
    $region109: #{tpu_custom_call.1} parent=1 // pred_fallthru
      _
    // Predicated region
    $region110: #{tpu_custom_call.1} parent=1 // pred_check
      _
    $region111: #{tpu_custom_call.1} parent=1 // pred_check_branch
      %256 = sbr.rel (0) target = $region113
    $region112: #{tpu_custom_call.1} parent=1 // pred_region
      %257 = dma.done [#allocation4], 32
    $region113: #{tpu_custom_call.1} parent=1 // pred_fallthru
      _
    // Predicated region
    $region114: #{tpu_custom_call.1} parent=1 // pred_check
      _
    $region115: #{tpu_custom_call.1} parent=1 // pred_check_branch
      %259 = sbr.rel (0) target = $region117
    $region116: #{tpu_custom_call.1} parent=1 // pred_region
      %260 = dma.done [#allocation7], 32
    $region117: #{tpu_custom_call.1} parent=1 // pred_fallthru
      _
    // Predicated region
    $region118: #{tpu_custom_call.1} parent=1 // pred_check
      _
    $region119: #{tpu_custom_call.1} parent=1 // pred_check_branch
      %262 = sbr.rel (0) target = $region121
    $region120: #{tpu_custom_call.1} parent=1 // pred_region
      %263 = dma.done [#allocation7], 64
    $region121: #{tpu_custom_call.1} parent=1 // pred_fallthru
      _
    // Predicated region
    $region122: #{tpu_custom_call.1} parent=1 // pred_check
      _
    $region123: #{tpu_custom_call.1} parent=1 // pred_check_branch
      %265 = sbr.rel (0) target = $region125
    $region124: #{tpu_custom_call.1} parent=1 // pred_region
      %266 = dma.done [#allocation10], 2048
    $region125: #{tpu_custom_call.1} parent=1 // pred_fallthru
      _
    // Predicated region
    $region126: #{tpu_custom_call.1} parent=1 // pred_check
      _
    $region127: #{tpu_custom_call.1} parent=1 // pred_check_branch
      %268 = sbr.rel (0) target = $region129
    $region128: #{tpu_custom_call.1} parent=1 // pred_region
      %269 = dma.done [#allocation10], 32
    $region129: #{tpu_custom_call.1} parent=1 // pred_fallthru
      _
    // Predicated region
    $region130: #{tpu_custom_call.1} parent=1 // pred_check
      _
    $region131: #{tpu_custom_call.1} parent=1 // pred_check_branch
      %271 = sbr.rel (0) target = $region133
    $region132: #{tpu_custom_call.1} parent=1 // pred_region
      %272 = dma.done [#allocation13], 16
    $region133: #{tpu_custom_call.1} parent=1 // pred_fallthru
      _
    // Predicated region
    $region134: #{tpu_custom_call.1} parent=1 // pred_check
      _
    $region135: #{tpu_custom_call.1} parent=1 // pred_check_branch
      %274 = sbr.rel (0) target = $region137
    $region136: #{tpu_custom_call.1} parent=1 // pred_region
      %275 = dma.done [#allocation13], 16
    $region137: #{tpu_custom_call.1} parent=1 // pred_fallthru
      _
    // Predicated region
    $region138: #{tpu_custom_call.1} parent=1 // pred_check
      _
    $region139: #{tpu_custom_call.1} parent=1 // pred_check_branch
      %277 = sbr.rel (0) target = $region141
    $region140: #{tpu_custom_call.1} parent=1 // pred_region
      %278 = dma.done [#allocation16], 128
    $region141: #{tpu_custom_call.1} parent=1 // pred_fallthru
      _
    // Predicated region
    $region142: #{tpu_custom_call.1} parent=1 // pred_check
      _
    $region143: #{tpu_custom_call.1} parent=1 // pred_check_branch
      %280 = sbr.rel (0) target = $region145
    $region144: #{tpu_custom_call.1} parent=1 // pred_region
      %281 = dma.done [#allocation16], 16
    $region145: #{tpu_custom_call.1} parent=1 // pred_fallthru
      _
    // Predicated region
    $region146: #{tpu_custom_call.1} parent=1 // pred_check
      _
    $region147: #{tpu_custom_call.1} parent=1 // pred_check_branch
      %283 = sbr.rel (0) target = $region149
    $region148: #{tpu_custom_call.1} parent=1 // pred_region
      %284 = dma.done [#allocation19], 512
    $region149: #{tpu_custom_call.1} parent=1 // pred_fallthru
      _
    // Predicated region
    $region150: #{tpu_custom_call.1} parent=1 // pred_check
      _
    $region151: #{tpu_custom_call.1} parent=1 // pred_check_branch
      %286 = sbr.rel (0) target = $region153
    $region152: #{tpu_custom_call.1} parent=1 // pred_region
      %287 = dma.done [#allocation19], 16
    $region153: #{tpu_custom_call.1} parent=1 // pred_fallthru
      _
    // Predicated region
    $region154: #{tpu_custom_call.1} parent=1 // pred_check
      _
    $region155: #{tpu_custom_call.1} parent=1 // pred_check_branch
      %289 = sbr.rel (0) target = $region157
    $region156: #{tpu_custom_call.1} parent=1 // pred_region
      %290 = dma.done [#allocation22], 512
    $region157: #{tpu_custom_call.1} parent=1 // pred_fallthru
      _
    // Predicated region
    $region158: #{tpu_custom_call.1} parent=1 // pred_check
      _
    $region159: #{tpu_custom_call.1} parent=1 // pred_check_branch
      %292 = sbr.rel (0) target = $region161
    $region160: #{tpu_custom_call.1} parent=1 // pred_region
      %293 = dma.done [#allocation22], 16
    $region161: #{tpu_custom_call.1} parent=1 // pred_fallthru
      _
    // Predicated region
    $region162: #{tpu_custom_call.1} parent=1 // pred_check
      _
    $region163: #{tpu_custom_call.1} parent=1 // pred_check_branch
      %295 = sbr.rel (0) target = $region165
    $region164: #{tpu_custom_call.1} parent=1 // pred_region
      %296 = dma.done [#allocation25], 64
    $region165: #{tpu_custom_call.1} parent=1 // pred_fallthru
      _
    // Predicated region
    $region166: #{tpu_custom_call.1} parent=1 // pred_check
      _
    $region167: #{tpu_custom_call.1} parent=1 // pred_check_branch
      %298 = sbr.rel (0) target = $region169
    $region168: #{tpu_custom_call.1} parent=1 // pred_region
      %299 = dma.done [#allocation25], 16
    $region169: #{tpu_custom_call.1} parent=1 // pred_fallthru
      _
    // Predicated region
    $region170: #{tpu_custom_call.1} parent=1 // pred_check
      _
    $region171: #{tpu_custom_call.1} parent=1 // pred_check_branch
      %301 = sbr.rel (0) target = $region173
    $region172: #{tpu_custom_call.1} parent=1 // pred_region
      %302 = dma.done [#allocation28], 512
    $region173: #{tpu_custom_call.1} parent=1 // pred_fallthru
      _
    // Predicated region
    $region174: #{tpu_custom_call.1} parent=1 // pred_check
      _
    $region175: #{tpu_custom_call.1} parent=1 // pred_check_branch
      %304 = sbr.rel (0) target = $region177
    $region176: #{tpu_custom_call.1} parent=1 // pred_region
      %305 = dma.done [#allocation28], 512
    $region177: #{tpu_custom_call.1} parent=1 // pred_fallthru
      _
    // Predicated region
    $region178: #{tpu_custom_call.1} parent=1 // pred_check
      _
    $region179: #{tpu_custom_call.1} parent=1 // pred_check_branch
      %307 = sbr.rel (0) target = $region181
    $region180: #{tpu_custom_call.1} parent=1 // pred_region
      %308 = dma.done [#allocation31], 16
    $region181: #{tpu_custom_call.1} parent=1 // pred_fallthru
      _
    %v309 = vld [vmem:[#allocation3] sm:$0x3]
    %v310 = vld [vmem:[#allocation9] sm:$0xff]
    %v311 = vld [vmem:[#allocation9 + $0x8] sm:$0xff]
    %v312 = vld [vmem:[#allocation9 + $0x10] sm:$0xff]
    %v313 = vld [vmem:[#allocation9 + $0x18] sm:$0xff]
    %v314 = vld [vmem:[#allocation9 + $0x20] sm:$0xff]
    %v315 = vld [vmem:[#allocation9 + $0x28] sm:$0xff]
    %v316 = vld [vmem:[#allocation9 + $0x30] sm:$0xff]
    %v317 = vld [vmem:[#allocation9 + $0x38] sm:$0xff]
    %v318 = vld [vmem:[#allocation9 + $0x40] sm:$0xff]
    %v319 = vld [vmem:[#allocation9 + $0x48] sm:$0xff]
    %v320 = vld [vmem:[#allocation9 + $0x50] sm:$0xff]
    %v321 = vld [vmem:[#allocation9 + $0x58] sm:$0xff]
    %v322 = vld [vmem:[#allocation9 + $0x60] sm:$0xff]
    %v323 = vld [vmem:[#allocation9 + $0x68] sm:$0xff]
    %v324 = vld [vmem:[#allocation9 + $0x70] sm:$0xff]
    %v325 = vld [vmem:[#allocation9 + $0x78] sm:$0xff]
    %v326 = vld [vmem:[#allocation11] sm:$0x3]
    %v328 = vlaneseq
    %v329 = vshrl.u32 %v328, 7
    %v330 = vsub.s32 0, %v329
    %v331 = vrot.slane %v326, %v330
    %v332 = vlaneseq
    %v333 = vshrl.u32 %v332, 7
    %v334 = vsub.s32 1, %v333
    %v335 = vrot.slane %v326, %v334
    %vm338 = vcmask 523264
    %v340 = vsel %vm338, %v309, 0
    %342 = vmatprep.subr.mxu0 0.0
    %343 = vmatpush1.msra.mxu0 0.0
    %344 = vmatprep.subr.mxu0 0.0
    %345 = vmatpush1.msra.mxu0 0.0
    %346 = vmatprep.subr.mxu0 0.0
    %347 = vmatpush1.msra.mxu0 0.0
    %348 = vmatprep.subr.mxu0 0.0
    %349 = vmatpush1.msra.mxu0 0.0
    %350 = vmatprep.subr.mxu0 0.0
    %351 = vmatpush1.msra.mxu0 0.0
    %352 = vmatprep.subr.mxu0 0.0
    %353 = vmatpush1.msra.mxu0 0.0
    %354 = vmatprep.subr.mxu0 0.0
    %355 = vmatpush1.msra.mxu0 0.0
    %356 = vmatprep.subr.mxu0 0.0
    %357 = vmatpush1.msra.mxu0 0.0
    %358 = vmatprep.subr.mxu0 %v325
    %359 = vmatpush1.msra.mxu0 %v324
    %360 = vmatprep.subr.mxu0 %v323
    %361 = vmatpush1.msra.mxu0 %v322
    %362 = vmatprep.subr.mxu0 %v321
    %363 = vmatpush1.msra.mxu0 %v320
    %364 = vmatprep.subr.mxu0 %v319
    %365 = vmatpush1.msra.mxu0 %v318
    %366 = vmatprep.subr.mxu0 %v317
    %367 = vmatpush1.msra.mxu0 %v316
    %368 = vmatprep.subr.mxu0 %v315
    %369 = vmatpush1.msra.mxu0 %v314
    %370 = vmatprep.subr.mxu0 %v313
    %371 = vmatpush1.msra.mxu0 %v312
    %372 = vmatprep.subr.mxu0 %v311
    %373 = vmatpush1.msra.mxu0 %v310
    %374 = vmatprep.subr.mxu0 0.0
    %375 = vmatpush2.msra.mxu0 0.0
    %376 = vmatprep.subr.mxu0 0.0
    %377 = vmatpush2.msra.mxu0 0.0
    %378 = vmatprep.subr.mxu0 0.0
    %379 = vmatpush2.msra.mxu0 0.0
    %380 = vmatprep.subr.mxu0 0.0
    %381 = vmatpush2.msra.mxu0 0.0
    %382 = vmatprep.subr.mxu0 0.0
    %383 = vmatpush2.msra.mxu0 0.0
    %384 = vmatprep.subr.mxu0 0.0
    %385 = vmatpush2.msra.mxu0 0.0
    %386 = vmatprep.subr.mxu0 0.0
    %387 = vmatpush2.msra.mxu0 0.0
    %388 = vmatprep.subr.mxu0 0.0
    %389 = vmatpush2.msra.mxu0 0.0
    %390 = vmatprep.subr.mxu0 0.0
    %391 = vmatpush2.msra.mxu0 0.0
    %392 = vmatprep.subr.mxu0 0.0
    %393 = vmatpush2.msra.mxu0 0.0
    %394 = vmatprep.subr.mxu0 0.0
    %395 = vmatpush2.msra.mxu0 0.0
    %396 = vmatprep.subr.mxu0 0.0
    %397 = vmatpush2.msra.mxu0 0.0
    %398 = vmatprep.subr.mxu0 0.0
    %399 = vmatpush2.msra.mxu0 0.0
    %400 = vmatprep.subr.mxu0 0.0
    %401 = vmatpush2.msra.mxu0 0.0
    %402 = vmatprep.subr.mxu0 0.0
    %403 = vmatpush2.msra.mxu0 0.0
    %404 = vmatprep.subr.mxu0 0.0
    %405 = vmatpush2.msra.mxu0 0.0
    %406 = vmatprep.mubr.f32.mxu0 0.0
    %407 = vmatmul.mubr.f32.gmra.mxu0 %v340
    %v408 = vpop.f32.mrf.mxu0
    %v409 = vadd.f32 %v331, %v408
    %v410 = vpop.f32.mrf.mxu0
    %v411 = vadd.f32 %v335, %v410
    %412 = vdwg.mxu0
    %v413 = vmax.f32 %v409, 0.0
    %v414 = vmax.f32 %v411, 0.0
    %v415 = vld [vmem:[%s8] sm:$0xff]
    %v416 = vld [vmem:[%s8 + $0x8] sm:$0xff]
    %v417 = vld [vmem:[%s8 + $0x10] sm:$0xff]
    %v418 = vld [vmem:[%s8 + $0x18] sm:$0xff]
    %v419 = vld [vmem:[%s8 + $0x20] sm:$0xff]
    %v420 = vld [vmem:[%s8 + $0x28] sm:$0xff]
    %v421 = vld [vmem:[%s8 + $0x30] sm:$0xff]
    %v422 = vld [vmem:[%s8 + $0x38] sm:$0xff]
    %v423 = vld [vmem:[%s8 + $0x40] sm:$0xff]
    %v424 = vld [vmem:[%s8 + $0x48] sm:$0xff]
    %v425 = vld [vmem:[%s8 + $0x50] sm:$0xff]
    %v426 = vld [vmem:[%s8 + $0x58] sm:$0xff]
    %v427 = vld [vmem:[%s8 + $0x60] sm:$0xff]
    %v428 = vld [vmem:[%s8 + $0x68] sm:$0xff]
    %v429 = vld [vmem:[%s8 + $0x70] sm:$0xff]
    %v430 = vld [vmem:[%s8 + $0x78] sm:$0xff]
    %v431 = vld [vmem:[%s8 + $0x80] sm:$0xff]
    %v432 = vld [vmem:[%s8 + $0x88] sm:$0xff]
    %v433 = vld [vmem:[%s8 + $0x90] sm:$0xff]
    %v434 = vld [vmem:[%s8 + $0x98] sm:$0xff]
    %v435 = vld [vmem:[%s8 + $0xa0] sm:$0xff]
    %v436 = vld [vmem:[%s8 + $0xa8] sm:$0xff]
    %v437 = vld [vmem:[%s8 + $0xb0] sm:$0xff]
    %v438 = vld [vmem:[%s8 + $0xb8] sm:$0xff]
    %v439 = vld [vmem:[%s8 + $0xc0] sm:$0xff]
    %v440 = vld [vmem:[#allocation12] sm:$0x1]
    %v442 = vlaneseq
    %v443 = vshrl.u32 %v442, 7
    %v444 = vsub.s32 0, %v443
    %v445 = vrot.slane %v440, %v444
    %vm447 = vcmask 588800
    %v449 = vsel %vm447, %v414, 0
    %451 = vmatprep.subr.mxu0 0.0
    %452 = vmatpush1.msra.mxu0 %v430
    %453 = vmatprep.subr.mxu0 0.0
    %454 = vmatpush1.msra.mxu0 %v429
    %455 = vmatprep.subr.mxu0 0.0
    %456 = vmatpush1.msra.mxu0 %v428
    %457 = vmatprep.subr.mxu0 0.0
    %458 = vmatpush1.msra.mxu0 %v427
    %459 = vmatprep.subr.mxu0 0.0
    %460 = vmatpush1.msra.mxu0 %v426
    %461 = vmatprep.subr.mxu0 0.0
    %462 = vmatpush1.msra.mxu0 %v425
    %463 = vmatprep.subr.mxu0 0.0
    %464 = vmatpush1.msra.mxu0 %v424
    %465 = vmatprep.subr.mxu0 0.0
    %466 = vmatpush1.msra.mxu0 %v423
    %467 = vmatprep.subr.mxu0 0.0
    %468 = vmatpush1.msra.mxu0 %v422
    %469 = vmatprep.subr.mxu0 0.0
    %470 = vmatpush1.msra.mxu0 %v421
    %471 = vmatprep.subr.mxu0 0.0
    %472 = vmatpush1.msra.mxu0 %v420
    %473 = vmatprep.subr.mxu0 0.0
    %474 = vmatpush1.msra.mxu0 %v419
    %475 = vmatprep.subr.mxu0 0.0
    %476 = vmatpush1.msra.mxu0 %v418
    %477 = vmatprep.subr.mxu0 0.0
    %478 = vmatpush1.msra.mxu0 %v417
    %479 = vmatprep.subr.mxu0 0.0
    %480 = vmatpush1.msra.mxu0 %v416
    %481 = vmatprep.subr.mxu0 0.0
    %482 = vmatpush1.msra.mxu0 %v415
    %483 = vmatprep.subr.mxu0 0.0
    %484 = vmatpush2.msra.mxu0 0.0
    %485 = vmatprep.subr.mxu0 0.0
    %486 = vmatpush2.msra.mxu0 0.0
    %487 = vmatprep.subr.mxu0 0.0
    %488 = vmatpush2.msra.mxu0 0.0
    %489 = vmatprep.subr.mxu0 0.0
    %490 = vmatpush2.msra.mxu0 0.0
    %491 = vmatprep.subr.mxu0 0.0
    %492 = vmatpush2.msra.mxu0 0.0
    %493 = vmatprep.subr.mxu0 0.0
    %494 = vmatpush2.msra.mxu0 0.0
    %495 = vmatprep.subr.mxu0 0.0
    %496 = vmatpush2.msra.mxu0 0.0
    %497 = vmatprep.subr.mxu0 0.0
    %498 = vmatpush2.msra.mxu0 %v439
    %499 = vmatprep.subr.mxu0 0.0
    %500 = vmatpush2.msra.mxu0 %v438
    %501 = vmatprep.subr.mxu0 0.0
    %502 = vmatpush2.msra.mxu0 %v437
    %503 = vmatprep.subr.mxu0 0.0
    %504 = vmatpush2.msra.mxu0 %v436
    %505 = vmatprep.subr.mxu0 0.0
    %506 = vmatpush2.msra.mxu0 %v435
    %507 = vmatprep.subr.mxu0 0.0
    %508 = vmatpush2.msra.mxu0 %v434
    %509 = vmatprep.subr.mxu0 0.0
    %510 = vmatpush2.msra.mxu0 %v433
    %511 = vmatprep.subr.mxu0 0.0
    %512 = vmatpush2.msra.mxu0 %v432
    %513 = vmatprep.subr.mxu0 0.0
    %514 = vmatpush2.msra.mxu0 %v431
    %515 = vmatprep.mubr.f32.mxu0 %v449
    %516 = vmatmul.mubr.f32.gmra.mxu0 %v413
    %v517 = vpop.f32.mrf.mxu0
    %v518 = vadd.f32 %v445, %v517
    %v519 = vpop.f32.mrf.mxu0
    %520 = vdwg.mxu0
    %v521 = vmax.f32 %v518, 0.0
    %v522 = vld [vmem:[%s10] sm:$0xff]
    %v523 = vld [vmem:[%s10 + $0x8] sm:$0xff]
    %v524 = vld [vmem:[%s10 + $0x10] sm:$0xff]
    %v525 = vld [vmem:[%s10 + $0x18] sm:$0xff]
    %v526 = vld [vmem:[%s10 + $0x20] sm:$0xff]
    %v527 = vld [vmem:[%s10 + $0x28] sm:$0xff]
    %v528 = vld [vmem:[%s10 + $0x30] sm:$0xff]
    %v529 = vld [vmem:[%s10 + $0x38] sm:$0xff]
    %v530 = vld [vmem:[%s10 + $0x40] sm:$0xff]
    %v531 = vld [vmem:[%s10 + $0x48] sm:$0xff]
    %v532 = vld [vmem:[%s10 + $0x50] sm:$0xff]
    %v533 = vld [vmem:[%s10 + $0x58] sm:$0xff]
    %v534 = vld [vmem:[%s10 + $0x60] sm:$0xf]
    %v535 = vld [vmem:[#allocation14] sm:$0x1]
    %v537 = vlaneseq
    %v538 = vshrl.u32 %v537, 7
    %v539 = vsub.s32 0, %v538
    %v540 = vrot.slane %v535, %v539
    %vm542 = vcmask 818176
    %v544 = vsel %vm542, %v521, 0
    %vm546 = vcmask 1043456
    %v548 = vsel %vm546, %v534, 0
    %550 = vmatprep.subr.mxu0 0.0
    %551 = vmatpush1.msra.mxu0 0.0
    %552 = vmatprep.subr.mxu0 0.0
    %553 = vmatpush1.msra.mxu0 0.0
    %554 = vmatprep.subr.mxu0 0.0
    %555 = vmatpush1.msra.mxu0 0.0
    %556 = vmatprep.subr.mxu0 0.0
    %557 = vmatpush1.msra.mxu0 %v548
    %558 = vmatprep.subr.mxu0 0.0
    %559 = vmatpush1.msra.mxu0 %v533
    %560 = vmatprep.subr.mxu0 0.0
    %561 = vmatpush1.msra.mxu0 %v532
    %562 = vmatprep.subr.mxu0 0.0
    %563 = vmatpush1.msra.mxu0 %v531
    %564 = vmatprep.subr.mxu0 0.0
    %565 = vmatpush1.msra.mxu0 %v530
    %566 = vmatprep.subr.mxu0 0.0
    %567 = vmatpush1.msra.mxu0 %v529
    %568 = vmatprep.subr.mxu0 0.0
    %569 = vmatpush1.msra.mxu0 %v528
    %570 = vmatprep.subr.mxu0 0.0
    %571 = vmatpush1.msra.mxu0 %v527
    %572 = vmatprep.subr.mxu0 0.0
    %573 = vmatpush1.msra.mxu0 %v526
    %574 = vmatprep.subr.mxu0 0.0
    %575 = vmatpush1.msra.mxu0 %v525
    %576 = vmatprep.subr.mxu0 0.0
    %577 = vmatpush1.msra.mxu0 %v524
    %578 = vmatprep.subr.mxu0 0.0
    %579 = vmatpush1.msra.mxu0 %v523
    %580 = vmatprep.subr.mxu0 0.0
    %581 = vmatpush1.msra.mxu0 %v522
    %582 = vmatprep.subr.mxu0 0.0
    %583 = vmatpush2.msra.mxu0 0.0
    %584 = vmatprep.subr.mxu0 0.0
    %585 = vmatpush2.msra.mxu0 0.0
    %586 = vmatprep.subr.mxu0 0.0
    %587 = vmatpush2.msra.mxu0 0.0
    %588 = vmatprep.subr.mxu0 0.0
    %589 = vmatpush2.msra.mxu0 0.0
    %590 = vmatprep.subr.mxu0 0.0
    %591 = vmatpush2.msra.mxu0 0.0
    %592 = vmatprep.subr.mxu0 0.0
    %593 = vmatpush2.msra.mxu0 0.0
    %594 = vmatprep.subr.mxu0 0.0
    %595 = vmatpush2.msra.mxu0 0.0
    %596 = vmatprep.subr.mxu0 0.0
    %597 = vmatpush2.msra.mxu0 0.0
    %598 = vmatprep.subr.mxu0 0.0
    %599 = vmatpush2.msra.mxu0 0.0
    %600 = vmatprep.subr.mxu0 0.0
    %601 = vmatpush2.msra.mxu0 0.0
    %602 = vmatprep.subr.mxu0 0.0
    %603 = vmatpush2.msra.mxu0 0.0
    %604 = vmatprep.subr.mxu0 0.0
    %605 = vmatpush2.msra.mxu0 0.0
    %606 = vmatprep.subr.mxu0 0.0
    %607 = vmatpush2.msra.mxu0 0.0
    %608 = vmatprep.subr.mxu0 0.0
    %609 = vmatpush2.msra.mxu0 0.0
    %610 = vmatprep.subr.mxu0 0.0
    %611 = vmatpush2.msra.mxu0 0.0
    %612 = vmatprep.subr.mxu0 0.0
    %613 = vmatpush2.msra.mxu0 0.0
    %614 = vmatprep.mubr.f32.mxu0 0.0
    %615 = vmatmul.mubr.f32.gmra.mxu0 %v544
    %v616 = vpop.f32.mrf.mxu0
    %v617 = vadd.f32 %v540, %v616
    %v618 = vpop.f32.mrf.mxu0
    %619 = vdwg.mxu0
    %v620 = vmax.f32 %v617, 0.0
    %v621 = vld [vmem:[%s1] sm:$0xff]
    %v622 = vld [vmem:[%s1 + $0x8] sm:$0xff]
    %v623 = vld [vmem:[#allocation15] sm:$0xff]
    %v624 = vld [vmem:[#allocation17] sm:$0x1]
    %v626 = vlaneseq
    %v627 = vshrl.u32 %v626, 7
    %v628 = vsub.s32 0, %v627
    %v629 = vrot.slane %v624, %v628
    %vm631 = vcmask 64512
    %v633 = vsel %vm631, %v621, 0
    %v636 = vsel %vm631, %v622, 0
    %638 = vmatprep.subr.mxu0 0.0
    %639 = vmatpush1.msra.mxu0 0.0
    %640 = vmatprep.subr.mxu0 0.0
    %641 = vmatpush1.msra.mxu0 0.0
    %642 = vmatprep.subr.mxu0 0.0
    %643 = vmatpush1.msra.mxu0 0.0
    %644 = vmatprep.subr.mxu0 0.0
    %645 = vmatpush1.msra.mxu0 0.0
    %646 = vmatprep.subr.mxu0 0.0
    %647 = vmatpush1.msra.mxu0 0.0
    %648 = vmatprep.subr.mxu0 0.0
    %649 = vmatpush1.msra.mxu0 0.0
    %650 = vmatprep.subr.mxu0 0.0
    %651 = vmatpush1.msra.mxu0 0.0
    %652 = vmatprep.subr.mxu0 0.0
    %653 = vmatpush1.msra.mxu0 0.0
    %654 = vmatprep.subr.mxu0 0.0
    %655 = vmatpush1.msra.mxu0 0.0
    %656 = vmatprep.subr.mxu0 0.0
    %657 = vmatpush1.msra.mxu0 0.0
    %658 = vmatprep.subr.mxu0 0.0
    %659 = vmatpush1.msra.mxu0 0.0
    %660 = vmatprep.subr.mxu0 0.0
    %661 = vmatpush1.msra.mxu0 0.0
    %662 = vmatprep.subr.mxu0 0.0
    %663 = vmatpush1.msra.mxu0 0.0
    %664 = vmatprep.subr.mxu0 0.0
    %665 = vmatpush1.msra.mxu0 0.0
    %666 = vmatprep.subr.mxu0 0.0
    %667 = vmatpush1.msra.mxu0 0.0
    %668 = vmatprep.subr.mxu0 0.0
    %669 = vmatpush1.msra.mxu0 %v623
    %670 = vmatprep.subr.mxu0 0.0
    %671 = vmatpush2.msra.mxu0 0.0
    %672 = vmatprep.subr.mxu0 0.0
    %673 = vmatpush2.msra.mxu0 0.0
    %674 = vmatprep.subr.mxu0 0.0
    %675 = vmatpush2.msra.mxu0 0.0
    %676 = vmatprep.subr.mxu0 0.0
    %677 = vmatpush2.msra.mxu0 0.0
    %678 = vmatprep.subr.mxu0 0.0
    %679 = vmatpush2.msra.mxu0 0.0
    %680 = vmatprep.subr.mxu0 0.0
    %681 = vmatpush2.msra.mxu0 0.0
    %682 = vmatprep.subr.mxu0 0.0
    %683 = vmatpush2.msra.mxu0 0.0
    %684 = vmatprep.subr.mxu0 0.0
    %685 = vmatpush2.msra.mxu0 0.0
    %686 = vmatprep.subr.mxu0 0.0
    %687 = vmatpush2.msra.mxu0 0.0
    %688 = vmatprep.subr.mxu0 0.0
    %689 = vmatpush2.msra.mxu0 0.0
    %690 = vmatprep.subr.mxu0 0.0
    %691 = vmatpush2.msra.mxu0 0.0
    %692 = vmatprep.subr.mxu0 0.0
    %693 = vmatpush2.msra.mxu0 0.0
    %694 = vmatprep.subr.mxu0 0.0
    %695 = vmatpush2.msra.mxu0 0.0
    %696 = vmatprep.subr.mxu0 0.0
    %697 = vmatpush2.msra.mxu0 0.0
    %698 = vmatprep.subr.mxu0 0.0
    %699 = vmatpush2.msra.mxu0 0.0
    %700 = vmatprep.subr.mxu0 0.0
    %701 = vmatpush2.msra.mxu0 0.0
    %702 = vmatprep.mubr.f32.mxu0 0.0
    %703 = vmatmul.mubr.f32.gmra.mxu0 %v633
    %v704 = vpop.f32.mrf.mxu0
    %v705 = vadd.f32 %v629, %v704
    %v706 = vpop.f32.mrf.mxu0
    %707 = vmatprep.mubr.f32.mxu0 0.0
    %708 = vmatmul.mubr.f32.gmra.mxu0 %v636
    %v709 = vpop.f32.mrf.mxu0
    %v710 = vadd.f32 %v629, %v709
    %v711 = vpop.f32.mrf.mxu0
    %712 = vdwg.mxu0
    %v713 = vld [vmem:[%s0] sm:$0xff]
    %v714 = vld [vmem:[%s0 + $0x8] sm:$0xff]
    %v715 = vld [vmem:[#allocation18] sm:$0xff]
    %v716 = vld [vmem:[#allocation18 + $0x8] sm:$0xff]
    %v717 = vld [vmem:[#allocation18 + $0x10] sm:$0xff]
    %v718 = vld [vmem:[#allocation18 + $0x18] sm:$0xff]
    %v719 = vld [vmem:[#allocation20] sm:$0x1]
    %v721 = vlaneseq
    %v722 = vshrl.u32 %v721, 7
    %v723 = vsub.s32 0, %v722
    %v724 = vrot.slane %v719, %v723
    %vm726 = vcmask 261120
    %v728 = vsel %vm726, %v713, 0
    %v731 = vsel %vm726, %v714, 0
    %733 = vmatprep.subr.mxu0 0.0
    %734 = vmatpush1.msra.mxu0 0.0
    %735 = vmatprep.subr.mxu0 0.0
    %736 = vmatpush1.msra.mxu0 0.0
    %737 = vmatprep.subr.mxu0 0.0
    %738 = vmatpush1.msra.mxu0 0.0
    %739 = vmatprep.subr.mxu0 0.0
    %740 = vmatpush1.msra.mxu0 0.0
    %741 = vmatprep.subr.mxu0 0.0
    %742 = vmatpush1.msra.mxu0 0.0
    %743 = vmatprep.subr.mxu0 0.0
    %744 = vmatpush1.msra.mxu0 0.0
    %745 = vmatprep.subr.mxu0 0.0
    %746 = vmatpush1.msra.mxu0 0.0
    %747 = vmatprep.subr.mxu0 0.0
    %748 = vmatpush1.msra.mxu0 0.0
    %749 = vmatprep.subr.mxu0 0.0
    %750 = vmatpush1.msra.mxu0 0.0
    %751 = vmatprep.subr.mxu0 0.0
    %752 = vmatpush1.msra.mxu0 0.0
    %753 = vmatprep.subr.mxu0 0.0
    %754 = vmatpush1.msra.mxu0 0.0
    %755 = vmatprep.subr.mxu0 0.0
    %756 = vmatpush1.msra.mxu0 0.0
    %757 = vmatprep.subr.mxu0 0.0
    %758 = vmatpush1.msra.mxu0 %v718
    %759 = vmatprep.subr.mxu0 0.0
    %760 = vmatpush1.msra.mxu0 %v717
    %761 = vmatprep.subr.mxu0 0.0
    %762 = vmatpush1.msra.mxu0 %v716
    %763 = vmatprep.subr.mxu0 0.0
    %764 = vmatpush1.msra.mxu0 %v715
    %765 = vmatprep.subr.mxu0 0.0
    %766 = vmatpush2.msra.mxu0 0.0
    %767 = vmatprep.subr.mxu0 0.0
    %768 = vmatpush2.msra.mxu0 0.0
    %769 = vmatprep.subr.mxu0 0.0
    %770 = vmatpush2.msra.mxu0 0.0
    %771 = vmatprep.subr.mxu0 0.0
    %772 = vmatpush2.msra.mxu0 0.0
    %773 = vmatprep.subr.mxu0 0.0
    %774 = vmatpush2.msra.mxu0 0.0
    %775 = vmatprep.subr.mxu0 0.0
    %776 = vmatpush2.msra.mxu0 0.0
    %777 = vmatprep.subr.mxu0 0.0
    %778 = vmatpush2.msra.mxu0 0.0
    %779 = vmatprep.subr.mxu0 0.0
    %780 = vmatpush2.msra.mxu0 0.0
    %781 = vmatprep.subr.mxu0 0.0
    %782 = vmatpush2.msra.mxu0 0.0
    %783 = vmatprep.subr.mxu0 0.0
    %784 = vmatpush2.msra.mxu0 0.0
    %785 = vmatprep.subr.mxu0 0.0
    %786 = vmatpush2.msra.mxu0 0.0
    %787 = vmatprep.subr.mxu0 0.0
    %788 = vmatpush2.msra.mxu0 0.0
    %789 = vmatprep.subr.mxu0 0.0
    %790 = vmatpush2.msra.mxu0 0.0
    %791 = vmatprep.subr.mxu0 0.0
    %792 = vmatpush2.msra.mxu0 0.0
    %793 = vmatprep.subr.mxu0 0.0
    %794 = vmatpush2.msra.mxu0 0.0
    %795 = vmatprep.subr.mxu0 0.0
    %796 = vmatpush2.msra.mxu0 0.0
    %797 = vmatprep.mubr.f32.mxu0 0.0
    %798 = vmatmul.mubr.f32.gmra.mxu0 %v728
    %v799 = vpop.f32.mrf.mxu0
    %v800 = vadd.f32 %v724, %v799
    %v801 = vpop.f32.mrf.mxu0
    %802 = vmatprep.mubr.f32.mxu0 0.0
    %803 = vmatmul.mubr.f32.gmra.mxu0 %v731
    %v804 = vpop.f32.mrf.mxu0
    %v805 = vadd.f32 %v724, %v804
    %v806 = vpop.f32.mrf.mxu0
    %807 = vdwg.mxu0
    %v808 = vld [vmem:[#allocation8] sm:$0x1]
    %v809 = vld [vmem:[#allocation8 + $0x1] sm:$0x1]
    %v810 = vld [vmem:[#allocation8 + $0x2] sm:$0x1]
    %v811 = vld [vmem:[#allocation8 + $0x3] sm:$0x1]
    %v816 = vlaneseq
    %v817 = vshrl.u32 %v816, 7
    %v818 = vsub.s32 0, %v817
    %v819 = vrot.slane %v808, %v818
    %v820 = vlaneseq
    %v821 = vshrl.u32 %v820, 7
    %v822 = vsub.s32 0, %v821
    %v823 = vrot.slane %v809, %v822
    %v824 = vlaneseq
    %v825 = vshrl.u32 %v824, 7
    %v826 = vsub.s32 0, %v825
    %v827 = vrot.slane %v810, %v826
    %v828 = vlaneseq
    %v829 = vshrl.u32 %v828, 7
    %v830 = vsub.s32 0, %v829
    %v831 = vrot.slane %v811, %v830
    %v836 = vmul.f32 %v800, %v819
    %v837 = vmul.f32 %v800, %v823
    %v838 = vmul.f32 %v800, %v827
    %v839 = vmul.f32 %v800, %v831
    %v840 = vmul.f32 %v805, %v819
    %v841 = vmul.f32 %v805, %v823
    %v842 = vmul.f32 %v805, %v827
    %v843 = vmul.f32 %v805, %v831
    %844 = vrot.lane.b32.xlu0 %v819, 32
    %v845 = vpop.permute.xlu0 %844
    %846 = vrot.lane.b32.xlu0 %v823, 32
    %v847 = vpop.permute.xlu0 %846
    %848 = vrot.lane.b32.xlu0 %v827, 32
    %v849 = vpop.permute.xlu0 %848
    %850 = vrot.lane.b32.xlu0 %v831, 32
    %v851 = vpop.permute.xlu0 %850
    %v856 = vmul.f32 %v800, %v845
    %v857 = vmul.f32 %v800, %v847
    %v858 = vmul.f32 %v800, %v849
    %v859 = vmul.f32 %v800, %v851
    %v860 = vmul.f32 %v805, %v845
    %v861 = vmul.f32 %v805, %v847
    %v862 = vmul.f32 %v805, %v849
    %v863 = vmul.f32 %v805, %v851
    %v865 = vsel %vm726, %v705, 0
    %v868 = vsel %vm726, %v710, 0
    %v871 = vsel %vm726, %v836, 0
    %873 = vmatprep.subr.mxu0 0.0
    %874 = vmatpush1.xpose.msra.mxu0 0.0
    %875 = vmatprep.subr.mxu0 0.0
    %876 = vmatpush1.xpose.msra.mxu0 0.0
    %877 = vmatprep.subr.mxu0 0.0
    %878 = vmatpush1.xpose.msra.mxu0 0.0
    %879 = vmatprep.subr.mxu0 0.0
    %880 = vmatpush1.xpose.msra.mxu0 0.0
    %881 = vmatprep.subr.mxu0 0.0
    %882 = vmatpush1.xpose.msra.mxu0 0.0
    %883 = vmatprep.subr.mxu0 0.0
    %884 = vmatpush1.xpose.msra.mxu0 0.0
    %885 = vmatprep.subr.mxu0 0.0
    %886 = vmatpush1.xpose.msra.mxu0 0.0
    %887 = vmatprep.subr.mxu0 0.0
    %888 = vmatpush1.xpose.msra.mxu0 0.0
    %889 = vmatprep.subr.mxu0 0.0
    %890 = vmatpush1.xpose.msra.mxu0 0.0
    %891 = vmatprep.subr.mxu0 0.0
    %892 = vmatpush1.xpose.msra.mxu0 0.0
    %893 = vmatprep.subr.mxu0 0.0
    %894 = vmatpush1.xpose.msra.mxu0 0.0
    %895 = vmatprep.subr.mxu0 0.0
    %896 = vmatpush1.xpose.msra.mxu0 0.0
    %897 = vmatprep.subr.mxu0 0.0
    %898 = vmatpush1.xpose.msra.mxu0 0.0
    %899 = vmatprep.subr.mxu0 0.0
    %900 = vmatpush1.xpose.msra.mxu0 0.0
    %901 = vmatprep.subr.mxu0 0.0
    %902 = vmatpush1.xpose.msra.mxu0 0.0
    %903 = vmatprep.subr.mxu0 0.0
    %904 = vmatpush1.xpose.msra.mxu0 %v871
    %905 = vmatprep.subr.mxu0 0.0
    %906 = vmatpush2.xpose.msra.mxu0 0.0
    %907 = vmatprep.subr.mxu0 0.0
    %908 = vmatpush2.xpose.msra.mxu0 0.0
    %909 = vmatprep.subr.mxu0 0.0
    %910 = vmatpush2.xpose.msra.mxu0 0.0
    %911 = vmatprep.subr.mxu0 0.0
    %912 = vmatpush2.xpose.msra.mxu0 0.0
    %913 = vmatprep.subr.mxu0 0.0
    %914 = vmatpush2.xpose.msra.mxu0 0.0
    %915 = vmatprep.subr.mxu0 0.0
    %916 = vmatpush2.xpose.msra.mxu0 0.0
    %917 = vmatprep.subr.mxu0 0.0
    %918 = vmatpush2.xpose.msra.mxu0 0.0
    %919 = vmatprep.subr.mxu0 0.0
    %920 = vmatpush2.xpose.msra.mxu0 0.0
    %921 = vmatprep.subr.mxu0 0.0
    %922 = vmatpush2.xpose.msra.mxu0 0.0
    %923 = vmatprep.subr.mxu0 0.0
    %924 = vmatpush2.xpose.msra.mxu0 0.0
    %925 = vmatprep.subr.mxu0 0.0
    %926 = vmatpush2.xpose.msra.mxu0 0.0
    %927 = vmatprep.subr.mxu0 0.0
    %928 = vmatpush2.xpose.msra.mxu0 0.0
    %929 = vmatprep.subr.mxu0 0.0
    %930 = vmatpush2.xpose.msra.mxu0 0.0
    %931 = vmatprep.subr.mxu0 0.0
    %932 = vmatpush2.xpose.msra.mxu0 0.0
    %933 = vmatprep.subr.mxu0 0.0
    %934 = vmatpush2.xpose.msra.mxu0 0.0
    %935 = vmatprep.subr.mxu0 0.0
    %936 = vmatpush2.xpose.msra.mxu0 0.0
    %937 = vmatprep.mubr.f32.mxu0 0.0
    %938 = vmatmul.mubr.f32.gmra.mxu0 %v865
    %v939 = vpop.f32.mrf.mxu0
    %v940 = vadd.f32 0.0, %v939
    %v941 = vpop.f32.mrf.mxu0
    %942 = vmatprep.mubr.f32.mxu0 0.0
    %943 = vmatmul.mubr.f32.gmra.mxu0 %v868
    %v944 = vpop.f32.mrf.mxu0
    %v945 = vadd.f32 0.0, %v944
    %v946 = vpop.f32.mrf.mxu0
    %947 = vdwg.mxu0
    %v949 = vsel %vm726, %v837, 0
    %951 = vmatprep.subr.mxu0 0.0
    %952 = vmatpush1.xpose.msra.mxu0 0.0
    %953 = vmatprep.subr.mxu0 0.0
    %954 = vmatpush1.xpose.msra.mxu0 0.0
    %955 = vmatprep.subr.mxu0 0.0
    %956 = vmatpush1.xpose.msra.mxu0 0.0
    %957 = vmatprep.subr.mxu0 0.0
    %958 = vmatpush1.xpose.msra.mxu0 0.0
    %959 = vmatprep.subr.mxu0 0.0
    %960 = vmatpush1.xpose.msra.mxu0 0.0
    %961 = vmatprep.subr.mxu0 0.0
    %962 = vmatpush1.xpose.msra.mxu0 0.0
    %963 = vmatprep.subr.mxu0 0.0
    %964 = vmatpush1.xpose.msra.mxu0 0.0
    %965 = vmatprep.subr.mxu0 0.0
    %966 = vmatpush1.xpose.msra.mxu0 0.0
    %967 = vmatprep.subr.mxu0 0.0
    %968 = vmatpush1.xpose.msra.mxu0 0.0
    %969 = vmatprep.subr.mxu0 0.0
    %970 = vmatpush1.xpose.msra.mxu0 0.0
    %971 = vmatprep.subr.mxu0 0.0
    %972 = vmatpush1.xpose.msra.mxu0 0.0
    %973 = vmatprep.subr.mxu0 0.0
    %974 = vmatpush1.xpose.msra.mxu0 0.0
    %975 = vmatprep.subr.mxu0 0.0
    %976 = vmatpush1.xpose.msra.mxu0 0.0
    %977 = vmatprep.subr.mxu0 0.0
    %978 = vmatpush1.xpose.msra.mxu0 0.0
    %979 = vmatprep.subr.mxu0 0.0
    %980 = vmatpush1.xpose.msra.mxu0 0.0
    %981 = vmatprep.subr.mxu0 0.0
    %982 = vmatpush1.xpose.msra.mxu0 %v949
    %983 = vmatprep.subr.mxu0 0.0
    %984 = vmatpush2.xpose.msra.mxu0 0.0
    %985 = vmatprep.subr.mxu0 0.0
    %986 = vmatpush2.xpose.msra.mxu0 0.0
    %987 = vmatprep.subr.mxu0 0.0
    %988 = vmatpush2.xpose.msra.mxu0 0.0
    %989 = vmatprep.subr.mxu0 0.0
    %990 = vmatpush2.xpose.msra.mxu0 0.0
    %991 = vmatprep.subr.mxu0 0.0
    %992 = vmatpush2.xpose.msra.mxu0 0.0
    %993 = vmatprep.subr.mxu0 0.0
    %994 = vmatpush2.xpose.msra.mxu0 0.0
    %995 = vmatprep.subr.mxu0 0.0
    %996 = vmatpush2.xpose.msra.mxu0 0.0
    %997 = vmatprep.subr.mxu0 0.0
    %998 = vmatpush2.xpose.msra.mxu0 0.0
    %999 = vmatprep.subr.mxu0 0.0
    %1000 = vmatpush2.xpose.msra.mxu0 0.0
    %1001 = vmatprep.subr.mxu0 0.0
    %1002 = vmatpush2.xpose.msra.mxu0 0.0
    %1003 = vmatprep.subr.mxu0 0.0
    %1004 = vmatpush2.xpose.msra.mxu0 0.0
    %1005 = vmatprep.subr.mxu0 0.0
    %1006 = vmatpush2.xpose.msra.mxu0 0.0
    %1007 = vmatprep.subr.mxu0 0.0
    %1008 = vmatpush2.xpose.msra.mxu0 0.0
    %1009 = vmatprep.subr.mxu0 0.0
    %1010 = vmatpush2.xpose.msra.mxu0 0.0
    %1011 = vmatprep.subr.mxu0 0.0
    %1012 = vmatpush2.xpose.msra.mxu0 0.0
    %1013 = vmatprep.subr.mxu0 0.0
    %1014 = vmatpush2.xpose.msra.mxu0 0.0
    %1015 = vmatprep.mubr.f32.mxu0 0.0
    %1016 = vmatmul.mubr.f32.gmra.mxu0 %v865
    %v1017 = vpop.f32.mrf.mxu0
    %v1018 = vadd.f32 0.0, %v1017
    %v1019 = vpop.f32.mrf.mxu0
    %1020 = vmatprep.mubr.f32.mxu0 0.0
    %1021 = vmatmul.mubr.f32.gmra.mxu0 %v868
    %v1022 = vpop.f32.mrf.mxu0
    %v1023 = vadd.f32 0.0, %v1022
    %v1024 = vpop.f32.mrf.mxu0
    %1025 = vdwg.mxu0
    %v1027 = vsel %vm726, %v838, 0
    %1029 = vmatprep.subr.mxu0 0.0
    %1030 = vmatpush1.xpose.msra.mxu0 0.0
    %1031 = vmatprep.subr.mxu0 0.0
    %1032 = vmatpush1.xpose.msra.mxu0 0.0
    %1033 = vmatprep.subr.mxu0 0.0
    %1034 = vmatpush1.xpose.msra.mxu0 0.0
    %1035 = vmatprep.subr.mxu0 0.0
    %1036 = vmatpush1.xpose.msra.mxu0 0.0
    %1037 = vmatprep.subr.mxu0 0.0
    %1038 = vmatpush1.xpose.msra.mxu0 0.0
    %1039 = vmatprep.subr.mxu0 0.0
    %1040 = vmatpush1.xpose.msra.mxu0 0.0
    %1041 = vmatprep.subr.mxu0 0.0
    %1042 = vmatpush1.xpose.msra.mxu0 0.0
    %1043 = vmatprep.subr.mxu0 0.0
    %1044 = vmatpush1.xpose.msra.mxu0 0.0
    %1045 = vmatprep.subr.mxu0 0.0
    %1046 = vmatpush1.xpose.msra.mxu0 0.0
    %1047 = vmatprep.subr.mxu0 0.0
    %1048 = vmatpush1.xpose.msra.mxu0 0.0
    %1049 = vmatprep.subr.mxu0 0.0
    %1050 = vmatpush1.xpose.msra.mxu0 0.0
    %1051 = vmatprep.subr.mxu0 0.0
    %1052 = vmatpush1.xpose.msra.mxu0 0.0
    %1053 = vmatprep.subr.mxu0 0.0
    %1054 = vmatpush1.xpose.msra.mxu0 0.0
    %1055 = vmatprep.subr.mxu0 0.0
    %1056 = vmatpush1.xpose.msra.mxu0 0.0
    %1057 = vmatprep.subr.mxu0 0.0
    %1058 = vmatpush1.xpose.msra.mxu0 0.0
    %1059 = vmatprep.subr.mxu0 0.0
    %1060 = vmatpush1.xpose.msra.mxu0 %v1027
    %1061 = vmatprep.subr.mxu0 0.0
    %1062 = vmatpush2.xpose.msra.mxu0 0.0
    %1063 = vmatprep.subr.mxu0 0.0
    %1064 = vmatpush2.xpose.msra.mxu0 0.0
    %1065 = vmatprep.subr.mxu0 0.0
    %1066 = vmatpush2.xpose.msra.mxu0 0.0
    %1067 = vmatprep.subr.mxu0 0.0
    %1068 = vmatpush2.xpose.msra.mxu0 0.0
    %1069 = vmatprep.subr.mxu0 0.0
    %1070 = vmatpush2.xpose.msra.mxu0 0.0
    %1071 = vmatprep.subr.mxu0 0.0
    %1072 = vmatpush2.xpose.msra.mxu0 0.0
    %1073 = vmatprep.subr.mxu0 0.0
    %1074 = vmatpush2.xpose.msra.mxu0 0.0
    %1075 = vmatprep.subr.mxu0 0.0
    %1076 = vmatpush2.xpose.msra.mxu0 0.0
    %1077 = vmatprep.subr.mxu0 0.0
    %1078 = vmatpush2.xpose.msra.mxu0 0.0
    %1079 = vmatprep.subr.mxu0 0.0
    %1080 = vmatpush2.xpose.msra.mxu0 0.0
    %1081 = vmatprep.subr.mxu0 0.0
    %1082 = vmatpush2.xpose.msra.mxu0 0.0
    %1083 = vmatprep.subr.mxu0 0.0
    %1084 = vmatpush2.xpose.msra.mxu0 0.0
    %1085 = vmatprep.subr.mxu0 0.0
    %1086 = vmatpush2.xpose.msra.mxu0 0.0
    %1087 = vmatprep.subr.mxu0 0.0
    %1088 = vmatpush2.xpose.msra.mxu0 0.0
    %1089 = vmatprep.subr.mxu0 0.0
    %1090 = vmatpush2.xpose.msra.mxu0 0.0
    %1091 = vmatprep.subr.mxu0 0.0
    %1092 = vmatpush2.xpose.msra.mxu0 0.0
    %1093 = vmatprep.mubr.f32.mxu0 0.0
    %1094 = vmatmul.mubr.f32.gmra.mxu0 %v865
    %v1095 = vpop.f32.mrf.mxu0
    %v1096 = vadd.f32 0.0, %v1095
    %v1097 = vpop.f32.mrf.mxu0
    %1098 = vmatprep.mubr.f32.mxu0 0.0
    %1099 = vmatmul.mubr.f32.gmra.mxu0 %v868
    %v1100 = vpop.f32.mrf.mxu0
    %v1101 = vadd.f32 0.0, %v1100
    %v1102 = vpop.f32.mrf.mxu0
    %1103 = vdwg.mxu0
    %v1105 = vsel %vm726, %v839, 0
    %1107 = vmatprep.subr.mxu0 0.0
    %1108 = vmatpush1.xpose.msra.mxu0 0.0
    %1109 = vmatprep.subr.mxu0 0.0
    %1110 = vmatpush1.xpose.msra.mxu0 0.0
    %1111 = vmatprep.subr.mxu0 0.0
    %1112 = vmatpush1.xpose.msra.mxu0 0.0
    %1113 = vmatprep.subr.mxu0 0.0
    %1114 = vmatpush1.xpose.msra.mxu0 0.0
    %1115 = vmatprep.subr.mxu0 0.0
    %1116 = vmatpush1.xpose.msra.mxu0 0.0
    %1117 = vmatprep.subr.mxu0 0.0
    %1118 = vmatpush1.xpose.msra.mxu0 0.0
    %1119 = vmatprep.subr.mxu0 0.0
    %1120 = vmatpush1.xpose.msra.mxu0 0.0
    %1121 = vmatprep.subr.mxu0 0.0
    %1122 = vmatpush1.xpose.msra.mxu0 0.0
    %1123 = vmatprep.subr.mxu0 0.0
    %1124 = vmatpush1.xpose.msra.mxu0 0.0
    %1125 = vmatprep.subr.mxu0 0.0
    %1126 = vmatpush1.xpose.msra.mxu0 0.0
    %1127 = vmatprep.subr.mxu0 0.0
    %1128 = vmatpush1.xpose.msra.mxu0 0.0
    %1129 = vmatprep.subr.mxu0 0.0
    %1130 = vmatpush1.xpose.msra.mxu0 0.0
    %1131 = vmatprep.subr.mxu0 0.0
    %1132 = vmatpush1.xpose.msra.mxu0 0.0
    %1133 = vmatprep.subr.mxu0 0.0
    %1134 = vmatpush1.xpose.msra.mxu0 0.0
    %1135 = vmatprep.subr.mxu0 0.0
    %1136 = vmatpush1.xpose.msra.mxu0 0.0
    %1137 = vmatprep.subr.mxu0 0.0
    %1138 = vmatpush1.xpose.msra.mxu0 %v1105
    %1139 = vmatprep.subr.mxu0 0.0
    %1140 = vmatpush2.xpose.msra.mxu0 0.0
    %1141 = vmatprep.subr.mxu0 0.0
    %1142 = vmatpush2.xpose.msra.mxu0 0.0
    %1143 = vmatprep.subr.mxu0 0.0
    %1144 = vmatpush2.xpose.msra.mxu0 0.0
    %1145 = vmatprep.subr.mxu0 0.0
    %1146 = vmatpush2.xpose.msra.mxu0 0.0
    %1147 = vmatprep.subr.mxu0 0.0
    %1148 = vmatpush2.xpose.msra.mxu0 0.0
    %1149 = vmatprep.subr.mxu0 0.0
    %1150 = vmatpush2.xpose.msra.mxu0 0.0
    %1151 = vmatprep.subr.mxu0 0.0
    %1152 = vmatpush2.xpose.msra.mxu0 0.0
    %1153 = vmatprep.subr.mxu0 0.0
    %1154 = vmatpush2.xpose.msra.mxu0 0.0
    %1155 = vmatprep.subr.mxu0 0.0
    %1156 = vmatpush2.xpose.msra.mxu0 0.0
    %1157 = vmatprep.subr.mxu0 0.0
    %1158 = vmatpush2.xpose.msra.mxu0 0.0
    %1159 = vmatprep.subr.mxu0 0.0
    %1160 = vmatpush2.xpose.msra.mxu0 0.0
    %1161 = vmatprep.subr.mxu0 0.0
    %1162 = vmatpush2.xpose.msra.mxu0 0.0
    %1163 = vmatprep.subr.mxu0 0.0
    %1164 = vmatpush2.xpose.msra.mxu0 0.0
    %1165 = vmatprep.subr.mxu0 0.0
    %1166 = vmatpush2.xpose.msra.mxu0 0.0
    %1167 = vmatprep.subr.mxu0 0.0
    %1168 = vmatpush2.xpose.msra.mxu0 0.0
    %1169 = vmatprep.subr.mxu0 0.0
    %1170 = vmatpush2.xpose.msra.mxu0 0.0
    %1171 = vmatprep.mubr.f32.mxu0 0.0
    %1172 = vmatmul.mubr.f32.gmra.mxu0 %v865
    %v1173 = vpop.f32.mrf.mxu0
    %v1174 = vadd.f32 0.0, %v1173
    %v1175 = vpop.f32.mrf.mxu0
    %1176 = vmatprep.mubr.f32.mxu0 0.0
    %1177 = vmatmul.mubr.f32.gmra.mxu0 %v868
    %v1178 = vpop.f32.mrf.mxu0
    %v1179 = vadd.f32 0.0, %v1178
    %v1180 = vpop.f32.mrf.mxu0
    %1181 = vdwg.mxu0
    %v1183 = vsel %vm726, %v840, 0
    %1185 = vmatprep.subr.mxu0 0.0
    %1186 = vmatpush1.xpose.msra.mxu0 0.0
    %1187 = vmatprep.subr.mxu0 0.0
    %1188 = vmatpush1.xpose.msra.mxu0 0.0
    %1189 = vmatprep.subr.mxu0 0.0
    %1190 = vmatpush1.xpose.msra.mxu0 0.0
    %1191 = vmatprep.subr.mxu0 0.0
    %1192 = vmatpush1.xpose.msra.mxu0 0.0
    %1193 = vmatprep.subr.mxu0 0.0
    %1194 = vmatpush1.xpose.msra.mxu0 0.0
    %1195 = vmatprep.subr.mxu0 0.0
    %1196 = vmatpush1.xpose.msra.mxu0 0.0
    %1197 = vmatprep.subr.mxu0 0.0
    %1198 = vmatpush1.xpose.msra.mxu0 0.0
    %1199 = vmatprep.subr.mxu0 0.0
    %1200 = vmatpush1.xpose.msra.mxu0 0.0
    %1201 = vmatprep.subr.mxu0 0.0
    %1202 = vmatpush1.xpose.msra.mxu0 0.0
    %1203 = vmatprep.subr.mxu0 0.0
    %1204 = vmatpush1.xpose.msra.mxu0 0.0
    %1205 = vmatprep.subr.mxu0 0.0
    %1206 = vmatpush1.xpose.msra.mxu0 0.0
    %1207 = vmatprep.subr.mxu0 0.0
    %1208 = vmatpush1.xpose.msra.mxu0 0.0
    %1209 = vmatprep.subr.mxu0 0.0
    %1210 = vmatpush1.xpose.msra.mxu0 0.0
    %1211 = vmatprep.subr.mxu0 0.0
    %1212 = vmatpush1.xpose.msra.mxu0 0.0
    %1213 = vmatprep.subr.mxu0 0.0
    %1214 = vmatpush1.xpose.msra.mxu0 0.0
    %1215 = vmatprep.subr.mxu0 0.0
    %1216 = vmatpush1.xpose.msra.mxu0 %v1183
    %1217 = vmatprep.subr.mxu0 0.0
    %1218 = vmatpush2.xpose.msra.mxu0 0.0
    %1219 = vmatprep.subr.mxu0 0.0
    %1220 = vmatpush2.xpose.msra.mxu0 0.0
    %1221 = vmatprep.subr.mxu0 0.0
    %1222 = vmatpush2.xpose.msra.mxu0 0.0
    %1223 = vmatprep.subr.mxu0 0.0
    %1224 = vmatpush2.xpose.msra.mxu0 0.0
    %1225 = vmatprep.subr.mxu0 0.0
    %1226 = vmatpush2.xpose.msra.mxu0 0.0
    %1227 = vmatprep.subr.mxu0 0.0
    %1228 = vmatpush2.xpose.msra.mxu0 0.0
    %1229 = vmatprep.subr.mxu0 0.0
    %1230 = vmatpush2.xpose.msra.mxu0 0.0
    %1231 = vmatprep.subr.mxu0 0.0
    %1232 = vmatpush2.xpose.msra.mxu0 0.0
    %1233 = vmatprep.subr.mxu0 0.0
    %1234 = vmatpush2.xpose.msra.mxu0 0.0
    %1235 = vmatprep.subr.mxu0 0.0
    %1236 = vmatpush2.xpose.msra.mxu0 0.0
    %1237 = vmatprep.subr.mxu0 0.0
    %1238 = vmatpush2.xpose.msra.mxu0 0.0
    %1239 = vmatprep.subr.mxu0 0.0
    %1240 = vmatpush2.xpose.msra.mxu0 0.0
    %1241 = vmatprep.subr.mxu0 0.0
    %1242 = vmatpush2.xpose.msra.mxu0 0.0
    %1243 = vmatprep.subr.mxu0 0.0
    %1244 = vmatpush2.xpose.msra.mxu0 0.0
    %1245 = vmatprep.subr.mxu0 0.0
    %1246 = vmatpush2.xpose.msra.mxu0 0.0
    %1247 = vmatprep.subr.mxu0 0.0
    %1248 = vmatpush2.xpose.msra.mxu0 0.0
    %1249 = vmatprep.mubr.f32.mxu0 0.0
    %1250 = vmatmul.mubr.f32.gmra.mxu0 %v865
    %v1251 = vpop.f32.mrf.mxu0
    %v1252 = vadd.f32 0.0, %v1251
    %v1253 = vpop.f32.mrf.mxu0
    %1254 = vmatprep.mubr.f32.mxu0 0.0
    %1255 = vmatmul.mubr.f32.gmra.mxu0 %v868
    %v1256 = vpop.f32.mrf.mxu0
    %v1257 = vadd.f32 0.0, %v1256
    %v1258 = vpop.f32.mrf.mxu0
    %1259 = vdwg.mxu0
    %v1261 = vsel %vm726, %v841, 0
    %1263 = vmatprep.subr.mxu0 0.0
    %1264 = vmatpush1.xpose.msra.mxu0 0.0
    %1265 = vmatprep.subr.mxu0 0.0
    %1266 = vmatpush1.xpose.msra.mxu0 0.0
    %1267 = vmatprep.subr.mxu0 0.0
    %1268 = vmatpush1.xpose.msra.mxu0 0.0
    %1269 = vmatprep.subr.mxu0 0.0
    %1270 = vmatpush1.xpose.msra.mxu0 0.0
    %1271 = vmatprep.subr.mxu0 0.0
    %1272 = vmatpush1.xpose.msra.mxu0 0.0
    %1273 = vmatprep.subr.mxu0 0.0
    %1274 = vmatpush1.xpose.msra.mxu0 0.0
    %1275 = vmatprep.subr.mxu0 0.0
    %1276 = vmatpush1.xpose.msra.mxu0 0.0
    %1277 = vmatprep.subr.mxu0 0.0
    %1278 = vmatpush1.xpose.msra.mxu0 0.0
    %1279 = vmatprep.subr.mxu0 0.0
    %1280 = vmatpush1.xpose.msra.mxu0 0.0
    %1281 = vmatprep.subr.mxu0 0.0
    %1282 = vmatpush1.xpose.msra.mxu0 0.0
    %1283 = vmatprep.subr.mxu0 0.0
    %1284 = vmatpush1.xpose.msra.mxu0 0.0
    %1285 = vmatprep.subr.mxu0 0.0
    %1286 = vmatpush1.xpose.msra.mxu0 0.0
    %1287 = vmatprep.subr.mxu0 0.0
    %1288 = vmatpush1.xpose.msra.mxu0 0.0
    %1289 = vmatprep.subr.mxu0 0.0
    %1290 = vmatpush1.xpose.msra.mxu0 0.0
    %1291 = vmatprep.subr.mxu0 0.0
    %1292 = vmatpush1.xpose.msra.mxu0 0.0
    %1293 = vmatprep.subr.mxu0 0.0
    %1294 = vmatpush1.xpose.msra.mxu0 %v1261
    %1295 = vmatprep.subr.mxu0 0.0
    %1296 = vmatpush2.xpose.msra.mxu0 0.0
    %1297 = vmatprep.subr.mxu0 0.0
    %1298 = vmatpush2.xpose.msra.mxu0 0.0
    %1299 = vmatprep.subr.mxu0 0.0
    %1300 = vmatpush2.xpose.msra.mxu0 0.0
    %1301 = vmatprep.subr.mxu0 0.0
    %1302 = vmatpush2.xpose.msra.mxu0 0.0
    %1303 = vmatprep.subr.mxu0 0.0
    %1304 = vmatpush2.xpose.msra.mxu0 0.0
    %1305 = vmatprep.subr.mxu0 0.0
    %1306 = vmatpush2.xpose.msra.mxu0 0.0
    %1307 = vmatprep.subr.mxu0 0.0
    %1308 = vmatpush2.xpose.msra.mxu0 0.0
    %1309 = vmatprep.subr.mxu0 0.0
    %1310 = vmatpush2.xpose.msra.mxu0 0.0
    %1311 = vmatprep.subr.mxu0 0.0
    %1312 = vmatpush2.xpose.msra.mxu0 0.0
    %1313 = vmatprep.subr.mxu0 0.0
    %1314 = vmatpush2.xpose.msra.mxu0 0.0
    %1315 = vmatprep.subr.mxu0 0.0
    %1316 = vmatpush2.xpose.msra.mxu0 0.0
    %1317 = vmatprep.subr.mxu0 0.0
    %1318 = vmatpush2.xpose.msra.mxu0 0.0
    %1319 = vmatprep.subr.mxu0 0.0
    %1320 = vmatpush2.xpose.msra.mxu0 0.0
    %1321 = vmatprep.subr.mxu0 0.0
    %1322 = vmatpush2.xpose.msra.mxu0 0.0
    %1323 = vmatprep.subr.mxu0 0.0
    %1324 = vmatpush2.xpose.msra.mxu0 0.0
    %1325 = vmatprep.subr.mxu0 0.0
    %1326 = vmatpush2.xpose.msra.mxu0 0.0
    %1327 = vmatprep.mubr.f32.mxu0 0.0
    %1328 = vmatmul.mubr.f32.gmra.mxu0 %v865
    %v1329 = vpop.f32.mrf.mxu0
    %v1330 = vadd.f32 0.0, %v1329
    %v1331 = vpop.f32.mrf.mxu0
    %1332 = vmatprep.mubr.f32.mxu0 0.0
    %1333 = vmatmul.mubr.f32.gmra.mxu0 %v868
    %v1334 = vpop.f32.mrf.mxu0
    %v1335 = vadd.f32 0.0, %v1334
    %v1336 = vpop.f32.mrf.mxu0
    %1337 = vdwg.mxu0
    %v1339 = vsel %vm726, %v842, 0
    %1341 = vmatprep.subr.mxu0 0.0
    %1342 = vmatpush1.xpose.msra.mxu0 0.0
    %1343 = vmatprep.subr.mxu0 0.0
    %1344 = vmatpush1.xpose.msra.mxu0 0.0
    %1345 = vmatprep.subr.mxu0 0.0
    %1346 = vmatpush1.xpose.msra.mxu0 0.0
    %1347 = vmatprep.subr.mxu0 0.0
    %1348 = vmatpush1.xpose.msra.mxu0 0.0
    %1349 = vmatprep.subr.mxu0 0.0
    %1350 = vmatpush1.xpose.msra.mxu0 0.0
    %1351 = vmatprep.subr.mxu0 0.0
    %1352 = vmatpush1.xpose.msra.mxu0 0.0
    %1353 = vmatprep.subr.mxu0 0.0
    %1354 = vmatpush1.xpose.msra.mxu0 0.0
    %1355 = vmatprep.subr.mxu0 0.0
    %1356 = vmatpush1.xpose.msra.mxu0 0.0
    %1357 = vmatprep.subr.mxu0 0.0
    %1358 = vmatpush1.xpose.msra.mxu0 0.0
    %1359 = vmatprep.subr.mxu0 0.0
    %1360 = vmatpush1.xpose.msra.mxu0 0.0
    %1361 = vmatprep.subr.mxu0 0.0
    %1362 = vmatpush1.xpose.msra.mxu0 0.0
    %1363 = vmatprep.subr.mxu0 0.0
    %1364 = vmatpush1.xpose.msra.mxu0 0.0
    %1365 = vmatprep.subr.mxu0 0.0
    %1366 = vmatpush1.xpose.msra.mxu0 0.0
    %1367 = vmatprep.subr.mxu0 0.0
    %1368 = vmatpush1.xpose.msra.mxu0 0.0
    %1369 = vmatprep.subr.mxu0 0.0
    %1370 = vmatpush1.xpose.msra.mxu0 0.0
    %1371 = vmatprep.subr.mxu0 0.0
    %1372 = vmatpush1.xpose.msra.mxu0 %v1339
    %1373 = vmatprep.subr.mxu0 0.0
    %1374 = vmatpush2.xpose.msra.mxu0 0.0
    %1375 = vmatprep.subr.mxu0 0.0
    %1376 = vmatpush2.xpose.msra.mxu0 0.0
    %1377 = vmatprep.subr.mxu0 0.0
    %1378 = vmatpush2.xpose.msra.mxu0 0.0
    %1379 = vmatprep.subr.mxu0 0.0
    %1380 = vmatpush2.xpose.msra.mxu0 0.0
    %1381 = vmatprep.subr.mxu0 0.0
    %1382 = vmatpush2.xpose.msra.mxu0 0.0
    %1383 = vmatprep.subr.mxu0 0.0
    %1384 = vmatpush2.xpose.msra.mxu0 0.0
    %1385 = vmatprep.subr.mxu0 0.0
    %1386 = vmatpush2.xpose.msra.mxu0 0.0
    %1387 = vmatprep.subr.mxu0 0.0
    %1388 = vmatpush2.xpose.msra.mxu0 0.0
    %1389 = vmatprep.subr.mxu0 0.0
    %1390 = vmatpush2.xpose.msra.mxu0 0.0
    %1391 = vmatprep.subr.mxu0 0.0
    %1392 = vmatpush2.xpose.msra.mxu0 0.0
    %1393 = vmatprep.subr.mxu0 0.0
    %1394 = vmatpush2.xpose.msra.mxu0 0.0
    %1395 = vmatprep.subr.mxu0 0.0
    %1396 = vmatpush2.xpose.msra.mxu0 0.0
    %1397 = vmatprep.subr.mxu0 0.0
    %1398 = vmatpush2.xpose.msra.mxu0 0.0
    %1399 = vmatprep.subr.mxu0 0.0
    %1400 = vmatpush2.xpose.msra.mxu0 0.0
    %1401 = vmatprep.subr.mxu0 0.0
    %1402 = vmatpush2.xpose.msra.mxu0 0.0
    %1403 = vmatprep.subr.mxu0 0.0
    %1404 = vmatpush2.xpose.msra.mxu0 0.0
    %1405 = vmatprep.mubr.f32.mxu0 0.0
    %1406 = vmatmul.mubr.f32.gmra.mxu0 %v865
    %v1407 = vpop.f32.mrf.mxu0
    %v1408 = vadd.f32 0.0, %v1407
    %v1409 = vpop.f32.mrf.mxu0
    %1410 = vmatprep.mubr.f32.mxu0 0.0
    %1411 = vmatmul.mubr.f32.gmra.mxu0 %v868
    %v1412 = vpop.f32.mrf.mxu0
    %v1413 = vadd.f32 0.0, %v1412
    %v1414 = vpop.f32.mrf.mxu0
    %1415 = vdwg.mxu0
    %v1417 = vsel %vm726, %v843, 0
    %1419 = vmatprep.subr.mxu0 0.0
    %1420 = vmatpush1.xpose.msra.mxu0 0.0
    %1421 = vmatprep.subr.mxu0 0.0
    %1422 = vmatpush1.xpose.msra.mxu0 0.0
    %1423 = vmatprep.subr.mxu0 0.0
    %1424 = vmatpush1.xpose.msra.mxu0 0.0
    %1425 = vmatprep.subr.mxu0 0.0
    %1426 = vmatpush1.xpose.msra.mxu0 0.0
    %1427 = vmatprep.subr.mxu0 0.0
    %1428 = vmatpush1.xpose.msra.mxu0 0.0
    %1429 = vmatprep.subr.mxu0 0.0
    %1430 = vmatpush1.xpose.msra.mxu0 0.0
    %1431 = vmatprep.subr.mxu0 0.0
    %1432 = vmatpush1.xpose.msra.mxu0 0.0
    %1433 = vmatprep.subr.mxu0 0.0
    %1434 = vmatpush1.xpose.msra.mxu0 0.0
    %1435 = vmatprep.subr.mxu0 0.0
    %1436 = vmatpush1.xpose.msra.mxu0 0.0
    %1437 = vmatprep.subr.mxu0 0.0
    %1438 = vmatpush1.xpose.msra.mxu0 0.0
    %1439 = vmatprep.subr.mxu0 0.0
    %1440 = vmatpush1.xpose.msra.mxu0 0.0
    %1441 = vmatprep.subr.mxu0 0.0
    %1442 = vmatpush1.xpose.msra.mxu0 0.0
    %1443 = vmatprep.subr.mxu0 0.0
    %1444 = vmatpush1.xpose.msra.mxu0 0.0
    %1445 = vmatprep.subr.mxu0 0.0
    %1446 = vmatpush1.xpose.msra.mxu0 0.0
    %1447 = vmatprep.subr.mxu0 0.0
    %1448 = vmatpush1.xpose.msra.mxu0 0.0
    %1449 = vmatprep.subr.mxu0 0.0
    %1450 = vmatpush1.xpose.msra.mxu0 %v1417
    %1451 = vmatprep.subr.mxu0 0.0
    %1452 = vmatpush2.xpose.msra.mxu0 0.0
    %1453 = vmatprep.subr.mxu0 0.0
    %1454 = vmatpush2.xpose.msra.mxu0 0.0
    %1455 = vmatprep.subr.mxu0 0.0
    %1456 = vmatpush2.xpose.msra.mxu0 0.0
    %1457 = vmatprep.subr.mxu0 0.0
    %1458 = vmatpush2.xpose.msra.mxu0 0.0
    %1459 = vmatprep.subr.mxu0 0.0
    %1460 = vmatpush2.xpose.msra.mxu0 0.0
    %1461 = vmatprep.subr.mxu0 0.0
    %1462 = vmatpush2.xpose.msra.mxu0 0.0
    %1463 = vmatprep.subr.mxu0 0.0
    %1464 = vmatpush2.xpose.msra.mxu0 0.0
    %1465 = vmatprep.subr.mxu0 0.0
    %1466 = vmatpush2.xpose.msra.mxu0 0.0
    %1467 = vmatprep.subr.mxu0 0.0
    %1468 = vmatpush2.xpose.msra.mxu0 0.0
    %1469 = vmatprep.subr.mxu0 0.0
    %1470 = vmatpush2.xpose.msra.mxu0 0.0
    %1471 = vmatprep.subr.mxu0 0.0
    %1472 = vmatpush2.xpose.msra.mxu0 0.0
    %1473 = vmatprep.subr.mxu0 0.0
    %1474 = vmatpush2.xpose.msra.mxu0 0.0
    %1475 = vmatprep.subr.mxu0 0.0
    %1476 = vmatpush2.xpose.msra.mxu0 0.0
    %1477 = vmatprep.subr.mxu0 0.0
    %1478 = vmatpush2.xpose.msra.mxu0 0.0
    %1479 = vmatprep.subr.mxu0 0.0
    %1480 = vmatpush2.xpose.msra.mxu0 0.0
    %1481 = vmatprep.subr.mxu0 0.0
    %1482 = vmatpush2.xpose.msra.mxu0 0.0
    %1483 = vmatprep.mubr.f32.mxu0 0.0
    %1484 = vmatmul.mubr.f32.gmra.mxu0 %v865
    %v1485 = vpop.f32.mrf.mxu0
    %v1486 = vadd.f32 0.0, %v1485
    %v1487 = vpop.f32.mrf.mxu0
    %1488 = vmatprep.mubr.f32.mxu0 0.0
    %1489 = vmatmul.mubr.f32.gmra.mxu0 %v868
    %v1490 = vpop.f32.mrf.mxu0
    %v1491 = vadd.f32 0.0, %v1490
    %v1492 = vpop.f32.mrf.mxu0
    %1493 = vdwg.mxu0
    %v1494 = vld [vmem:[%s2] sm:$0x1]
    %v1495 = vld [vmem:[%s2 + $0x1] sm:$0x1]
    %v1496 = vld [vmem:[%s2 + $0x2] sm:$0x1]
    %v1497 = vld [vmem:[%s2 + $0x3] sm:$0x1]
    %v1498 = vld [vmem:[%s2 + $0x4] sm:$0x1]
    %v1499 = vld [vmem:[%s2 + $0x5] sm:$0x1]
    %v1500 = vld [vmem:[%s2 + $0x6] sm:$0x1]
    %v1501 = vld [vmem:[%s2 + $0x7] sm:$0x1]
    %vm1502 = vcmp.gt.f32.partialorder %v1494, 0.5
    %vm1503 = vcmp.gt.f32.partialorder %v1495, 0.5
    %vm1504 = vcmp.gt.f32.partialorder %v1496, 0.5
    %vm1505 = vcmp.gt.f32.partialorder %v1497, 0.5
    %vm1506 = vcmp.gt.f32.partialorder %v1498, 0.5
    %vm1507 = vcmp.gt.f32.partialorder %v1499, 0.5
    %vm1508 = vcmp.gt.f32.partialorder %v1500, 0.5
    %vm1509 = vcmp.gt.f32.partialorder %v1501, 0.5
    %v1510 = vsel %vm1502, 1, 0
    %v1511 = vsel %vm1503, 1, 0
    %v1512 = vsel %vm1504, 1, 0
    %v1513 = vsel %vm1505, 1, 0
    %v1514 = vsel %vm1506, 1, 0
    %v1515 = vsel %vm1507, 1, 0
    %v1516 = vsel %vm1508, 1, 0
    %v1517 = vsel %vm1509, 1, 0
    %v1518 = vlaneseq
    %v1519 = vshrl.u32 %v1518, 7
    %v1520 = vsub.s32 0, %v1519
    %v1521 = vrot.slane %v1510, %v1520
    %v1522 = vlaneseq
    %v1523 = vshrl.u32 %v1522, 7
    %v1524 = vsub.s32 0, %v1523
    %v1525 = vrot.slane %v1511, %v1524
    %v1526 = vlaneseq
    %v1527 = vshrl.u32 %v1526, 7
    %v1528 = vsub.s32 0, %v1527
    %v1529 = vrot.slane %v1512, %v1528
    %v1530 = vlaneseq
    %v1531 = vshrl.u32 %v1530, 7
    %v1532 = vsub.s32 0, %v1531
    %v1533 = vrot.slane %v1513, %v1532
    %v1534 = vlaneseq
    %v1535 = vshrl.u32 %v1534, 7
    %v1536 = vsub.s32 0, %v1535
    %v1537 = vrot.slane %v1514, %v1536
    %v1538 = vlaneseq
    %v1539 = vshrl.u32 %v1538, 7
    %v1540 = vsub.s32 0, %v1539
    %v1541 = vrot.slane %v1515, %v1540
    %v1542 = vlaneseq
    %v1543 = vshrl.u32 %v1542, 7
    %v1544 = vsub.s32 0, %v1543
    %v1545 = vrot.slane %v1516, %v1544
    %v1546 = vlaneseq
    %v1547 = vshrl.u32 %v1546, 7
    %v1548 = vsub.s32 0, %v1547
    %v1549 = vrot.slane %v1517, %v1548
    %vm1550 = vcmp.eq.s32.totalorder %v1521, 1
    %vm1551 = vcmp.eq.s32.totalorder %v1525, 1
    %vm1552 = vcmp.eq.s32.totalorder %v1529, 1
    %vm1553 = vcmp.eq.s32.totalorder %v1533, 1
    %vm1554 = vcmp.eq.s32.totalorder %v1537, 1
    %vm1555 = vcmp.eq.s32.totalorder %v1541, 1
    %vm1556 = vcmp.eq.s32.totalorder %v1545, 1
    %vm1557 = vcmp.eq.s32.totalorder %v1549, 1
    %v1558 = vsel %vm1550, %v940, -1e+09
    %v1559 = vsel %vm1550, %v945, -1e+09
    %v1560 = vsel %vm1551, %v1018, -1e+09
    %v1561 = vsel %vm1551, %v1023, -1e+09
    %v1562 = vsel %vm1552, %v1096, -1e+09
    %v1563 = vsel %vm1552, %v1101, -1e+09
    %v1564 = vsel %vm1553, %v1174, -1e+09
    %v1565 = vsel %vm1553, %v1179, -1e+09
    %v1566 = vsel %vm1554, %v1252, -1e+09
    %v1567 = vsel %vm1554, %v1257, -1e+09
    %v1568 = vsel %vm1555, %v1330, -1e+09
    %v1569 = vsel %vm1555, %v1335, -1e+09
    %v1570 = vsel %vm1556, %v1408, -1e+09
    %v1571 = vsel %vm1556, %v1413, -1e+09
    %v1572 = vsel %vm1557, %v1486, -1e+09
    %v1573 = vsel %vm1557, %v1491, -1e+09
    %v1574 = vsel %vm631, %v1558, -inf
    %1575 = vmax.xlane.f32.xlu0 %v1574
    %v1576 = vpop.xlane.xlu0 %1575
    %v1577 = vsel %vm631, %v1559, -inf
    %1578 = vmax.xlane.f32.xlu0 %v1577
    %v1579 = vpop.xlane.xlu0 %1578
    %v1580 = vsel %vm631, %v1560, -inf
    %1581 = vmax.xlane.f32.xlu0 %v1580
    %v1582 = vpop.xlane.xlu0 %1581
    %v1583 = vsel %vm631, %v1561, -inf
    %1584 = vmax.xlane.f32.xlu0 %v1583
    %v1585 = vpop.xlane.xlu0 %1584
    %v1586 = vsel %vm631, %v1562, -inf
    %1587 = vmax.xlane.f32.xlu0 %v1586
    %v1588 = vpop.xlane.xlu0 %1587
    %v1589 = vsel %vm631, %v1563, -inf
    %1590 = vmax.xlane.f32.xlu0 %v1589
    %v1591 = vpop.xlane.xlu0 %1590
    %v1592 = vsel %vm631, %v1564, -inf
    %1593 = vmax.xlane.f32.xlu0 %v1592
    %v1594 = vpop.xlane.xlu0 %1593
    %v1595 = vsel %vm631, %v1565, -inf
    %1596 = vmax.xlane.f32.xlu0 %v1595
    %v1597 = vpop.xlane.xlu0 %1596
    %v1598 = vsel %vm631, %v1566, -inf
    %1599 = vmax.xlane.f32.xlu0 %v1598
    %v1600 = vpop.xlane.xlu0 %1599
    %v1601 = vsel %vm631, %v1567, -inf
    %1602 = vmax.xlane.f32.xlu0 %v1601
    %v1603 = vpop.xlane.xlu0 %1602
    %v1604 = vsel %vm631, %v1568, -inf
    %1605 = vmax.xlane.f32.xlu0 %v1604
    %v1606 = vpop.xlane.xlu0 %1605
    %v1607 = vsel %vm631, %v1569, -inf
    %1608 = vmax.xlane.f32.xlu0 %v1607
    %v1609 = vpop.xlane.xlu0 %1608
    %v1610 = vsel %vm631, %v1570, -inf
    %1611 = vmax.xlane.f32.xlu0 %v1610
    %v1612 = vpop.xlane.xlu0 %1611
    %v1613 = vsel %vm631, %v1571, -inf
    %1614 = vmax.xlane.f32.xlu0 %v1613
    %v1615 = vpop.xlane.xlu0 %1614
    %v1616 = vsel %vm631, %v1572, -inf
    %1617 = vmax.xlane.f32.xlu0 %v1616
    %v1618 = vpop.xlane.xlu0 %1617
    %v1619 = vsel %vm631, %v1573, -inf
    %1620 = vmax.xlane.f32.xlu0 %v1619
    %v1621 = vpop.xlane.xlu0 %1620
    %v1622 = vsub.f32 %v1558, %v1576
    %v1623 = vsub.f32 %v1559, %v1579
    %v1624 = vsub.f32 %v1560, %v1582
    %v1625 = vsub.f32 %v1561, %v1585
    %v1626 = vsub.f32 %v1562, %v1588
    %v1627 = vsub.f32 %v1563, %v1591
    %v1628 = vsub.f32 %v1564, %v1594
    %v1629 = vsub.f32 %v1565, %v1597
    %v1630 = vsub.f32 %v1566, %v1600
    %v1631 = vsub.f32 %v1567, %v1603
    %v1632 = vsub.f32 %v1568, %v1606
    %v1633 = vsub.f32 %v1569, %v1609
    %v1634 = vsub.f32 %v1570, %v1612
    %v1635 = vsub.f32 %v1571, %v1615
    %v1636 = vsub.f32 %v1572, %v1618
    %v1637 = vsub.f32 %v1573, %v1621
    %v1638 = vmul.f32 %v1622, 1.442695
    %v1639 = vpow.pop %v1638
    %v1640 = vmul.f32 %v1623, 1.442695
    %v1641 = vpow.pop %v1640
    %v1642 = vmul.f32 %v1624, 1.442695
    %v1643 = vpow.pop %v1642
    %v1644 = vmul.f32 %v1625, 1.442695
    %v1645 = vpow.pop %v1644
    %v1646 = vmul.f32 %v1626, 1.442695
    %v1647 = vpow.pop %v1646
    %v1648 = vmul.f32 %v1627, 1.442695
    %v1649 = vpow.pop %v1648
    %v1650 = vmul.f32 %v1628, 1.442695
    %v1651 = vpow.pop %v1650
    %v1652 = vmul.f32 %v1629, 1.442695
    %v1653 = vpow.pop %v1652
    %v1654 = vmul.f32 %v1630, 1.442695
    %v1655 = vpow.pop %v1654
    %v1656 = vmul.f32 %v1631, 1.442695
    %v1657 = vpow.pop %v1656
    %v1658 = vmul.f32 %v1632, 1.442695
    %v1659 = vpow.pop %v1658
    %v1660 = vmul.f32 %v1633, 1.442695
    %v1661 = vpow.pop %v1660
    %v1662 = vmul.f32 %v1634, 1.442695
    %v1663 = vpow.pop %v1662
    %v1664 = vmul.f32 %v1635, 1.442695
    %v1665 = vpow.pop %v1664
    %v1666 = vmul.f32 %v1636, 1.442695
    %v1667 = vpow.pop %v1666
    %v1668 = vmul.f32 %v1637, 1.442695
    %v1669 = vpow.pop %v1668
    %v1670 = vsel %vm631, %v1639, 0.0
    %1671 = vadd.xlane.f32.xlu0 %v1670
    %v1672 = vpop.xlane.xlu0 %1671
    %v1673 = vsel %vm631, %v1641, 0.0
    %1674 = vadd.xlane.f32.xlu0 %v1673
    %v1675 = vpop.xlane.xlu0 %1674
    %v1676 = vsel %vm631, %v1643, 0.0
    %1677 = vadd.xlane.f32.xlu0 %v1676
    %v1678 = vpop.xlane.xlu0 %1677
    %v1679 = vsel %vm631, %v1645, 0.0
    %1680 = vadd.xlane.f32.xlu0 %v1679
    %v1681 = vpop.xlane.xlu0 %1680
    %v1682 = vsel %vm631, %v1647, 0.0
    %1683 = vadd.xlane.f32.xlu0 %v1682
    %v1684 = vpop.xlane.xlu0 %1683
    %v1685 = vsel %vm631, %v1649, 0.0
    %1686 = vadd.xlane.f32.xlu0 %v1685
    %v1687 = vpop.xlane.xlu0 %1686
    %v1688 = vsel %vm631, %v1651, 0.0
    %1689 = vadd.xlane.f32.xlu0 %v1688
    %v1690 = vpop.xlane.xlu0 %1689
    %v1691 = vsel %vm631, %v1653, 0.0
    %1692 = vadd.xlane.f32.xlu0 %v1691
    %v1693 = vpop.xlane.xlu0 %1692
    %v1694 = vsel %vm631, %v1655, 0.0
    %1695 = vadd.xlane.f32.xlu0 %v1694
    %v1696 = vpop.xlane.xlu0 %1695
    %v1697 = vsel %vm631, %v1657, 0.0
    %1698 = vadd.xlane.f32.xlu0 %v1697
    %v1699 = vpop.xlane.xlu0 %1698
    %v1700 = vsel %vm631, %v1659, 0.0
    %1701 = vadd.xlane.f32.xlu0 %v1700
    %v1702 = vpop.xlane.xlu0 %1701
    %v1703 = vsel %vm631, %v1661, 0.0
    %1704 = vadd.xlane.f32.xlu0 %v1703
    %v1705 = vpop.xlane.xlu0 %1704
    %v1706 = vsel %vm631, %v1663, 0.0
    %1707 = vadd.xlane.f32.xlu0 %v1706
    %v1708 = vpop.xlane.xlu0 %1707
    %v1709 = vsel %vm631, %v1665, 0.0
    %1710 = vadd.xlane.f32.xlu0 %v1709
    %v1711 = vpop.xlane.xlu0 %1710
    %v1712 = vsel %vm631, %v1667, 0.0
    %1713 = vadd.xlane.f32.xlu0 %v1712
    %v1714 = vpop.xlane.xlu0 %1713
    %v1715 = vsel %vm631, %v1669, 0.0
    %1716 = vadd.xlane.f32.xlu0 %v1715
    %v1717 = vpop.xlane.xlu0 %1716
    %v1718 = vrcp.pop %v1672
    %v1719 = vmul.f32 %v1639, %v1718
    %v1720 = vrcp.pop %v1675
    %v1721 = vmul.f32 %v1641, %v1720
    %v1722 = vrcp.pop %v1678
    %v1723 = vmul.f32 %v1643, %v1722
    %v1724 = vrcp.pop %v1681
    %v1725 = vmul.f32 %v1645, %v1724
    %v1726 = vrcp.pop %v1684
    %v1727 = vmul.f32 %v1647, %v1726
    %v1728 = vrcp.pop %v1687
    %v1729 = vmul.f32 %v1649, %v1728
    %v1730 = vrcp.pop %v1690
    %v1731 = vmul.f32 %v1651, %v1730
    %v1732 = vrcp.pop %v1693
    %v1733 = vmul.f32 %v1653, %v1732
    %v1734 = vrcp.pop %v1696
    %v1735 = vmul.f32 %v1655, %v1734
    %v1736 = vrcp.pop %v1699
    %v1737 = vmul.f32 %v1657, %v1736
    %v1738 = vrcp.pop %v1702
    %v1739 = vmul.f32 %v1659, %v1738
    %v1740 = vrcp.pop %v1705
    %v1741 = vmul.f32 %v1661, %v1740
    %v1742 = vrcp.pop %v1708
    %v1743 = vmul.f32 %v1663, %v1742
    %v1744 = vrcp.pop %v1711
    %v1745 = vmul.f32 %v1665, %v1744
    %v1746 = vrcp.pop %v1714
    %v1747 = vmul.f32 %v1667, %v1746
    %v1748 = vrcp.pop %v1717
    %v1749 = vmul.f32 %v1669, %v1748
    %1751 = vrot.lane.b32.xlu0 %v856, 96
    %v1752 = vpop.permute.xlu0 %1751
    %v1755 = vsel %vm631, %v1719, 0
    %v1758 = vsel %vm631, %v1721, 0
    %1760 = vmatprep.subr.mxu0 0.0
    %1761 = vmatpush1.msra.mxu0 0.0
    %1762 = vmatprep.subr.mxu0 0.0
    %1763 = vmatpush1.msra.mxu0 0.0
    %1764 = vmatprep.subr.mxu0 0.0
    %1765 = vmatpush1.msra.mxu0 0.0
    %1766 = vmatprep.subr.mxu0 0.0
    %1767 = vmatpush1.msra.mxu0 0.0
    %1768 = vmatprep.subr.mxu0 0.0
    %1769 = vmatpush1.msra.mxu0 0.0
    %1770 = vmatprep.subr.mxu0 0.0
    %1771 = vmatpush1.msra.mxu0 0.0
    %1772 = vmatprep.subr.mxu0 0.0
    %1773 = vmatpush1.msra.mxu0 0.0
    %1774 = vmatprep.subr.mxu0 0.0
    %1775 = vmatpush1.msra.mxu0 0.0
    %1776 = vmatprep.subr.mxu0 0.0
    %1777 = vmatpush1.msra.mxu0 0.0
    %1778 = vmatprep.subr.mxu0 0.0
    %1779 = vmatpush1.msra.mxu0 0.0
    %1780 = vmatprep.subr.mxu0 0.0
    %1781 = vmatpush1.msra.mxu0 0.0
    %1782 = vmatprep.subr.mxu0 0.0
    %1783 = vmatpush1.msra.mxu0 0.0
    %1784 = vmatprep.subr.mxu0 0.0
    %1785 = vmatpush1.msra.mxu0 0.0
    %1786 = vmatprep.subr.mxu0 0.0
    %1787 = vmatpush1.msra.mxu0 0.0
    %1788 = vmatprep.subr.mxu0 0.0
    %1789 = vmatpush1.msra.mxu0 0.0
    %1790 = vmatprep.subr.mxu0 0.0
    %1791 = vmatpush1.msra.mxu0 %v1752
    %1792 = vmatprep.subr.mxu0 0.0
    %1793 = vmatpush2.msra.mxu0 0.0
    %1794 = vmatprep.subr.mxu0 0.0
    %1795 = vmatpush2.msra.mxu0 0.0
    %1796 = vmatprep.subr.mxu0 0.0
    %1797 = vmatpush2.msra.mxu0 0.0
    %1798 = vmatprep.subr.mxu0 0.0
    %1799 = vmatpush2.msra.mxu0 0.0
    %1800 = vmatprep.subr.mxu0 0.0
    %1801 = vmatpush2.msra.mxu0 0.0
    %1802 = vmatprep.subr.mxu0 0.0
    %1803 = vmatpush2.msra.mxu0 0.0
    %1804 = vmatprep.subr.mxu0 0.0
    %1805 = vmatpush2.msra.mxu0 0.0
    %1806 = vmatprep.subr.mxu0 0.0
    %1807 = vmatpush2.msra.mxu0 0.0
    %1808 = vmatprep.subr.mxu0 0.0
    %1809 = vmatpush2.msra.mxu0 0.0
    %1810 = vmatprep.subr.mxu0 0.0
    %1811 = vmatpush2.msra.mxu0 0.0
    %1812 = vmatprep.subr.mxu0 0.0
    %1813 = vmatpush2.msra.mxu0 0.0
    %1814 = vmatprep.subr.mxu0 0.0
    %1815 = vmatpush2.msra.mxu0 0.0
    %1816 = vmatprep.subr.mxu0 0.0
    %1817 = vmatpush2.msra.mxu0 0.0
    %1818 = vmatprep.subr.mxu0 0.0
    %1819 = vmatpush2.msra.mxu0 0.0
    %1820 = vmatprep.subr.mxu0 0.0
    %1821 = vmatpush2.msra.mxu0 0.0
    %1822 = vmatprep.subr.mxu0 0.0
    %1823 = vmatpush2.msra.mxu0 0.0
    %1824 = vmatprep.mubr.f32.mxu0 0.0
    %1825 = vmatmul.mubr.f32.gmra.mxu0 %v1755
    %v1826 = vpop.f32.mrf.mxu0
    %v1827 = vadd.f32 0.0, %v1826
    %v1828 = vpop.f32.mrf.mxu0
    %1829 = vmatprep.mubr.f32.mxu0 0.0
    %1830 = vmatmul.mubr.f32.gmra.mxu0 %v1758
    %v1831 = vpop.f32.mrf.mxu0
    %v1832 = vadd.f32 0.0, %v1831
    %v1833 = vpop.f32.mrf.mxu0
    %1834 = vdwg.mxu0
    %1836 = vrot.lane.b32.xlu0 %v857, 96
    %v1837 = vpop.permute.xlu0 %1836
    %v1840 = vsel %vm631, %v1723, 0
    %v1843 = vsel %vm631, %v1725, 0
    %1845 = vmatprep.subr.mxu0 0.0
    %1846 = vmatpush1.msra.mxu0 0.0
    %1847 = vmatprep.subr.mxu0 0.0
    %1848 = vmatpush1.msra.mxu0 0.0
    %1849 = vmatprep.subr.mxu0 0.0
    %1850 = vmatpush1.msra.mxu0 0.0
    %1851 = vmatprep.subr.mxu0 0.0
    %1852 = vmatpush1.msra.mxu0 0.0
    %1853 = vmatprep.subr.mxu0 0.0
    %1854 = vmatpush1.msra.mxu0 0.0
    %1855 = vmatprep.subr.mxu0 0.0
    %1856 = vmatpush1.msra.mxu0 0.0
    %1857 = vmatprep.subr.mxu0 0.0
    %1858 = vmatpush1.msra.mxu0 0.0
    %1859 = vmatprep.subr.mxu0 0.0
    %1860 = vmatpush1.msra.mxu0 0.0
    %1861 = vmatprep.subr.mxu0 0.0
    %1862 = vmatpush1.msra.mxu0 0.0
    %1863 = vmatprep.subr.mxu0 0.0
    %1864 = vmatpush1.msra.mxu0 0.0
    %1865 = vmatprep.subr.mxu0 0.0
    %1866 = vmatpush1.msra.mxu0 0.0
    %1867 = vmatprep.subr.mxu0 0.0
    %1868 = vmatpush1.msra.mxu0 0.0
    %1869 = vmatprep.subr.mxu0 0.0
    %1870 = vmatpush1.msra.mxu0 0.0
    %1871 = vmatprep.subr.mxu0 0.0
    %1872 = vmatpush1.msra.mxu0 0.0
    %1873 = vmatprep.subr.mxu0 0.0
    %1874 = vmatpush1.msra.mxu0 0.0
    %1875 = vmatprep.subr.mxu0 0.0
    %1876 = vmatpush1.msra.mxu0 %v1837
    %1877 = vmatprep.subr.mxu0 0.0
    %1878 = vmatpush2.msra.mxu0 0.0
    %1879 = vmatprep.subr.mxu0 0.0
    %1880 = vmatpush2.msra.mxu0 0.0
    %1881 = vmatprep.subr.mxu0 0.0
    %1882 = vmatpush2.msra.mxu0 0.0
    %1883 = vmatprep.subr.mxu0 0.0
    %1884 = vmatpush2.msra.mxu0 0.0
    %1885 = vmatprep.subr.mxu0 0.0
    %1886 = vmatpush2.msra.mxu0 0.0
    %1887 = vmatprep.subr.mxu0 0.0
    %1888 = vmatpush2.msra.mxu0 0.0
    %1889 = vmatprep.subr.mxu0 0.0
    %1890 = vmatpush2.msra.mxu0 0.0
    %1891 = vmatprep.subr.mxu0 0.0
    %1892 = vmatpush2.msra.mxu0 0.0
    %1893 = vmatprep.subr.mxu0 0.0
    %1894 = vmatpush2.msra.mxu0 0.0
    %1895 = vmatprep.subr.mxu0 0.0
    %1896 = vmatpush2.msra.mxu0 0.0
    %1897 = vmatprep.subr.mxu0 0.0
    %1898 = vmatpush2.msra.mxu0 0.0
    %1899 = vmatprep.subr.mxu0 0.0
    %1900 = vmatpush2.msra.mxu0 0.0
    %1901 = vmatprep.subr.mxu0 0.0
    %1902 = vmatpush2.msra.mxu0 0.0
    %1903 = vmatprep.subr.mxu0 0.0
    %1904 = vmatpush2.msra.mxu0 0.0
    %1905 = vmatprep.subr.mxu0 0.0
    %1906 = vmatpush2.msra.mxu0 0.0
    %1907 = vmatprep.subr.mxu0 0.0
    %1908 = vmatpush2.msra.mxu0 0.0
    %1909 = vmatprep.mubr.f32.mxu0 0.0
    %1910 = vmatmul.mubr.f32.gmra.mxu0 %v1840
    %v1911 = vpop.f32.mrf.mxu0
    %v1912 = vadd.f32 0.0, %v1911
    %v1913 = vpop.f32.mrf.mxu0
    %1914 = vmatprep.mubr.f32.mxu0 0.0
    %1915 = vmatmul.mubr.f32.gmra.mxu0 %v1843
    %v1916 = vpop.f32.mrf.mxu0
    %v1917 = vadd.f32 0.0, %v1916
    %v1918 = vpop.f32.mrf.mxu0
    %1919 = vdwg.mxu0
    %1921 = vrot.lane.b32.xlu0 %v858, 96
    %v1922 = vpop.permute.xlu0 %1921
    %v1925 = vsel %vm631, %v1727, 0
    %v1928 = vsel %vm631, %v1729, 0
    %1930 = vmatprep.subr.mxu0 0.0
    %1931 = vmatpush1.msra.mxu0 0.0
    %1932 = vmatprep.subr.mxu0 0.0
    %1933 = vmatpush1.msra.mxu0 0.0
    %1934 = vmatprep.subr.mxu0 0.0
    %1935 = vmatpush1.msra.mxu0 0.0
    %1936 = vmatprep.subr.mxu0 0.0
    %1937 = vmatpush1.msra.mxu0 0.0
    %1938 = vmatprep.subr.mxu0 0.0
    %1939 = vmatpush1.msra.mxu0 0.0
    %1940 = vmatprep.subr.mxu0 0.0
    %1941 = vmatpush1.msra.mxu0 0.0
    %1942 = vmatprep.subr.mxu0 0.0
    %1943 = vmatpush1.msra.mxu0 0.0
    %1944 = vmatprep.subr.mxu0 0.0
    %1945 = vmatpush1.msra.mxu0 0.0
    %1946 = vmatprep.subr.mxu0 0.0
    %1947 = vmatpush1.msra.mxu0 0.0
    %1948 = vmatprep.subr.mxu0 0.0
    %1949 = vmatpush1.msra.mxu0 0.0
    %1950 = vmatprep.subr.mxu0 0.0
    %1951 = vmatpush1.msra.mxu0 0.0
    %1952 = vmatprep.subr.mxu0 0.0
    %1953 = vmatpush1.msra.mxu0 0.0
    %1954 = vmatprep.subr.mxu0 0.0
    %1955 = vmatpush1.msra.mxu0 0.0
    %1956 = vmatprep.subr.mxu0 0.0
    %1957 = vmatpush1.msra.mxu0 0.0
    %1958 = vmatprep.subr.mxu0 0.0
    %1959 = vmatpush1.msra.mxu0 0.0
    %1960 = vmatprep.subr.mxu0 0.0
    %1961 = vmatpush1.msra.mxu0 %v1922
    %1962 = vmatprep.subr.mxu0 0.0
    %1963 = vmatpush2.msra.mxu0 0.0
    %1964 = vmatprep.subr.mxu0 0.0
    %1965 = vmatpush2.msra.mxu0 0.0
    %1966 = vmatprep.subr.mxu0 0.0
    %1967 = vmatpush2.msra.mxu0 0.0
    %1968 = vmatprep.subr.mxu0 0.0
    %1969 = vmatpush2.msra.mxu0 0.0
    %1970 = vmatprep.subr.mxu0 0.0
    %1971 = vmatpush2.msra.mxu0 0.0
    %1972 = vmatprep.subr.mxu0 0.0
    %1973 = vmatpush2.msra.mxu0 0.0
    %1974 = vmatprep.subr.mxu0 0.0
    %1975 = vmatpush2.msra.mxu0 0.0
    %1976 = vmatprep.subr.mxu0 0.0
    %1977 = vmatpush2.msra.mxu0 0.0
    %1978 = vmatprep.subr.mxu0 0.0
    %1979 = vmatpush2.msra.mxu0 0.0
    %1980 = vmatprep.subr.mxu0 0.0
    %1981 = vmatpush2.msra.mxu0 0.0
    %1982 = vmatprep.subr.mxu0 0.0
    %1983 = vmatpush2.msra.mxu0 0.0
    %1984 = vmatprep.subr.mxu0 0.0
    %1985 = vmatpush2.msra.mxu0 0.0
    %1986 = vmatprep.subr.mxu0 0.0
    %1987 = vmatpush2.msra.mxu0 0.0
    %1988 = vmatprep.subr.mxu0 0.0
    %1989 = vmatpush2.msra.mxu0 0.0
    %1990 = vmatprep.subr.mxu0 0.0
    %1991 = vmatpush2.msra.mxu0 0.0
    %1992 = vmatprep.subr.mxu0 0.0
    %1993 = vmatpush2.msra.mxu0 0.0
    %1994 = vmatprep.mubr.f32.mxu0 0.0
    %1995 = vmatmul.mubr.f32.gmra.mxu0 %v1925
    %v1996 = vpop.f32.mrf.mxu0
    %v1997 = vadd.f32 0.0, %v1996
    %v1998 = vpop.f32.mrf.mxu0
    %1999 = vmatprep.mubr.f32.mxu0 0.0
    %2000 = vmatmul.mubr.f32.gmra.mxu0 %v1928
    %v2001 = vpop.f32.mrf.mxu0
    %v2002 = vadd.f32 0.0, %v2001
    %v2003 = vpop.f32.mrf.mxu0
    %2004 = vdwg.mxu0
    %2006 = vrot.lane.b32.xlu0 %v859, 96
    %v2007 = vpop.permute.xlu0 %2006
    %v2010 = vsel %vm631, %v1731, 0
    %v2013 = vsel %vm631, %v1733, 0
    %2015 = vmatprep.subr.mxu0 0.0
    %2016 = vmatpush1.msra.mxu0 0.0
    %2017 = vmatprep.subr.mxu0 0.0
    %2018 = vmatpush1.msra.mxu0 0.0
    %2019 = vmatprep.subr.mxu0 0.0
    %2020 = vmatpush1.msra.mxu0 0.0
    %2021 = vmatprep.subr.mxu0 0.0
    %2022 = vmatpush1.msra.mxu0 0.0
    %2023 = vmatprep.subr.mxu0 0.0
    %2024 = vmatpush1.msra.mxu0 0.0
    %2025 = vmatprep.subr.mxu0 0.0
    %2026 = vmatpush1.msra.mxu0 0.0
    %2027 = vmatprep.subr.mxu0 0.0
    %2028 = vmatpush1.msra.mxu0 0.0
    %2029 = vmatprep.subr.mxu0 0.0
    %2030 = vmatpush1.msra.mxu0 0.0
    %2031 = vmatprep.subr.mxu0 0.0
    %2032 = vmatpush1.msra.mxu0 0.0
    %2033 = vmatprep.subr.mxu0 0.0
    %2034 = vmatpush1.msra.mxu0 0.0
    %2035 = vmatprep.subr.mxu0 0.0
    %2036 = vmatpush1.msra.mxu0 0.0
    %2037 = vmatprep.subr.mxu0 0.0
    %2038 = vmatpush1.msra.mxu0 0.0
    %2039 = vmatprep.subr.mxu0 0.0
    %2040 = vmatpush1.msra.mxu0 0.0
    %2041 = vmatprep.subr.mxu0 0.0
    %2042 = vmatpush1.msra.mxu0 0.0
    %2043 = vmatprep.subr.mxu0 0.0
    %2044 = vmatpush1.msra.mxu0 0.0
    %2045 = vmatprep.subr.mxu0 0.0
    %2046 = vmatpush1.msra.mxu0 %v2007
    %2047 = vmatprep.subr.mxu0 0.0
    %2048 = vmatpush2.msra.mxu0 0.0
    %2049 = vmatprep.subr.mxu0 0.0
    %2050 = vmatpush2.msra.mxu0 0.0
    %2051 = vmatprep.subr.mxu0 0.0
    %2052 = vmatpush2.msra.mxu0 0.0
    %2053 = vmatprep.subr.mxu0 0.0
    %2054 = vmatpush2.msra.mxu0 0.0
    %2055 = vmatprep.subr.mxu0 0.0
    %2056 = vmatpush2.msra.mxu0 0.0
    %2057 = vmatprep.subr.mxu0 0.0
    %2058 = vmatpush2.msra.mxu0 0.0
    %2059 = vmatprep.subr.mxu0 0.0
    %2060 = vmatpush2.msra.mxu0 0.0
    %2061 = vmatprep.subr.mxu0 0.0
    %2062 = vmatpush2.msra.mxu0 0.0
    %2063 = vmatprep.subr.mxu0 0.0
    %2064 = vmatpush2.msra.mxu0 0.0
    %2065 = vmatprep.subr.mxu0 0.0
    %2066 = vmatpush2.msra.mxu0 0.0
    %2067 = vmatprep.subr.mxu0 0.0
    %2068 = vmatpush2.msra.mxu0 0.0
    %2069 = vmatprep.subr.mxu0 0.0
    %2070 = vmatpush2.msra.mxu0 0.0
    %2071 = vmatprep.subr.mxu0 0.0
    %2072 = vmatpush2.msra.mxu0 0.0
    %2073 = vmatprep.subr.mxu0 0.0
    %2074 = vmatpush2.msra.mxu0 0.0
    %2075 = vmatprep.subr.mxu0 0.0
    %2076 = vmatpush2.msra.mxu0 0.0
    %2077 = vmatprep.subr.mxu0 0.0
    %2078 = vmatpush2.msra.mxu0 0.0
    %2079 = vmatprep.mubr.f32.mxu0 0.0
    %2080 = vmatmul.mubr.f32.gmra.mxu0 %v2010
    %v2081 = vpop.f32.mrf.mxu0
    %v2082 = vadd.f32 0.0, %v2081
    %v2083 = vpop.f32.mrf.mxu0
    %2084 = vmatprep.mubr.f32.mxu0 0.0
    %2085 = vmatmul.mubr.f32.gmra.mxu0 %v2013
    %v2086 = vpop.f32.mrf.mxu0
    %v2087 = vadd.f32 0.0, %v2086
    %v2088 = vpop.f32.mrf.mxu0
    %2089 = vdwg.mxu0
    %2091 = vrot.lane.b32.xlu0 %v860, 96
    %v2092 = vpop.permute.xlu0 %2091
    %v2095 = vsel %vm631, %v1735, 0
    %v2098 = vsel %vm631, %v1737, 0
    %2100 = vmatprep.subr.mxu0 0.0
    %2101 = vmatpush1.msra.mxu0 0.0
    %2102 = vmatprep.subr.mxu0 0.0
    %2103 = vmatpush1.msra.mxu0 0.0
    %2104 = vmatprep.subr.mxu0 0.0
    %2105 = vmatpush1.msra.mxu0 0.0
    %2106 = vmatprep.subr.mxu0 0.0
    %2107 = vmatpush1.msra.mxu0 0.0
    %2108 = vmatprep.subr.mxu0 0.0
    %2109 = vmatpush1.msra.mxu0 0.0
    %2110 = vmatprep.subr.mxu0 0.0
    %2111 = vmatpush1.msra.mxu0 0.0
    %2112 = vmatprep.subr.mxu0 0.0
    %2113 = vmatpush1.msra.mxu0 0.0
    %2114 = vmatprep.subr.mxu0 0.0
    %2115 = vmatpush1.msra.mxu0 0.0
    %2116 = vmatprep.subr.mxu0 0.0
    %2117 = vmatpush1.msra.mxu0 0.0
    %2118 = vmatprep.subr.mxu0 0.0
    %2119 = vmatpush1.msra.mxu0 0.0
    %2120 = vmatprep.subr.mxu0 0.0
    %2121 = vmatpush1.msra.mxu0 0.0
    %2122 = vmatprep.subr.mxu0 0.0
    %2123 = vmatpush1.msra.mxu0 0.0
    %2124 = vmatprep.subr.mxu0 0.0
    %2125 = vmatpush1.msra.mxu0 0.0
    %2126 = vmatprep.subr.mxu0 0.0
    %2127 = vmatpush1.msra.mxu0 0.0
    %2128 = vmatprep.subr.mxu0 0.0
    %2129 = vmatpush1.msra.mxu0 0.0
    %2130 = vmatprep.subr.mxu0 0.0
    %2131 = vmatpush1.msra.mxu0 %v2092
    %2132 = vmatprep.subr.mxu0 0.0
    %2133 = vmatpush2.msra.mxu0 0.0
    %2134 = vmatprep.subr.mxu0 0.0
    %2135 = vmatpush2.msra.mxu0 0.0
    %2136 = vmatprep.subr.mxu0 0.0
    %2137 = vmatpush2.msra.mxu0 0.0
    %2138 = vmatprep.subr.mxu0 0.0
    %2139 = vmatpush2.msra.mxu0 0.0
    %2140 = vmatprep.subr.mxu0 0.0
    %2141 = vmatpush2.msra.mxu0 0.0
    %2142 = vmatprep.subr.mxu0 0.0
    %2143 = vmatpush2.msra.mxu0 0.0
    %2144 = vmatprep.subr.mxu0 0.0
    %2145 = vmatpush2.msra.mxu0 0.0
    %2146 = vmatprep.subr.mxu0 0.0
    %2147 = vmatpush2.msra.mxu0 0.0
    %2148 = vmatprep.subr.mxu0 0.0
    %2149 = vmatpush2.msra.mxu0 0.0
    %2150 = vmatprep.subr.mxu0 0.0
    %2151 = vmatpush2.msra.mxu0 0.0
    %2152 = vmatprep.subr.mxu0 0.0
    %2153 = vmatpush2.msra.mxu0 0.0
    %2154 = vmatprep.subr.mxu0 0.0
    %2155 = vmatpush2.msra.mxu0 0.0
    %2156 = vmatprep.subr.mxu0 0.0
    %2157 = vmatpush2.msra.mxu0 0.0
    %2158 = vmatprep.subr.mxu0 0.0
    %2159 = vmatpush2.msra.mxu0 0.0
    %2160 = vmatprep.subr.mxu0 0.0
    %2161 = vmatpush2.msra.mxu0 0.0
    %2162 = vmatprep.subr.mxu0 0.0
    %2163 = vmatpush2.msra.mxu0 0.0
    %2164 = vmatprep.mubr.f32.mxu0 0.0
    %2165 = vmatmul.mubr.f32.gmra.mxu0 %v2095
    %v2166 = vpop.f32.mrf.mxu0
    %v2167 = vadd.f32 0.0, %v2166
    %v2168 = vpop.f32.mrf.mxu0
    %2169 = vmatprep.mubr.f32.mxu0 0.0
    %2170 = vmatmul.mubr.f32.gmra.mxu0 %v2098
    %v2171 = vpop.f32.mrf.mxu0
    %v2172 = vadd.f32 0.0, %v2171
    %v2173 = vpop.f32.mrf.mxu0
    %2174 = vdwg.mxu0
    %2176 = vrot.lane.b32.xlu0 %v861, 96
    %v2177 = vpop.permute.xlu0 %2176
    %v2180 = vsel %vm631, %v1739, 0
    %v2183 = vsel %vm631, %v1741, 0
    %2185 = vmatprep.subr.mxu0 0.0
    %2186 = vmatpush1.msra.mxu0 0.0
    %2187 = vmatprep.subr.mxu0 0.0
    %2188 = vmatpush1.msra.mxu0 0.0
    %2189 = vmatprep.subr.mxu0 0.0
    %2190 = vmatpush1.msra.mxu0 0.0
    %2191 = vmatprep.subr.mxu0 0.0
    %2192 = vmatpush1.msra.mxu0 0.0
    %2193 = vmatprep.subr.mxu0 0.0
    %2194 = vmatpush1.msra.mxu0 0.0
    %2195 = vmatprep.subr.mxu0 0.0
    %2196 = vmatpush1.msra.mxu0 0.0
    %2197 = vmatprep.subr.mxu0 0.0
    %2198 = vmatpush1.msra.mxu0 0.0
    %2199 = vmatprep.subr.mxu0 0.0
    %2200 = vmatpush1.msra.mxu0 0.0
    %2201 = vmatprep.subr.mxu0 0.0
    %2202 = vmatpush1.msra.mxu0 0.0
    %2203 = vmatprep.subr.mxu0 0.0
    %2204 = vmatpush1.msra.mxu0 0.0
    %2205 = vmatprep.subr.mxu0 0.0
    %2206 = vmatpush1.msra.mxu0 0.0
    %2207 = vmatprep.subr.mxu0 0.0
    %2208 = vmatpush1.msra.mxu0 0.0
    %2209 = vmatprep.subr.mxu0 0.0
    %2210 = vmatpush1.msra.mxu0 0.0
    %2211 = vmatprep.subr.mxu0 0.0
    %2212 = vmatpush1.msra.mxu0 0.0
    %2213 = vmatprep.subr.mxu0 0.0
    %2214 = vmatpush1.msra.mxu0 0.0
    %2215 = vmatprep.subr.mxu0 0.0
    %2216 = vmatpush1.msra.mxu0 %v2177
    %2217 = vmatprep.subr.mxu0 0.0
    %2218 = vmatpush2.msra.mxu0 0.0
    %2219 = vmatprep.subr.mxu0 0.0
    %2220 = vmatpush2.msra.mxu0 0.0
    %2221 = vmatprep.subr.mxu0 0.0
    %2222 = vmatpush2.msra.mxu0 0.0
    %2223 = vmatprep.subr.mxu0 0.0
    %2224 = vmatpush2.msra.mxu0 0.0
    %2225 = vmatprep.subr.mxu0 0.0
    %2226 = vmatpush2.msra.mxu0 0.0
    %2227 = vmatprep.subr.mxu0 0.0
    %2228 = vmatpush2.msra.mxu0 0.0
    %2229 = vmatprep.subr.mxu0 0.0
    %2230 = vmatpush2.msra.mxu0 0.0
    %2231 = vmatprep.subr.mxu0 0.0
    %2232 = vmatpush2.msra.mxu0 0.0
    %2233 = vmatprep.subr.mxu0 0.0
    %2234 = vmatpush2.msra.mxu0 0.0
    %2235 = vmatprep.subr.mxu0 0.0
    %2236 = vmatpush2.msra.mxu0 0.0
    %2237 = vmatprep.subr.mxu0 0.0
    %2238 = vmatpush2.msra.mxu0 0.0
    %2239 = vmatprep.subr.mxu0 0.0
    %2240 = vmatpush2.msra.mxu0 0.0
    %2241 = vmatprep.subr.mxu0 0.0
    %2242 = vmatpush2.msra.mxu0 0.0
    %2243 = vmatprep.subr.mxu0 0.0
    %2244 = vmatpush2.msra.mxu0 0.0
    %2245 = vmatprep.subr.mxu0 0.0
    %2246 = vmatpush2.msra.mxu0 0.0
    %2247 = vmatprep.subr.mxu0 0.0
    %2248 = vmatpush2.msra.mxu0 0.0
    %2249 = vmatprep.mubr.f32.mxu0 0.0
    %2250 = vmatmul.mubr.f32.gmra.mxu0 %v2180
    %v2251 = vpop.f32.mrf.mxu0
    %v2252 = vadd.f32 0.0, %v2251
    %v2253 = vpop.f32.mrf.mxu0
    %2254 = vmatprep.mubr.f32.mxu0 0.0
    %2255 = vmatmul.mubr.f32.gmra.mxu0 %v2183
    %v2256 = vpop.f32.mrf.mxu0
    %v2257 = vadd.f32 0.0, %v2256
    %v2258 = vpop.f32.mrf.mxu0
    %2259 = vdwg.mxu0
    %2261 = vrot.lane.b32.xlu0 %v862, 96
    %v2262 = vpop.permute.xlu0 %2261
    %v2265 = vsel %vm631, %v1743, 0
    %v2268 = vsel %vm631, %v1745, 0
    %2270 = vmatprep.subr.mxu0 0.0
    %2271 = vmatpush1.msra.mxu0 0.0
    %2272 = vmatprep.subr.mxu0 0.0
    %2273 = vmatpush1.msra.mxu0 0.0
    %2274 = vmatprep.subr.mxu0 0.0
    %2275 = vmatpush1.msra.mxu0 0.0
    %2276 = vmatprep.subr.mxu0 0.0
    %2277 = vmatpush1.msra.mxu0 0.0
    %2278 = vmatprep.subr.mxu0 0.0
    %2279 = vmatpush1.msra.mxu0 0.0
    %2280 = vmatprep.subr.mxu0 0.0
    %2281 = vmatpush1.msra.mxu0 0.0
    %2282 = vmatprep.subr.mxu0 0.0
    %2283 = vmatpush1.msra.mxu0 0.0
    %2284 = vmatprep.subr.mxu0 0.0
    %2285 = vmatpush1.msra.mxu0 0.0
    %2286 = vmatprep.subr.mxu0 0.0
    %2287 = vmatpush1.msra.mxu0 0.0
    %2288 = vmatprep.subr.mxu0 0.0
    %2289 = vmatpush1.msra.mxu0 0.0
    %2290 = vmatprep.subr.mxu0 0.0
    %2291 = vmatpush1.msra.mxu0 0.0
    %2292 = vmatprep.subr.mxu0 0.0
    %2293 = vmatpush1.msra.mxu0 0.0
    %2294 = vmatprep.subr.mxu0 0.0
    %2295 = vmatpush1.msra.mxu0 0.0
    %2296 = vmatprep.subr.mxu0 0.0
    %2297 = vmatpush1.msra.mxu0 0.0
    %2298 = vmatprep.subr.mxu0 0.0
    %2299 = vmatpush1.msra.mxu0 0.0
    %2300 = vmatprep.subr.mxu0 0.0
    %2301 = vmatpush1.msra.mxu0 %v2262
    %2302 = vmatprep.subr.mxu0 0.0
    %2303 = vmatpush2.msra.mxu0 0.0
    %2304 = vmatprep.subr.mxu0 0.0
    %2305 = vmatpush2.msra.mxu0 0.0
    %2306 = vmatprep.subr.mxu0 0.0
    %2307 = vmatpush2.msra.mxu0 0.0
    %2308 = vmatprep.subr.mxu0 0.0
    %2309 = vmatpush2.msra.mxu0 0.0
    %2310 = vmatprep.subr.mxu0 0.0
    %2311 = vmatpush2.msra.mxu0 0.0
    %2312 = vmatprep.subr.mxu0 0.0
    %2313 = vmatpush2.msra.mxu0 0.0
    %2314 = vmatprep.subr.mxu0 0.0
    %2315 = vmatpush2.msra.mxu0 0.0
    %2316 = vmatprep.subr.mxu0 0.0
    %2317 = vmatpush2.msra.mxu0 0.0
    %2318 = vmatprep.subr.mxu0 0.0
    %2319 = vmatpush2.msra.mxu0 0.0
    %2320 = vmatprep.subr.mxu0 0.0
    %2321 = vmatpush2.msra.mxu0 0.0
    %2322 = vmatprep.subr.mxu0 0.0
    %2323 = vmatpush2.msra.mxu0 0.0
    %2324 = vmatprep.subr.mxu0 0.0
    %2325 = vmatpush2.msra.mxu0 0.0
    %2326 = vmatprep.subr.mxu0 0.0
    %2327 = vmatpush2.msra.mxu0 0.0
    %2328 = vmatprep.subr.mxu0 0.0
    %2329 = vmatpush2.msra.mxu0 0.0
    %2330 = vmatprep.subr.mxu0 0.0
    %2331 = vmatpush2.msra.mxu0 0.0
    %2332 = vmatprep.subr.mxu0 0.0
    %2333 = vmatpush2.msra.mxu0 0.0
    %2334 = vmatprep.mubr.f32.mxu0 0.0
    %2335 = vmatmul.mubr.f32.gmra.mxu0 %v2265
    %v2336 = vpop.f32.mrf.mxu0
    %v2337 = vadd.f32 0.0, %v2336
    %v2338 = vpop.f32.mrf.mxu0
    %2339 = vmatprep.mubr.f32.mxu0 0.0
    %2340 = vmatmul.mubr.f32.gmra.mxu0 %v2268
    %v2341 = vpop.f32.mrf.mxu0
    %v2342 = vadd.f32 0.0, %v2341
    %v2343 = vpop.f32.mrf.mxu0
    %2344 = vdwg.mxu0
    %2346 = vrot.lane.b32.xlu0 %v863, 96
    %v2347 = vpop.permute.xlu0 %2346
    %v2350 = vsel %vm631, %v1747, 0
    %v2353 = vsel %vm631, %v1749, 0
    %2355 = vmatprep.subr.mxu0 0.0
    %2356 = vmatpush1.msra.mxu0 0.0
    %2357 = vmatprep.subr.mxu0 0.0
    %2358 = vmatpush1.msra.mxu0 0.0
    %2359 = vmatprep.subr.mxu0 0.0
    %2360 = vmatpush1.msra.mxu0 0.0
    %2361 = vmatprep.subr.mxu0 0.0
    %2362 = vmatpush1.msra.mxu0 0.0
    %2363 = vmatprep.subr.mxu0 0.0
    %2364 = vmatpush1.msra.mxu0 0.0
    %2365 = vmatprep.subr.mxu0 0.0
    %2366 = vmatpush1.msra.mxu0 0.0
    %2367 = vmatprep.subr.mxu0 0.0
    %2368 = vmatpush1.msra.mxu0 0.0
    %2369 = vmatprep.subr.mxu0 0.0
    %2370 = vmatpush1.msra.mxu0 0.0
    %2371 = vmatprep.subr.mxu0 0.0
    %2372 = vmatpush1.msra.mxu0 0.0
    %2373 = vmatprep.subr.mxu0 0.0
    %2374 = vmatpush1.msra.mxu0 0.0
    %2375 = vmatprep.subr.mxu0 0.0
    %2376 = vmatpush1.msra.mxu0 0.0
    %2377 = vmatprep.subr.mxu0 0.0
    %2378 = vmatpush1.msra.mxu0 0.0
    %2379 = vmatprep.subr.mxu0 0.0
    %2380 = vmatpush1.msra.mxu0 0.0
    %2381 = vmatprep.subr.mxu0 0.0
    %2382 = vmatpush1.msra.mxu0 0.0
    %2383 = vmatprep.subr.mxu0 0.0
    %2384 = vmatpush1.msra.mxu0 0.0
    %2385 = vmatprep.subr.mxu0 0.0
    %2386 = vmatpush1.msra.mxu0 %v2347
    %2387 = vmatprep.subr.mxu0 0.0
    %2388 = vmatpush2.msra.mxu0 0.0
    %2389 = vmatprep.subr.mxu0 0.0
    %2390 = vmatpush2.msra.mxu0 0.0
    %2391 = vmatprep.subr.mxu0 0.0
    %2392 = vmatpush2.msra.mxu0 0.0
    %2393 = vmatprep.subr.mxu0 0.0
    %2394 = vmatpush2.msra.mxu0 0.0
    %2395 = vmatprep.subr.mxu0 0.0
    %2396 = vmatpush2.msra.mxu0 0.0
    %2397 = vmatprep.subr.mxu0 0.0
    %2398 = vmatpush2.msra.mxu0 0.0
    %2399 = vmatprep.subr.mxu0 0.0
    %2400 = vmatpush2.msra.mxu0 0.0
    %2401 = vmatprep.subr.mxu0 0.0
    %2402 = vmatpush2.msra.mxu0 0.0
    %2403 = vmatprep.subr.mxu0 0.0
    %2404 = vmatpush2.msra.mxu0 0.0
    %2405 = vmatprep.subr.mxu0 0.0
    %2406 = vmatpush2.msra.mxu0 0.0
    %2407 = vmatprep.subr.mxu0 0.0
    %2408 = vmatpush2.msra.mxu0 0.0
    %2409 = vmatprep.subr.mxu0 0.0
    %2410 = vmatpush2.msra.mxu0 0.0
    %2411 = vmatprep.subr.mxu0 0.0
    %2412 = vmatpush2.msra.mxu0 0.0
    %2413 = vmatprep.subr.mxu0 0.0
    %2414 = vmatpush2.msra.mxu0 0.0
    %2415 = vmatprep.subr.mxu0 0.0
    %2416 = vmatpush2.msra.mxu0 0.0
    %2417 = vmatprep.subr.mxu0 0.0
    %2418 = vmatpush2.msra.mxu0 0.0
    %2419 = vmatprep.mubr.f32.mxu0 0.0
    %2420 = vmatmul.mubr.f32.gmra.mxu0 %v2350
    %v2421 = vpop.f32.mrf.mxu0
    %v2422 = vadd.f32 0.0, %v2421
    %v2423 = vpop.f32.mrf.mxu0
    %2424 = vmatprep.mubr.f32.mxu0 0.0
    %2425 = vmatmul.mubr.f32.gmra.mxu0 %v2353
    %v2426 = vpop.f32.mrf.mxu0
    %v2427 = vadd.f32 0.0, %v2426
    %v2428 = vpop.f32.mrf.mxu0
    %2429 = vdwg.mxu0
    %v2430 = vsel %vm726, %v1827, 0.0
    %v2431 = vsel %vm726, %v1912, 0.0
    %v2432 = vadd.f32 %v2430, %v2431
    %v2433 = vsel %vm726, %v1997, 0.0
    %v2434 = vadd.f32 %v2432, %v2433
    %v2435 = vsel %vm726, %v2082, 0.0
    %v2436 = vadd.f32 %v2434, %v2435
    %v2437 = vsel %vm726, %v1832, 0.0
    %v2438 = vsel %vm726, %v1917, 0.0
    %v2439 = vadd.f32 %v2437, %v2438
    %v2440 = vsel %vm726, %v2002, 0.0
    %v2441 = vadd.f32 %v2439, %v2440
    %v2442 = vsel %vm726, %v2087, 0.0
    %v2443 = vadd.f32 %v2441, %v2442
    %v2444 = vsel %vm726, %v2167, 0.0
    %v2445 = vsel %vm726, %v2252, 0.0
    %v2446 = vadd.f32 %v2444, %v2445
    %v2447 = vsel %vm726, %v2337, 0.0
    %v2448 = vadd.f32 %v2446, %v2447
    %v2449 = vsel %vm726, %v2422, 0.0
    %v2450 = vadd.f32 %v2448, %v2449
    %v2451 = vsel %vm726, %v2172, 0.0
    %v2452 = vsel %vm726, %v2257, 0.0
    %v2453 = vadd.f32 %v2451, %v2452
    %v2454 = vsel %vm726, %v2342, 0.0
    %v2455 = vadd.f32 %v2453, %v2454
    %v2456 = vsel %vm726, %v2427, 0.0
    %v2457 = vadd.f32 %v2455, %v2456
    %v2458 = vld [vmem:[#allocation21] sm:$0xff]
    %v2459 = vld [vmem:[#allocation21 + $0x8] sm:$0xff]
    %v2460 = vld [vmem:[#allocation21 + $0x10] sm:$0xff]
    %v2461 = vld [vmem:[#allocation21 + $0x18] sm:$0xff]
    %v2462 = vld [vmem:[#allocation23] sm:$0x1]
    %v2464 = vlaneseq
    %v2465 = vshrl.u32 %v2464, 7
    %v2466 = vsub.s32 0, %v2465
    %v2467 = vrot.slane %v2462, %v2466
    %v2470 = vsel %vm726, %v2436, 0
    %v2473 = vsel %vm726, %v2443, 0
    %v2476 = vsel %vm726, %v2450, 0
    %v2479 = vsel %vm726, %v2457, 0
    %2481 = vmatprep.subr.mxu0 0.0
    %2482 = vmatpush1.msra.mxu0 0.0
    %2483 = vmatprep.subr.mxu0 0.0
    %2484 = vmatpush1.msra.mxu0 0.0
    %2485 = vmatprep.subr.mxu0 0.0
    %2486 = vmatpush1.msra.mxu0 0.0
    %2487 = vmatprep.subr.mxu0 0.0
    %2488 = vmatpush1.msra.mxu0 0.0
    %2489 = vmatprep.subr.mxu0 0.0
    %2490 = vmatpush1.msra.mxu0 0.0
    %2491 = vmatprep.subr.mxu0 0.0
    %2492 = vmatpush1.msra.mxu0 0.0
    %2493 = vmatprep.subr.mxu0 0.0
    %2494 = vmatpush1.msra.mxu0 0.0
    %2495 = vmatprep.subr.mxu0 0.0
    %2496 = vmatpush1.msra.mxu0 0.0
    %2497 = vmatprep.subr.mxu0 0.0
    %2498 = vmatpush1.msra.mxu0 0.0
    %2499 = vmatprep.subr.mxu0 0.0
    %2500 = vmatpush1.msra.mxu0 0.0
    %2501 = vmatprep.subr.mxu0 0.0
    %2502 = vmatpush1.msra.mxu0 0.0
    %2503 = vmatprep.subr.mxu0 0.0
    %2504 = vmatpush1.msra.mxu0 0.0
    %2505 = vmatprep.subr.mxu0 0.0
    %2506 = vmatpush1.msra.mxu0 %v2461
    %2507 = vmatprep.subr.mxu0 0.0
    %2508 = vmatpush1.msra.mxu0 %v2460
    %2509 = vmatprep.subr.mxu0 0.0
    %2510 = vmatpush1.msra.mxu0 %v2459
    %2511 = vmatprep.subr.mxu0 0.0
    %2512 = vmatpush1.msra.mxu0 %v2458
    %2513 = vmatprep.subr.mxu0 0.0
    %2514 = vmatpush2.msra.mxu0 0.0
    %2515 = vmatprep.subr.mxu0 0.0
    %2516 = vmatpush2.msra.mxu0 0.0
    %2517 = vmatprep.subr.mxu0 0.0
    %2518 = vmatpush2.msra.mxu0 0.0
    %2519 = vmatprep.subr.mxu0 0.0
    %2520 = vmatpush2.msra.mxu0 0.0
    %2521 = vmatprep.subr.mxu0 0.0
    %2522 = vmatpush2.msra.mxu0 0.0
    %2523 = vmatprep.subr.mxu0 0.0
    %2524 = vmatpush2.msra.mxu0 0.0
    %2525 = vmatprep.subr.mxu0 0.0
    %2526 = vmatpush2.msra.mxu0 0.0
    %2527 = vmatprep.subr.mxu0 0.0
    %2528 = vmatpush2.msra.mxu0 0.0
    %2529 = vmatprep.subr.mxu0 0.0
    %2530 = vmatpush2.msra.mxu0 0.0
    %2531 = vmatprep.subr.mxu0 0.0
    %2532 = vmatpush2.msra.mxu0 0.0
    %2533 = vmatprep.subr.mxu0 0.0
    %2534 = vmatpush2.msra.mxu0 0.0
    %2535 = vmatprep.subr.mxu0 0.0
    %2536 = vmatpush2.msra.mxu0 0.0
    %2537 = vmatprep.subr.mxu0 0.0
    %2538 = vmatpush2.msra.mxu0 0.0
    %2539 = vmatprep.subr.mxu0 0.0
    %2540 = vmatpush2.msra.mxu0 0.0
    %2541 = vmatprep.subr.mxu0 0.0
    %2542 = vmatpush2.msra.mxu0 0.0
    %2543 = vmatprep.subr.mxu0 0.0
    %2544 = vmatpush2.msra.mxu0 0.0
    %2545 = vmatprep.mubr.f32.mxu0 0.0
    %2546 = vmatmul.mubr.f32.gmra.mxu0 %v2470
    %v2547 = vpop.f32.mrf.mxu0
    %v2548 = vadd.f32 %v2467, %v2547
    %v2549 = vpop.f32.mrf.mxu0
    %2550 = vmatprep.mubr.f32.mxu0 0.0
    %2551 = vmatmul.mubr.f32.gmra.mxu0 %v2473
    %v2552 = vpop.f32.mrf.mxu0
    %v2553 = vadd.f32 %v2467, %v2552
    %v2554 = vpop.f32.mrf.mxu0
    %2555 = vmatprep.mubr.f32.mxu0 0.0
    %2556 = vmatmul.mubr.f32.gmra.mxu0 %v2476
    %v2557 = vpop.f32.mrf.mxu0
    %v2558 = vadd.f32 %v2467, %v2557
    %v2559 = vpop.f32.mrf.mxu0
    %2560 = vmatprep.mubr.f32.mxu0 0.0
    %2561 = vmatmul.mubr.f32.gmra.mxu0 %v2479
    %v2562 = vpop.f32.mrf.mxu0
    %v2563 = vadd.f32 %v2467, %v2562
    %v2564 = vpop.f32.mrf.mxu0
    %2565 = vdwg.mxu0
    %v2566 = vsel %vm726, %v713, 0.0
    %v2567 = vrot.slane %v2566, 4
    %v2568 = vadd.f32 %v2566, %v2567
    %v2569 = vrot.slane %v2568, 2
    %v2570 = vadd.f32 %v2568, %v2569
    %v2571 = vrot.slane %v2570, 1
    %v2572 = vadd.f32 %v2570, %v2571
    %v2573 = vsel %vm726, %v714, 0.0
    %v2574 = vrot.slane %v2573, 4
    %v2575 = vadd.f32 %v2573, %v2574
    %v2576 = vrot.slane %v2575, 2
    %v2577 = vadd.f32 %v2575, %v2576
    %v2578 = vrot.slane %v2577, 1
    %v2579 = vadd.f32 %v2577, %v2578
    %v2580 = vld [vmem:[#allocation6] sm:$0x3]
    %v2581 = vld [vmem:[#allocation24] sm:$0xf]
    %v2582 = vld [vmem:[#allocation26] sm:$0x1]
    %v2584 = vlaneseq
    %v2585 = vshrl.u32 %v2584, 7
    %v2586 = vsub.s32 0, %v2585
    %v2587 = vrot.slane %v2582, %v2586
    %vm2589 = vcmask 31744
    %v2591 = vsel %vm2589, %v2580, 0
    %v2594 = vsel %vm546, %v2581, 0
    %2596 = vmatprep.subr.mxu0 0.0
    %2597 = vmatpush1.msra.mxu0 0.0
    %2598 = vmatprep.subr.mxu0 0.0
    %2599 = vmatpush1.msra.mxu0 0.0
    %2600 = vmatprep.subr.mxu0 0.0
    %2601 = vmatpush1.msra.mxu0 0.0
    %2602 = vmatprep.subr.mxu0 0.0
    %2603 = vmatpush1.msra.mxu0 0.0
    %2604 = vmatprep.subr.mxu0 0.0
    %2605 = vmatpush1.msra.mxu0 0.0
    %2606 = vmatprep.subr.mxu0 0.0
    %2607 = vmatpush1.msra.mxu0 0.0
    %2608 = vmatprep.subr.mxu0 0.0
    %2609 = vmatpush1.msra.mxu0 0.0
    %2610 = vmatprep.subr.mxu0 0.0
    %2611 = vmatpush1.msra.mxu0 0.0
    %2612 = vmatprep.subr.mxu0 0.0
    %2613 = vmatpush1.msra.mxu0 0.0
    %2614 = vmatprep.subr.mxu0 0.0
    %2615 = vmatpush1.msra.mxu0 0.0
    %2616 = vmatprep.subr.mxu0 0.0
    %2617 = vmatpush1.msra.mxu0 0.0
    %2618 = vmatprep.subr.mxu0 0.0
    %2619 = vmatpush1.msra.mxu0 0.0
    %2620 = vmatprep.subr.mxu0 0.0
    %2621 = vmatpush1.msra.mxu0 0.0
    %2622 = vmatprep.subr.mxu0 0.0
    %2623 = vmatpush1.msra.mxu0 0.0
    %2624 = vmatprep.subr.mxu0 0.0
    %2625 = vmatpush1.msra.mxu0 0.0
    %2626 = vmatprep.subr.mxu0 0.0
    %2627 = vmatpush1.msra.mxu0 %v2594
    %2628 = vmatprep.subr.mxu0 0.0
    %2629 = vmatpush2.msra.mxu0 0.0
    %2630 = vmatprep.subr.mxu0 0.0
    %2631 = vmatpush2.msra.mxu0 0.0
    %2632 = vmatprep.subr.mxu0 0.0
    %2633 = vmatpush2.msra.mxu0 0.0
    %2634 = vmatprep.subr.mxu0 0.0
    %2635 = vmatpush2.msra.mxu0 0.0
    %2636 = vmatprep.subr.mxu0 0.0
    %2637 = vmatpush2.msra.mxu0 0.0
    %2638 = vmatprep.subr.mxu0 0.0
    %2639 = vmatpush2.msra.mxu0 0.0
    %2640 = vmatprep.subr.mxu0 0.0
    %2641 = vmatpush2.msra.mxu0 0.0
    %2642 = vmatprep.subr.mxu0 0.0
    %2643 = vmatpush2.msra.mxu0 0.0
    %2644 = vmatprep.subr.mxu0 0.0
    %2645 = vmatpush2.msra.mxu0 0.0
    %2646 = vmatprep.subr.mxu0 0.0
    %2647 = vmatpush2.msra.mxu0 0.0
    %2648 = vmatprep.subr.mxu0 0.0
    %2649 = vmatpush2.msra.mxu0 0.0
    %2650 = vmatprep.subr.mxu0 0.0
    %2651 = vmatpush2.msra.mxu0 0.0
    %2652 = vmatprep.subr.mxu0 0.0
    %2653 = vmatpush2.msra.mxu0 0.0
    %2654 = vmatprep.subr.mxu0 0.0
    %2655 = vmatpush2.msra.mxu0 0.0
    %2656 = vmatprep.subr.mxu0 0.0
    %2657 = vmatpush2.msra.mxu0 0.0
    %2658 = vmatprep.subr.mxu0 0.0
    %2659 = vmatpush2.msra.mxu0 0.0
    %2660 = vmatprep.mubr.f32.mxu0 0.0
    %2661 = vmatmul.mubr.f32.gmra.mxu0 %v2591
    %v2662 = vpop.f32.mrf.mxu0
    %v2663 = vadd.f32 %v2587, %v2662
    %v2664 = vpop.f32.mrf.mxu0
    %2665 = vdwg.mxu0
    %v2666 = vmax.f32 %v2572, 0.0
    %v2667 = vmax.f32 %v2579, 0.0
    %v2668 = vld [vmem:[#allocation29] sm:$0xff]
    %v2669 = vld [vmem:[#allocation29 + $0x8] sm:$0xff]
    %v2670 = vld [vmem:[#allocation29 + $0x10] sm:$0xff]
    %v2671 = vld [vmem:[#allocation29 + $0x18] sm:$0xff]
    %v2672 = vmax.f32 %v620, 0.0
    %v2673 = vld [vmem:[%s22] sm:$0xff]
    %v2674 = vld [vmem:[%s22 + $0x8] sm:$0xff]
    %v2675 = vld [vmem:[%s22 + $0x10] sm:$0xff]
    %v2676 = vld [vmem:[%s22 + $0x18] sm:$0xff]
    %v2677 = vld [vmem:[%s22 + $0x20] sm:$0xff]
    %v2678 = vld [vmem:[%s22 + $0x28] sm:$0xff]
    %v2679 = vld [vmem:[%s22 + $0x30] sm:$0x3]
    %vm2680 = vcmask 408576
    %v2682 = vsel %vm2680, %v2672, 0
    %vm2684 = vcmask 1041408
    %v2686 = vsel %vm2684, %v2679, 0
    %2688 = vmatprep.subr.mxu0 0.0
    %2689 = vmatpush1.msra.mxu0 0.0
    %2690 = vmatprep.subr.mxu0 0.0
    %2691 = vmatpush1.msra.mxu0 0.0
    %2692 = vmatprep.subr.mxu0 0.0
    %2693 = vmatpush1.msra.mxu0 0.0
    %2694 = vmatprep.subr.mxu0 0.0
    %2695 = vmatpush1.msra.mxu0 0.0
    %2696 = vmatprep.subr.mxu0 0.0
    %2697 = vmatpush1.msra.mxu0 0.0
    %2698 = vmatprep.subr.mxu0 0.0
    %2699 = vmatpush1.msra.mxu0 0.0
    %2700 = vmatprep.subr.mxu0 0.0
    %2701 = vmatpush1.msra.mxu0 0.0
    %2702 = vmatprep.subr.mxu0 0.0
    %2703 = vmatpush1.msra.mxu0 0.0
    %2704 = vmatprep.subr.mxu0 0.0
    %2705 = vmatpush1.msra.mxu0 0.0
    %2706 = vmatprep.subr.mxu0 0.0
    %2707 = vmatpush1.msra.mxu0 %v2686
    %2708 = vmatprep.subr.mxu0 0.0
    %2709 = vmatpush1.msra.mxu0 %v2678
    %2710 = vmatprep.subr.mxu0 0.0
    %2711 = vmatpush1.msra.mxu0 %v2677
    %2712 = vmatprep.subr.mxu0 0.0
    %2713 = vmatpush1.msra.mxu0 %v2676
    %2714 = vmatprep.subr.mxu0 0.0
    %2715 = vmatpush1.msra.mxu0 %v2675
    %2716 = vmatprep.subr.mxu0 0.0
    %2717 = vmatpush1.msra.mxu0 %v2674
    %2718 = vmatprep.subr.mxu0 0.0
    %2719 = vmatpush1.msra.mxu0 %v2673
    %2720 = vmatprep.subr.mxu0 0.0
    %2721 = vmatpush2.msra.mxu0 0.0
    %2722 = vmatprep.subr.mxu0 0.0
    %2723 = vmatpush2.msra.mxu0 0.0
    %2724 = vmatprep.subr.mxu0 0.0
    %2725 = vmatpush2.msra.mxu0 0.0
    %2726 = vmatprep.subr.mxu0 0.0
    %2727 = vmatpush2.msra.mxu0 0.0
    %2728 = vmatprep.subr.mxu0 0.0
    %2729 = vmatpush2.msra.mxu0 0.0
    %2730 = vmatprep.subr.mxu0 0.0
    %2731 = vmatpush2.msra.mxu0 0.0
    %2732 = vmatprep.subr.mxu0 0.0
    %2733 = vmatpush2.msra.mxu0 0.0
    %2734 = vmatprep.subr.mxu0 0.0
    %2735 = vmatpush2.msra.mxu0 0.0
    %2736 = vmatprep.subr.mxu0 0.0
    %2737 = vmatpush2.msra.mxu0 0.0
    %2738 = vmatprep.subr.mxu0 0.0
    %2739 = vmatpush2.msra.mxu0 0.0
    %2740 = vmatprep.subr.mxu0 0.0
    %2741 = vmatpush2.msra.mxu0 0.0
    %2742 = vmatprep.subr.mxu0 0.0
    %2743 = vmatpush2.msra.mxu0 0.0
    %2744 = vmatprep.subr.mxu0 0.0
    %2745 = vmatpush2.msra.mxu0 0.0
    %2746 = vmatprep.subr.mxu0 0.0
    %2747 = vmatpush2.msra.mxu0 0.0
    %2748 = vmatprep.subr.mxu0 0.0
    %2749 = vmatpush2.msra.mxu0 0.0
    %2750 = vmatprep.subr.mxu0 0.0
    %2751 = vmatpush2.msra.mxu0 0.0
    %2752 = vmatprep.mubr.f32.mxu0 0.0
    %2753 = vmatmul.mubr.f32.gmra.mxu0 %v2682
    %v2754 = vpop.f32.mrf.mxu0
    %v2755 = vadd.f32 0.0, %v2754
    %v2756 = vpop.f32.mrf.mxu0
    %2757 = vdwg.mxu0
    %vm2760 = vcmask 1041409
    %v2761 = vsel %vm2760, %v2667, %v2666
    %v2762 = vsel %vm726, %v2761, 0
    %2764 = vmatprep.subr.mxu0 0.0
    %2765 = vmatpush1.msra.mxu0 0.0
    %2766 = vmatprep.subr.mxu0 0.0
    %2767 = vmatpush1.msra.mxu0 0.0
    %2768 = vmatprep.subr.mxu0 0.0
    %2769 = vmatpush1.msra.mxu0 0.0
    %2770 = vmatprep.subr.mxu0 0.0
    %2771 = vmatpush1.msra.mxu0 0.0
    %2772 = vmatprep.subr.mxu0 0.0
    %2773 = vmatpush1.msra.mxu0 0.0
    %2774 = vmatprep.subr.mxu0 0.0
    %2775 = vmatpush1.msra.mxu0 0.0
    %2776 = vmatprep.subr.mxu0 0.0
    %2777 = vmatpush1.msra.mxu0 0.0
    %2778 = vmatprep.subr.mxu0 0.0
    %2779 = vmatpush1.msra.mxu0 0.0
    %2780 = vmatprep.subr.mxu0 0.0
    %2781 = vmatpush1.msra.mxu0 0.0
    %2782 = vmatprep.subr.mxu0 0.0
    %2783 = vmatpush1.msra.mxu0 0.0
    %2784 = vmatprep.subr.mxu0 0.0
    %2785 = vmatpush1.msra.mxu0 0.0
    %2786 = vmatprep.subr.mxu0 0.0
    %2787 = vmatpush1.msra.mxu0 0.0
    %2788 = vmatprep.subr.mxu0 0.0
    %2789 = vmatpush1.msra.mxu0 %v2671
    %2790 = vmatprep.subr.mxu0 0.0
    %2791 = vmatpush1.msra.mxu0 %v2670
    %2792 = vmatprep.subr.mxu0 0.0
    %2793 = vmatpush1.msra.mxu0 %v2669
    %2794 = vmatprep.subr.mxu0 0.0
    %2795 = vmatpush1.msra.mxu0 %v2668
    %2796 = vmatprep.subr.mxu0 0.0
    %2797 = vmatpush2.msra.mxu0 0.0
    %2798 = vmatprep.subr.mxu0 0.0
    %2799 = vmatpush2.msra.mxu0 0.0
    %2800 = vmatprep.subr.mxu0 0.0
    %2801 = vmatpush2.msra.mxu0 0.0
    %2802 = vmatprep.subr.mxu0 0.0
    %2803 = vmatpush2.msra.mxu0 0.0
    %2804 = vmatprep.subr.mxu0 0.0
    %2805 = vmatpush2.msra.mxu0 0.0
    %2806 = vmatprep.subr.mxu0 0.0
    %2807 = vmatpush2.msra.mxu0 0.0
    %2808 = vmatprep.subr.mxu0 0.0
    %2809 = vmatpush2.msra.mxu0 0.0
    %2810 = vmatprep.subr.mxu0 0.0
    %2811 = vmatpush2.msra.mxu0 0.0
    %2812 = vmatprep.subr.mxu0 0.0
    %2813 = vmatpush2.msra.mxu0 0.0
    %2814 = vmatprep.subr.mxu0 0.0
    %2815 = vmatpush2.msra.mxu0 0.0
    %2816 = vmatprep.subr.mxu0 0.0
    %2817 = vmatpush2.msra.mxu0 0.0
    %2818 = vmatprep.subr.mxu0 0.0
    %2819 = vmatpush2.msra.mxu0 0.0
    %2820 = vmatprep.subr.mxu0 0.0
    %2821 = vmatpush2.msra.mxu0 0.0
    %2822 = vmatprep.subr.mxu0 0.0
    %2823 = vmatpush2.msra.mxu0 0.0
    %2824 = vmatprep.subr.mxu0 0.0
    %2825 = vmatpush2.msra.mxu0 0.0
    %2826 = vmatprep.subr.mxu0 0.0
    %2827 = vmatpush2.msra.mxu0 0.0
    %2828 = vmatprep.mubr.f32.mxu0 0.0
    %2829 = vmatmul.mubr.f32.gmra.mxu0 %v2762
    %v2830 = vpop.f32.mrf.mxu0
    %v2831 = vadd.f32 %v2755, %v2830
    %v2832 = vpop.f32.mrf.mxu0
    %2833 = vdwg.mxu0
    %v2834 = vmax.f32 %v2663, 0.0
    %v2835 = vld [vmem:[%s23] sm:$0xf]
    %v2837 = vsel %vm2589, %v2834, 0
    %v2840 = vsel %vm546, %v2835, 0
    %2842 = vmatprep.subr.mxu0 0.0
    %2843 = vmatpush1.msra.mxu0 0.0
    %2844 = vmatprep.subr.mxu0 0.0
    %2845 = vmatpush1.msra.mxu0 0.0
    %2846 = vmatprep.subr.mxu0 0.0
    %2847 = vmatpush1.msra.mxu0 0.0
    %2848 = vmatprep.subr.mxu0 0.0
    %2849 = vmatpush1.msra.mxu0 0.0
    %2850 = vmatprep.subr.mxu0 0.0
    %2851 = vmatpush1.msra.mxu0 0.0
    %2852 = vmatprep.subr.mxu0 0.0
    %2853 = vmatpush1.msra.mxu0 0.0
    %2854 = vmatprep.subr.mxu0 0.0
    %2855 = vmatpush1.msra.mxu0 0.0
    %2856 = vmatprep.subr.mxu0 0.0
    %2857 = vmatpush1.msra.mxu0 0.0
    %2858 = vmatprep.subr.mxu0 0.0
    %2859 = vmatpush1.msra.mxu0 0.0
    %2860 = vmatprep.subr.mxu0 0.0
    %2861 = vmatpush1.msra.mxu0 0.0
    %2862 = vmatprep.subr.mxu0 0.0
    %2863 = vmatpush1.msra.mxu0 0.0
    %2864 = vmatprep.subr.mxu0 0.0
    %2865 = vmatpush1.msra.mxu0 0.0
    %2866 = vmatprep.subr.mxu0 0.0
    %2867 = vmatpush1.msra.mxu0 0.0
    %2868 = vmatprep.subr.mxu0 0.0
    %2869 = vmatpush1.msra.mxu0 0.0
    %2870 = vmatprep.subr.mxu0 0.0
    %2871 = vmatpush1.msra.mxu0 0.0
    %2872 = vmatprep.subr.mxu0 0.0
    %2873 = vmatpush1.msra.mxu0 %v2840
    %2874 = vmatprep.subr.mxu0 0.0
    %2875 = vmatpush2.msra.mxu0 0.0
    %2876 = vmatprep.subr.mxu0 0.0
    %2877 = vmatpush2.msra.mxu0 0.0
    %2878 = vmatprep.subr.mxu0 0.0
    %2879 = vmatpush2.msra.mxu0 0.0
    %2880 = vmatprep.subr.mxu0 0.0
    %2881 = vmatpush2.msra.mxu0 0.0
    %2882 = vmatprep.subr.mxu0 0.0
    %2883 = vmatpush2.msra.mxu0 0.0
    %2884 = vmatprep.subr.mxu0 0.0
    %2885 = vmatpush2.msra.mxu0 0.0
    %2886 = vmatprep.subr.mxu0 0.0
    %2887 = vmatpush2.msra.mxu0 0.0
    %2888 = vmatprep.subr.mxu0 0.0
    %2889 = vmatpush2.msra.mxu0 0.0
    %2890 = vmatprep.subr.mxu0 0.0
    %2891 = vmatpush2.msra.mxu0 0.0
    %2892 = vmatprep.subr.mxu0 0.0
    %2893 = vmatpush2.msra.mxu0 0.0
    %2894 = vmatprep.subr.mxu0 0.0
    %2895 = vmatpush2.msra.mxu0 0.0
    %2896 = vmatprep.subr.mxu0 0.0
    %2897 = vmatpush2.msra.mxu0 0.0
    %2898 = vmatprep.subr.mxu0 0.0
    %2899 = vmatpush2.msra.mxu0 0.0
    %2900 = vmatprep.subr.mxu0 0.0
    %2901 = vmatpush2.msra.mxu0 0.0
    %2902 = vmatprep.subr.mxu0 0.0
    %2903 = vmatpush2.msra.mxu0 0.0
    %2904 = vmatprep.subr.mxu0 0.0
    %2905 = vmatpush2.msra.mxu0 0.0
    %2906 = vmatprep.mubr.f32.mxu0 0.0
    %2907 = vmatmul.mubr.f32.gmra.mxu0 %v2837
    %v2908 = vpop.f32.mrf.mxu0
    %v2909 = vadd.f32 0.0, %v2908
    %v2910 = vpop.f32.mrf.mxu0
    %2911 = vdwg.mxu0
    %v2912 = vadd.f32 %v2831, %v2909
    %v2913 = vld [vmem:[#allocation30] sm:$0x1]
    %v2915 = vlaneseq
    %v2916 = vshrl.u32 %v2915, 7
    %v2917 = vsub.s32 0, %v2916
    %v2918 = vrot.slane %v2913, %v2917
    %v2920 = vadd.f32 %v2912, %v2918
    %v2921 = vlaneseq
    %v2922 = vshrl.u32 %v2921, 7
    %v2923 = vsub.s32 0, %v2922
    %v2924 = vrot.slane %v2920, %v2923
    %v2925 = vlaneseq
    %v2926 = vshrl.u32 %v2925, 7
    %v2927 = vsub.s32 1, %v2926
    %v2928 = vrot.slane %v2920, %v2927
    %v2929 = vmax.f32 %v2548, 0.0
    %v2930 = vmax.f32 %v2553, 0.0
    %v2931 = vmax.f32 %v2558, 0.0
    %v2932 = vmax.f32 %v2563, 0.0
    %v2933 = vld [vmem:[#allocation27] sm:$0xff]
    %v2934 = vld [vmem:[#allocation27 + $0x8] sm:$0xff]
    %v2935 = vld [vmem:[#allocation27 + $0x10] sm:$0xff]
    %v2936 = vld [vmem:[#allocation27 + $0x18] sm:$0xff]
    %v2938 = vsel %vm726, %v2929, 0
    %v2941 = vsel %vm726, %v2930, 0
    %v2944 = vsel %vm726, %v2931, 0
    %v2947 = vsel %vm726, %v2932, 0
    %2949 = vmatprep.subr.mxu0 0.0
    %2950 = vmatpush1.msra.mxu0 0.0
    %2951 = vmatprep.subr.mxu0 0.0
    %2952 = vmatpush1.msra.mxu0 0.0
    %2953 = vmatprep.subr.mxu0 0.0
    %2954 = vmatpush1.msra.mxu0 0.0
    %2955 = vmatprep.subr.mxu0 0.0
    %2956 = vmatpush1.msra.mxu0 0.0
    %2957 = vmatprep.subr.mxu0 0.0
    %2958 = vmatpush1.msra.mxu0 0.0
    %2959 = vmatprep.subr.mxu0 0.0
    %2960 = vmatpush1.msra.mxu0 0.0
    %2961 = vmatprep.subr.mxu0 0.0
    %2962 = vmatpush1.msra.mxu0 0.0
    %2963 = vmatprep.subr.mxu0 0.0
    %2964 = vmatpush1.msra.mxu0 0.0
    %2965 = vmatprep.subr.mxu0 0.0
    %2966 = vmatpush1.msra.mxu0 0.0
    %2967 = vmatprep.subr.mxu0 0.0
    %2968 = vmatpush1.msra.mxu0 0.0
    %2969 = vmatprep.subr.mxu0 0.0
    %2970 = vmatpush1.msra.mxu0 0.0
    %2971 = vmatprep.subr.mxu0 0.0
    %2972 = vmatpush1.msra.mxu0 0.0
    %2973 = vmatprep.subr.mxu0 0.0
    %2974 = vmatpush1.msra.mxu0 %v2936
    %2975 = vmatprep.subr.mxu0 0.0
    %2976 = vmatpush1.msra.mxu0 %v2935
    %2977 = vmatprep.subr.mxu0 0.0
    %2978 = vmatpush1.msra.mxu0 %v2934
    %2979 = vmatprep.subr.mxu0 0.0
    %2980 = vmatpush1.msra.mxu0 %v2933
    %2981 = vmatprep.subr.mxu0 0.0
    %2982 = vmatpush2.msra.mxu0 0.0
    %2983 = vmatprep.subr.mxu0 0.0
    %2984 = vmatpush2.msra.mxu0 0.0
    %2985 = vmatprep.subr.mxu0 0.0
    %2986 = vmatpush2.msra.mxu0 0.0
    %2987 = vmatprep.subr.mxu0 0.0
    %2988 = vmatpush2.msra.mxu0 0.0
    %2989 = vmatprep.subr.mxu0 0.0
    %2990 = vmatpush2.msra.mxu0 0.0
    %2991 = vmatprep.subr.mxu0 0.0
    %2992 = vmatpush2.msra.mxu0 0.0
    %2993 = vmatprep.subr.mxu0 0.0
    %2994 = vmatpush2.msra.mxu0 0.0
    %2995 = vmatprep.subr.mxu0 0.0
    %2996 = vmatpush2.msra.mxu0 0.0
    %2997 = vmatprep.subr.mxu0 0.0
    %2998 = vmatpush2.msra.mxu0 0.0
    %2999 = vmatprep.subr.mxu0 0.0
    %3000 = vmatpush2.msra.mxu0 0.0
    %3001 = vmatprep.subr.mxu0 0.0
    %3002 = vmatpush2.msra.mxu0 0.0
    %3003 = vmatprep.subr.mxu0 0.0
    %3004 = vmatpush2.msra.mxu0 0.0
    %3005 = vmatprep.subr.mxu0 0.0
    %3006 = vmatpush2.msra.mxu0 0.0
    %3007 = vmatprep.subr.mxu0 0.0
    %3008 = vmatpush2.msra.mxu0 0.0
    %3009 = vmatprep.subr.mxu0 0.0
    %3010 = vmatpush2.msra.mxu0 0.0
    %3011 = vmatprep.subr.mxu0 0.0
    %3012 = vmatpush2.msra.mxu0 0.0
    %3013 = vmatprep.mubr.f32.mxu0 0.0
    %3014 = vmatmul.mubr.f32.gmra.mxu0 %v2938
    %v3015 = vpop.f32.mrf.mxu0
    %v3016 = vadd.f32 %v2924, %v3015
    %v3017 = vpop.f32.mrf.mxu0
    %3018 = vmatprep.mubr.f32.mxu0 0.0
    %3019 = vmatmul.mubr.f32.gmra.mxu0 %v2941
    %v3020 = vpop.f32.mrf.mxu0
    %v3021 = vadd.f32 %v2924, %v3020
    %v3022 = vpop.f32.mrf.mxu0
    %3023 = vmatprep.mubr.f32.mxu0 0.0
    %3024 = vmatmul.mubr.f32.gmra.mxu0 %v2944
    %v3025 = vpop.f32.mrf.mxu0
    %v3026 = vadd.f32 %v2928, %v3025
    %v3027 = vpop.f32.mrf.mxu0
    %3028 = vmatprep.mubr.f32.mxu0 0.0
    %3029 = vmatmul.mubr.f32.gmra.mxu0 %v2947
    %v3030 = vpop.f32.mrf.mxu0
    %v3031 = vadd.f32 %v2928, %v3030
    %v3032 = vpop.f32.mrf.mxu0
    %3033 = vdwg.mxu0
    %v3034 = vmax.f32 %v3016, 0.0
    %v3035 = vmax.f32 %v3021, 0.0
    %v3036 = vmax.f32 %v3026, 0.0
    %v3037 = vmax.f32 %v3031, 0.0
    %v3038 = vld [vmem:[%s25] sm:$0x1]
    %v3039 = vld [vmem:[#allocation2] sm:$0x1]
    %3041 = vset.pattern.permute.xlu0 0
    %3042 = vperm.xlu0 %3041, %v3039
    %v3043 = vpop.permute.xlu0 %3042
    %v3045 = vlaneseq
    %v3046 = vshrl.u32 %v3045, 7
    %v3047 = vsub.s32 0, %v3046
    %v3048 = vrot.slane %v3043, %v3047
    %v3050 = vsel %vm726, %v3038, 0
    %v3053 = vsel %vm726, %v3034, 0
    %v3056 = vsel %vm726, %v3035, 0
    %v3059 = vsel %vm726, %v3036, 0
    %v3062 = vsel %vm726, %v3037, 0
    %3064 = vmatprep.subr.mxu0 0.0
    %3065 = vmatpush1.xpose.msra.mxu0 0.0
    %3066 = vmatprep.subr.mxu0 0.0
    %3067 = vmatpush1.xpose.msra.mxu0 0.0
    %3068 = vmatprep.subr.mxu0 0.0
    %3069 = vmatpush1.xpose.msra.mxu0 0.0
    %3070 = vmatprep.subr.mxu0 0.0
    %3071 = vmatpush1.xpose.msra.mxu0 0.0
    %3072 = vmatprep.subr.mxu0 0.0
    %3073 = vmatpush1.xpose.msra.mxu0 0.0
    %3074 = vmatprep.subr.mxu0 0.0
    %3075 = vmatpush1.xpose.msra.mxu0 0.0
    %3076 = vmatprep.subr.mxu0 0.0
    %3077 = vmatpush1.xpose.msra.mxu0 0.0
    %3078 = vmatprep.subr.mxu0 0.0
    %3079 = vmatpush1.xpose.msra.mxu0 0.0
    %3080 = vmatprep.subr.mxu0 0.0
    %3081 = vmatpush1.xpose.msra.mxu0 0.0
    %3082 = vmatprep.subr.mxu0 0.0
    %3083 = vmatpush1.xpose.msra.mxu0 0.0
    %3084 = vmatprep.subr.mxu0 0.0
    %3085 = vmatpush1.xpose.msra.mxu0 0.0
    %3086 = vmatprep.subr.mxu0 0.0
    %3087 = vmatpush1.xpose.msra.mxu0 0.0
    %3088 = vmatprep.subr.mxu0 0.0
    %3089 = vmatpush1.xpose.msra.mxu0 %v3062
    %3090 = vmatprep.subr.mxu0 0.0
    %3091 = vmatpush1.xpose.msra.mxu0 %v3059
    %3092 = vmatprep.subr.mxu0 0.0
    %3093 = vmatpush1.xpose.msra.mxu0 %v3056
    %3094 = vmatprep.subr.mxu0 0.0
    %3095 = vmatpush1.xpose.msra.mxu0 %v3053
    %3096 = vmatprep.subr.mxu0 0.0
    %3097 = vmatpush2.xpose.msra.mxu0 0.0
    %3098 = vmatprep.subr.mxu0 0.0
    %3099 = vmatpush2.xpose.msra.mxu0 0.0
    %3100 = vmatprep.subr.mxu0 0.0
    %3101 = vmatpush2.xpose.msra.mxu0 0.0
    %3102 = vmatprep.subr.mxu0 0.0
    %3103 = vmatpush2.xpose.msra.mxu0 0.0
    %3104 = vmatprep.subr.mxu0 0.0
    %3105 = vmatpush2.xpose.msra.mxu0 0.0
    %3106 = vmatprep.subr.mxu0 0.0
    %3107 = vmatpush2.xpose.msra.mxu0 0.0
    %3108 = vmatprep.subr.mxu0 0.0
    %3109 = vmatpush2.xpose.msra.mxu0 0.0
    %3110 = vmatprep.subr.mxu0 0.0
    %3111 = vmatpush2.xpose.msra.mxu0 0.0
    %3112 = vmatprep.subr.mxu0 0.0
    %3113 = vmatpush2.xpose.msra.mxu0 0.0
    %3114 = vmatprep.subr.mxu0 0.0
    %3115 = vmatpush2.xpose.msra.mxu0 0.0
    %3116 = vmatprep.subr.mxu0 0.0
    %3117 = vmatpush2.xpose.msra.mxu0 0.0
    %3118 = vmatprep.subr.mxu0 0.0
    %3119 = vmatpush2.xpose.msra.mxu0 0.0
    %3120 = vmatprep.subr.mxu0 0.0
    %3121 = vmatpush2.xpose.msra.mxu0 0.0
    %3122 = vmatprep.subr.mxu0 0.0
    %3123 = vmatpush2.xpose.msra.mxu0 0.0
    %3124 = vmatprep.subr.mxu0 0.0
    %3125 = vmatpush2.xpose.msra.mxu0 0.0
    %3126 = vmatprep.subr.mxu0 0.0
    %3127 = vmatpush2.xpose.msra.mxu0 0.0
    %3128 = vmatprep.mubr.f32.mxu0 0.0
    %3129 = vmatmul.mubr.f32.gmra.mxu0 %v3050
    %v3130 = vpop.f32.mrf.mxu0
    %v3131 = vadd.f32 %v3048, %v3130
    %v3132 = vpop.f32.mrf.mxu0
    %3133 = vdwg.mxu0
    %vm3134 = vcmask 253952
    %3135 = vst.msk [vmem:[#allocation32] sm:$0x1] %vm3134, %v3131
    // Predicated region
    $region182: #{tpu_custom_call.1} parent=1 // pred_check
      _
    $region183: #{tpu_custom_call.1} parent=1 // pred_check_branch
      %3137 = sbr.rel (0) target = $region185
    $region184: #{tpu_custom_call.1} parent=1 // pred_region
      %s3139 = ssub.s32 16, 16
      %3140 = vsyncadd [#allocation5], %s3139
      %s3142 = sshll.u32 [#allocation32], 4
      %s3143 = int_to_ptr.vmem [resolvable:$true] %s3142
      %3145 = dma.vmem_to_hbm [thread:$0]  %s3143, 16, %s27, [#allocation5]
    $region185: #{tpu_custom_call.1} parent=1 // pred_fallthru
      _
    // Predicated region
    $region186: #{tpu_custom_call.1} parent=1 // pred_check
      _
    $region187: #{tpu_custom_call.1} parent=1 // pred_check_branch
      %3147 = sbr.rel (0) target = $region189
    $region188: #{tpu_custom_call.1} parent=1 // pred_region
      %3148 = dma.done [#allocation5], 16
    $region189: #{tpu_custom_call.1} parent=1 // pred_fallthru
      _
    %3149 = vsyncpa [#allocation4], 1
    %3150 = vsyncpa [#allocation7], 1
    %3151 = vsyncpa [#allocation10], 1
    %3152 = vsyncpa [#allocation13], 1
    %3153 = vsyncpa [#allocation16], 1
    %3154 = vsyncpa [#allocation19], 1
    %3155 = vsyncpa [#allocation22], 1
    %3156 = vsyncpa [#allocation25], 1
    %3157 = vsyncpa [#allocation28], 1
    %3158 = vsyncpa [#allocation31], 1
    %3159 = vsyncpa [#allocation5], 1

</llo_original>
